<compile_context>
chip_gen: v7x
topology: tpu7x:2x2x1
jax: 0.10.0
libtpu: 0.0.40
codegen_flags: <defaults>
</compile_context>

<pallas_src>
from functools import partial

import jax
import jax.numpy as jnp
from jax.experimental import pallas as pl
from jax.experimental.pallas import tpu as pltpu

# ----- SimpleMLP default hyperparameters (FACIL simplemlp.py) -----
IN_FEATURES = 768      # nn.Linear(in_features=768, ...)
HIDDEN      = 1000     # out_features=1000
NUM_CLASSES = 10
BATCH       = 256

LANE    = 128          # pad trailing dims to multiples of the lane width
SUBLANE = 8


def _round_up(n, m):
    return (n + m - 1) // m * m


def _num_tensorcores():
    try:
        kind = jax.devices()[0].device_kind.lower()
    except Exception:
        return 1
    return 2 if "v7" in kind else 1     # v5e / v6e = 1 TC per chip, v7x = 2 TCs


_NUM_TC = _num_tensorcores()


def mlp_kernel(x_ref, w1_ref, b1_ref, w2_ref, b2_ref, o_ref):
    # fc1: (TM, INp)bf16 @ (INp, Hp)bf16 -> f32 accumulate on the MXU
    h = jnp.dot(x_ref[...], w1_ref[...], preferred_element_type=jnp.float32)
    # bias + ReLU in f32 on the VPU (also the safe path on v5e's non-bf16 VPU)
    h = jnp.maximum(h + b1_ref[...], 0.0)
    # fc2: (TM, Hp)bf16 @ (Hp, NCp)bf16 -> f32 accumulate
    o = jnp.dot(h.astype(w2_ref.dtype), w2_ref[...],
                preferred_element_type=jnp.float32)
    o_ref[...] = (o + b2_ref[...]).astype(o_ref.dtype)


def prepare_params(w1, b1, w2, b2):
    """One-time weight prep: transpose to (in, out), cast to bf16, pad to lane
    multiples.  Call once and reuse the results -- NOT per forward pass.

    w1: (H, IN), b1: (H,), w2: (NC, H), b2: (NC,)  -- PyTorch nn.Linear layout.
    """
    H, IN = w1.shape
    NC = w2.shape[0]
    INp = _round_up(IN, LANE)
    Hp  = _round_up(H, LANE)
    NCp = _round_up(NC, LANE)

    w1p = jnp.zeros((INp, Hp), jnp.bfloat16).at[:IN, :H].set(w1.T.astype(jnp.bfloat16))
    b1p = jnp.zeros((1, Hp), jnp.float32).at[:, :H].set(b1.astype(jnp.float32)[None, :])
    w2p = jnp.zeros((Hp, NCp), jnp.bfloat16).at[:H, :NC].set(w2.T.astype(jnp.bfloat16))
    b2p = jnp.zeros((1, NCp), jnp.float32).at[:, :NC].set(b2.astype(jnp.float32)[None, :])
    return w1p, b1p, w2p, b2p


@partial(jax.jit, static_argnames=("num_classes",))
def simple_mlp_forward(x, w1p, b1p, w2p, b2p, *, num_classes=NUM_CLASSES):
    """Forward pass.  x: (B, IN) any float dtype; padded bf16 weights from
    prepare_params.  Returns (B, num_classes) float32 logits."""
    B, IN = x.shape
    INp, Hp = w1p.shape
    NCp = w2p.shape[1]

    # Batch tiling: one grid step on 1-TC chips; 2 parallel tiles on v7x.
    Bp = _round_up(B, SUBLANE)
    n_tiles = 2 if (_NUM_TC == 2 and Bp % (2 * SUBLANE) == 0) else 1
    TM = Bp // n_tiles

    # Hot path: only a cast when already (8, 128)-aligned; pad otherwise.
    xb = x.astype(jnp.bfloat16)
    if (Bp, INp) != (B, IN):
        xb = jnp.zeros((Bp, INp), jnp.bfloat16).at[:B, :IN].set(xb)

    flops = 2 * Bp * (INp * Hp + Hp * NCp)
    bytes_accessed = (xb.size * 2 + w1p.size * 2 + w2p.size * 2
                      + b1p.size * 4 + b2p.size * 4 + Bp * NCp * 4)

    def _resident(shape):
        # Grid-invariant block: VMEM-resident; single-buffer when the grid loops.
        if n_tiles > 1:
            return pl.BlockSpec(shape, lambda i: (0, 0),
                                pipeline_mode=pl.Buffered(1))
        return pl.BlockSpec(shape, lambda i: (0, 0))

    out = pl.pallas_call(
        mlp_kernel,
        out_shape=jax.ShapeDtypeStruct((Bp, NCp), jnp.float32),
        grid_spec=pl.GridSpec(
            grid=(n_tiles,),
            in_specs=[
                pl.BlockSpec((TM, INp), lambda i: (i, 0)),   # x batch tile
                _resident((INp, Hp)),                        # W1^T (VMEM-resident)
                _resident((1, Hp)),                          # b1
                _resident((Hp, NCp)),                        # W2^T (VMEM-resident)
                _resident((1, NCp)),                         # b2
            ],
            out_specs=pl.BlockSpec((TM, NCp), lambda i: (i, 0)),
        ),
        compiler_params=pltpu.CompilerParams(
            dimension_semantics=("parallel",)),
        cost_estimate=pl.CostEstimate(flops=flops, transcendentals=0,
                                      bytes_accessed=bytes_accessed),
    )(xb, w1p, b1p, w2p, b2p)

    return out[:B, :num_classes]


def init_params(key):
    """Deterministic init mimicking nn.Linear default (U[-1/sqrt(fan_in), +])."""
    k1, k2, k3, k4 = jax.random.split(key, 4)
    bound1 = 1.0 / (IN_FEATURES ** 0.5)
    bound2 = 1.0 / (HIDDEN ** 0.5)
    # PyTorch stores weight as (out, in); keep that convention here.
    w1 = jax.random.uniform(k1, (HIDDEN, IN_FEATURES), jnp.float32, -bound1, bound1)
    b1 = jax.random.uniform(k2, (HIDDEN,), jnp.float32, -bound1, bound1)
    w2 = jax.random.uniform(k3, (NUM_CLASSES, HIDDEN), jnp.float32, -bound2, bound2)
    b2 = jax.random.uniform(k4, (NUM_CLASSES,), jnp.float32, -bound2, bound2)
    return w1, b1, w2, b2


if __name__ == "__main__":
    key = jax.random.PRNGKey(0)
    kx, kp = jax.random.split(key)

    x = jax.random.normal(kx, (BATCH, IN_FEATURES), dtype=jnp.float32)
    w1, b1, w2, b2 = init_params(kp)

    # One-time weight prep (outside the per-call hot path).
    w1p, b1p, w2p, b2p = jax.block_until_ready(prepare_params(w1, b1, w2, b2))

    out = simple_mlp_forward(x, w1p, b1p, w2p, b2p, num_classes=NUM_CLASSES)
    out = jax.block_until_ready(out)
    assert out.shape == (BATCH, NUM_CLASSES)

    # Reference 1: identical bf16-input / f32-accumulate math in plain JAX.
    xb_ref  = x.astype(jnp.bfloat16)
    w1b = w1.T.astype(jnp.bfloat16)
    w2b = w2.T.astype(jnp.bfloat16)
    h_ref = jnp.maximum(
        jnp.dot(xb_ref, w1b, preferred_element_type=jnp.float32) + b1, 0.0)
    ref_bf16 = jnp.dot(h_ref.astype(jnp.bfloat16), w2b,
                       preferred_element_type=jnp.float32) + b2
    assert jnp.allclose(out, ref_bf16, atol=5e-3, rtol=5e-3)

    # Reference 2: the original f32 module math (looser tol due to bf16 inputs).
    ref_f32 = jnp.maximum(x @ w1.T + b1, 0.0) @ w2.T + b2
    assert jnp.allclose(out, ref_f32, atol=3e-2, rtol=3e-2)

    print("KERNEL_OK")
</pallas_src>

<mosaic_0001>
module attributes {stable_mosaic.version = 11 : i64} {
  func.func @mlp_kernel(%arg0: i32, %arg1: memref<256x768xbf16, #tpu.memory_space<vmem>>, %arg2: memref<768x1024xbf16, #tpu.memory_space<vmem>>, %arg3: memref<1x1024xf32, #tpu.memory_space<vmem>>, %arg4: memref<1024x128xbf16, #tpu.memory_space<vmem>>, %arg5: memref<1x128xf32, #tpu.memory_space<vmem>>, %arg6: memref<256x128xf32, #tpu.memory_space<vmem>>) attributes {dimension_semantics = [#tpu.dimension_semantics<parallel>], iteration_bounds = array<i64: 1>, scalar_prefetch = 0 : i64, scratch_operands = 0 : i64, tpu.core_type = #tpu.core_type<tc>, window_params = [{transform_indices = @transform_0, window_bounds = array<i64: 256, 768>}, {pipeline_mode = #tpu.pipeline_mode<synchronous>, transform_indices = @transform_1, window_bounds = array<i64: 768, 1024>}, {pipeline_mode = #tpu.pipeline_mode<synchronous>, transform_indices = @transform_2, window_bounds = array<i64: 1, 1024>}, {pipeline_mode = #tpu.pipeline_mode<synchronous>, transform_indices = @transform_3, window_bounds = array<i64: 1024, 128>}, {pipeline_mode = #tpu.pipeline_mode<synchronous>, transform_indices = @transform_4, window_bounds = array<i64: 1, 128>}, {transform_indices = @transform_5, window_bounds = array<i64: 256, 128>}]} {
    %c0 = arith.constant 0 : index
    %c0_0 = arith.constant 0 : index
    %0 = vector.load %arg1[%c0, %c0_0] : memref<256x768xbf16, #tpu.memory_space<vmem>>, vector<256x768xbf16>
    %c0_1 = arith.constant 0 : index
    %c0_2 = arith.constant 0 : index
    %1 = vector.load %arg2[%c0_1, %c0_2] : memref<768x1024xbf16, #tpu.memory_space<vmem>>, vector<768x1024xbf16>
    %cst = arith.constant dense<0.000000e+00> : vector<256x1024xf32>
    %2 = tpu.matmul %0, %1, %cst {dimension_numbers = #tpu.dot_dimension_numbers<[1], [0], [0], [1], [0, 0, 1, 1], [], []>} : vector<256x768xbf16>, vector<768x1024xbf16>, vector<256x1024xf32> -> vector<256x1024xf32>
    %c0_3 = arith.constant 0 : index
    %c0_4 = arith.constant 0 : index
    %3 = vector.load %arg3[%c0_3, %c0_4] : memref<1x1024xf32, #tpu.memory_space<vmem>>, vector<1x1024xf32>
    %4 = vector.broadcast %3 : vector<1x1024xf32> to vector<256x1024xf32>
    %5 = arith.addf %2, %4 : vector<256x1024xf32>
    %cst_5 = arith.constant 0.000000e+00 : f32
    %6 = vector.broadcast %cst_5 : f32 to vector<256x1024xf32>
    %7 = arith.maximumf %5, %6 : vector<256x1024xf32>
    %8 = arith.truncf %7 : vector<256x1024xf32> to vector<256x1024xbf16>
    %c0_6 = arith.constant 0 : index
    %c0_7 = arith.constant 0 : index
    %9 = vector.load %arg4[%c0_6, %c0_7] : memref<1024x128xbf16, #tpu.memory_space<vmem>>, vector<1024x128xbf16>
    %cst_8 = arith.constant dense<0.000000e+00> : vector<256x128xf32>
    %10 = tpu.matmul %8, %9, %cst_8 {dimension_numbers = #tpu.dot_dimension_numbers<[1], [0], [0], [1], [0, 0, 1, 1], [], []>} : vector<256x1024xbf16>, vector<1024x128xbf16>, vector<256x128xf32> -> vector<256x128xf32>
    %c0_9 = arith.constant 0 : index
    %c0_10 = arith.constant 0 : index
    %11 = vector.load %arg5[%c0_9, %c0_10] : memref<1x128xf32, #tpu.memory_space<vmem>>, vector<1x128xf32>
    %12 = vector.broadcast %11 : vector<1x128xf32> to vector<256x128xf32>
    %13 = arith.addf %10, %12 : vector<256x128xf32>
    %c0_11 = arith.constant 0 : index
    %c0_12 = arith.constant 0 : index
    %14 = vector.load %arg6[%c0_11, %c0_12] : memref<256x128xf32, #tpu.memory_space<vmem>>, vector<256x128xf32>
    tpu.vector_store %arg6[%c0_11, %c0_12], %13 {strides = array<i32>} : memref<256x128xf32, #tpu.memory_space<vmem>>, vector<256x128xf32>,
    return
  }
  func.func @transform_0(%arg0: i32) -> (i32, i32) {
    %c0_i32 = arith.constant 0 : i32
    %c0_i32_0 = arith.constant 0 : i32
    return %arg0, %c0_i32 : i32, i32
  }
  func.func @transform_1(%arg0: i32) -> (i32, i32) {
    %c0_i32 = arith.constant 0 : i32
    %c0_i32_0 = arith.constant 0 : i32
    %c0_i32_1 = arith.constant 0 : i32
    return %c0_i32, %c0_i32_0 : i32, i32
  }
  func.func @transform_2(%arg0: i32) -> (i32, i32) {
    %c0_i32 = arith.constant 0 : i32
    %c0_i32_0 = arith.constant 0 : i32
    %c0_i32_1 = arith.constant 0 : i32
    return %c0_i32, %c0_i32_0 : i32, i32
  }
  func.func @transform_3(%arg0: i32) -> (i32, i32) {
    %c0_i32 = arith.constant 0 : i32
    %c0_i32_0 = arith.constant 0 : i32
    %c0_i32_1 = arith.constant 0 : i32
    return %c0_i32, %c0_i32_0 : i32, i32
  }
  func.func @transform_4(%arg0: i32) -> (i32, i32) {
    %c0_i32 = arith.constant 0 : i32
    %c0_i32_0 = arith.constant 0 : i32
    %c0_i32_1 = arith.constant 0 : i32
    return %c0_i32, %c0_i32_0 : i32, i32
  }
  func.func @transform_5(%arg0: i32) -> (i32, i32) {
    %c0_i32 = arith.constant 0 : i32
    %c0_i32_0 = arith.constant 0 : i32
    return %arg0, %c0_i32 : i32, i32
  }
}

</mosaic_0001>

<llo_original>
// kernel: simple_mlp_forward.1
$region0: #{simple_mlp_forward.1}
  #allocation0 [shape = 'u32[]', space=smem, size = 0x4, offset = 0x4, fixed_abs, tag = 'smem constant byte address 0x4 - core index']
  #allocation1 [shape = 'u32[144,128]{1,0:T(1,128)}', space=vmem, size = 0x12000, scoped, tag = 'internal scratch']
  %s0 = inlined_call_operand.vmem [shape: bf16[256,768], index: 0, kind: input, shape index: {}]
  %s1 = inlined_call_operand.hbm [shape: bf16[768,1024], index: 1, kind: input, shape index: {}]
  %s2 = inlined_call_operand.hbm [shape: f32[1,1024], index: 2, kind: input, shape index: {}]
  %s3 = inlined_call_operand.hbm [shape: bf16[1024,128], index: 3, kind: input, shape index: {}]
  %s4 = inlined_call_operand.hbm [shape: f32[1,128], index: 4, kind: input, shape index: {}]
  %s5 = inlined_call_operand.vmem [shape: f32[256,128], index: 5, kind: output, shape index: {}]
  %s6 = sld [smem:[#allocation0]]
  $region46: #{simple_mlp_forward.1} parent=0
    _
  %s8 = ssub.s32 1, %s6
  %s9 = scalar_select 0, %s8, %s6
  $region1: #{simple_mlp_forward.1} parent=0
    #allocation2 [shape = 'u8[1572864]{0}', space=vmem, size = 0x180000, scoped, tag = 'input window, operand 1, single buffered']
    #allocation3 [shape = 's32[1]{0}', space=sflag, size = 0x4, scoped, tag = 'scoped memory for simple_mlp_forward.1']
    #allocation4 [shape = 'u8[4096]{0}', space=vmem, size = 0x1000, scoped, tag = 'input window, operand 2, single buffered']
    #allocation5 [shape = 's32[1]{0}', space=sflag, size = 0x4, scoped, tag = 'scoped memory for simple_mlp_forward.1']
    #allocation6 [shape = 'u8[262144]{0}', space=vmem, size = 0x40000, scoped, tag = 'input window, operand 3, single buffered']
    #allocation7 [shape = 'u8[512]{0}', space=vmem, size = 0x400, scoped, tag = 'input window, operand 4, single buffered']
    #allocation8 [shape = 's32[1]{0}', space=sflag, size = 0x4, scoped, tag = 'scoped memory for simple_mlp_forward.1']
    %10 = vsyncpa [#allocation3], 0
    %11 = vsyncpa [#allocation5], 0
    %12 = vsyncpa [#allocation8], 0
    // Predicated region
    $region2: #{simple_mlp_forward.1} parent=1 // pred_check
      _
    $region3: #{simple_mlp_forward.1} parent=1 // pred_check_branch
      %14 = sbr.rel (0) target = $region5
    $region4: #{simple_mlp_forward.1} parent=1 // pred_region
      _
    $region5: #{simple_mlp_forward.1} parent=1 // pred_fallthru
      _
    // Predicated region
    $region6: #{simple_mlp_forward.1} parent=1 // pred_check
      _
    $region7: #{simple_mlp_forward.1} parent=1 // pred_check_branch
      %16 = sbr.rel (0) target = $region9
    $region8: #{simple_mlp_forward.1} parent=1 // pred_region
      %s18 = ssub.s32 49152, 49152
      %19 = vsyncadd [#allocation3], %s18
      %s20 = sshll.u32 [#allocation2], 4
      %s21 = int_to_ptr.vmem [resolvable:$true] %s20
      %26 = dma.hbm_to_vmem [thread:$0]  %s1, 49152, %s21, [#allocation3], 512, 512, 32
    $region9: #{simple_mlp_forward.1} parent=1 // pred_fallthru
      _
    // Predicated region
    $region10: #{simple_mlp_forward.1} parent=1 // pred_check
      _
    $region11: #{simple_mlp_forward.1} parent=1 // pred_check_branch
      %28 = sbr.rel (0) target = $region13
    $region12: #{simple_mlp_forward.1} parent=1 // pred_region
      %s30 = ssub.s32 128, 128
      %31 = vsyncadd [#allocation5], %s30
      %s33 = sshll.u32 [#allocation4], 4
      %s34 = int_to_ptr.vmem [resolvable:$true] %s33
      %36 = dma.hbm_to_vmem [thread:$0]  %s2, 128, %s34, [#allocation5]
    $region13: #{simple_mlp_forward.1} parent=1 // pred_fallthru
      _
    // Predicated region
    $region14: #{simple_mlp_forward.1} parent=1 // pred_check
      _
    $region15: #{simple_mlp_forward.1} parent=1 // pred_check_branch
      %38 = sbr.rel (0) target = $region17
    $region16: #{simple_mlp_forward.1} parent=1 // pred_region
      %s40 = ssub.s32 8192, 8192
      %41 = vsyncadd [#allocation5], %s40
      %s42 = sshll.u32 [#allocation6], 4
      %s43 = int_to_ptr.vmem [resolvable:$true] %s42
      %48 = dma.hbm_to_vmem [thread:$0]  %s3, 8192, %s43, [#allocation5], 64, 64, 4
    $region17: #{simple_mlp_forward.1} parent=1 // pred_fallthru
      _
    // Predicated region
    $region18: #{simple_mlp_forward.1} parent=1 // pred_check
      _
    $region19: #{simple_mlp_forward.1} parent=1 // pred_check_branch
      %50 = sbr.rel (0) target = $region21
    $region20: #{simple_mlp_forward.1} parent=1 // pred_region
      %s52 = ssub.s32 16, 16
      %53 = vsyncadd [#allocation8], %s52
      %s55 = sshll.u32 [#allocation7], 4
      %s56 = int_to_ptr.vmem [resolvable:$true] %s55
      %58 = dma.hbm_to_vmem [thread:$0]  %s4, 16, %s56, [#allocation8]
    $region21: #{simple_mlp_forward.1} parent=1 // pred_fallthru
      _
    // Predicated region
    $region22: #{simple_mlp_forward.1} parent=1 // pred_check
      _
    $region23: #{simple_mlp_forward.1} parent=1 // pred_check_branch
      %60 = sbr.rel (0) target = $region25
    $region24: #{simple_mlp_forward.1} parent=1 // pred_region
      %61 = dma.done [#allocation3], 49152
    $region25: #{simple_mlp_forward.1} parent=1 // pred_fallthru
      _
    // Predicated region
    $region26: #{simple_mlp_forward.1} parent=1 // pred_check
      _
    $region27: #{simple_mlp_forward.1} parent=1 // pred_check_branch
      %63 = sbr.rel (0) target = $region29
    $region28: #{simple_mlp_forward.1} parent=1 // pred_region
      %64 = dma.done [#allocation5], 128
    $region29: #{simple_mlp_forward.1} parent=1 // pred_fallthru
      _
    // Predicated region
    $region30: #{simple_mlp_forward.1} parent=1 // pred_check
      _
    $region31: #{simple_mlp_forward.1} parent=1 // pred_check_branch
      %66 = sbr.rel (0) target = $region33
    $region32: #{simple_mlp_forward.1} parent=1 // pred_region
      %67 = dma.done [#allocation5], 8192
    $region33: #{simple_mlp_forward.1} parent=1 // pred_fallthru
      _
    // Predicated region
    $region34: #{simple_mlp_forward.1} parent=1 // pred_check
      _
    $region35: #{simple_mlp_forward.1} parent=1 // pred_check_branch
      %69 = sbr.rel (0) target = $region37
    $region36: #{simple_mlp_forward.1} parent=1 // pred_region
      %70 = dma.done [#allocation8], 16
    $region37: #{simple_mlp_forward.1} parent=1 // pred_fallthru
      _
    %v72 = vld [vmem:[%s0] sm:$0xff]
    %v73 = vld [vmem:[%s0 + $0x8] sm:$0xff]
    %v74 = vld [vmem:[%s0 + $0x10] sm:$0xff]
    %v75 = vld [vmem:[%s0 + $0x18] sm:$0xff]
    %v76 = vld [vmem:[%s0 + $0x20] sm:$0xff]
    %v77 = vld [vmem:[%s0 + $0x28] sm:$0xff]
    %v78 = vld [vmem:[%s0 + $0x30] sm:$0xff]
    %v79 = vld [vmem:[%s0 + $0x38] sm:$0xff]
    %v80 = vld [vmem:[%s0 + $0x40] sm:$0xff]
    %v81 = vld [vmem:[%s0 + $0x48] sm:$0xff]
    %v82 = vld [vmem:[%s0 + $0x50] sm:$0xff]
    %v83 = vld [vmem:[%s0 + $0x58] sm:$0xff]
    %v84 = vld [vmem:[%s0 + $0x60] sm:$0xff]
    %v85 = vld [vmem:[%s0 + $0x68] sm:$0xff]
    %v86 = vld [vmem:[%s0 + $0x70] sm:$0xff]
    %v87 = vld [vmem:[%s0 + $0x78] sm:$0xff]
    %v88 = vld [vmem:[%s0 + $0x80] sm:$0xff]
    %v89 = vld [vmem:[%s0 + $0x88] sm:$0xff]
    %v90 = vld [vmem:[%s0 + $0x90] sm:$0xff]
    %v91 = vld [vmem:[%s0 + $0x98] sm:$0xff]
    %v92 = vld [vmem:[%s0 + $0xa0] sm:$0xff]
    %v93 = vld [vmem:[%s0 + $0xa8] sm:$0xff]
    %v94 = vld [vmem:[%s0 + $0xb0] sm:$0xff]
    %v95 = vld [vmem:[%s0 + $0xb8] sm:$0xff]
    %v96 = vld [vmem:[%s0 + $0xc0] sm:$0xff]
    %v97 = vld [vmem:[%s0 + $0xc8] sm:$0xff]
    %v98 = vld [vmem:[%s0 + $0xd0] sm:$0xff]
    %v99 = vld [vmem:[%s0 + $0xd8] sm:$0xff]
    %v100 = vld [vmem:[%s0 + $0xe0] sm:$0xff]
    %v101 = vld [vmem:[%s0 + $0xe8] sm:$0xff]
    %v102 = vld [vmem:[%s0 + $0xf0] sm:$0xff]
    %v103 = vld [vmem:[%s0 + $0xf8] sm:$0xff]
    %v104 = vld [vmem:[%s0 + $0x100] sm:$0xff]
    %v105 = vld [vmem:[%s0 + $0x108] sm:$0xff]
    %v106 = vld [vmem:[%s0 + $0x110] sm:$0xff]
    %v107 = vld [vmem:[%s0 + $0x118] sm:$0xff]
    %v108 = vld [vmem:[%s0 + $0x120] sm:$0xff]
    %v109 = vld [vmem:[%s0 + $0x128] sm:$0xff]
    %v110 = vld [vmem:[%s0 + $0x130] sm:$0xff]
    %v111 = vld [vmem:[%s0 + $0x138] sm:$0xff]
    %v112 = vld [vmem:[%s0 + $0x140] sm:$0xff]
    %v113 = vld [vmem:[%s0 + $0x148] sm:$0xff]
    %v114 = vld [vmem:[%s0 + $0x150] sm:$0xff]
    %v115 = vld [vmem:[%s0 + $0x158] sm:$0xff]
    %v116 = vld [vmem:[%s0 + $0x160] sm:$0xff]
    %v117 = vld [vmem:[%s0 + $0x168] sm:$0xff]
    %v118 = vld [vmem:[%s0 + $0x170] sm:$0xff]
    %v119 = vld [vmem:[%s0 + $0x178] sm:$0xff]
    %v120 = vld [vmem:[%s0 + $0x180] sm:$0xff]
    %v121 = vld [vmem:[%s0 + $0x188] sm:$0xff]
    %v122 = vld [vmem:[%s0 + $0x190] sm:$0xff]
    %v123 = vld [vmem:[%s0 + $0x198] sm:$0xff]
    %v124 = vld [vmem:[%s0 + $0x1a0] sm:$0xff]
    %v125 = vld [vmem:[%s0 + $0x1a8] sm:$0xff]
    %v126 = vld [vmem:[%s0 + $0x1b0] sm:$0xff]
    %v127 = vld [vmem:[%s0 + $0x1b8] sm:$0xff]
    %v128 = vld [vmem:[%s0 + $0x1c0] sm:$0xff]
    %v129 = vld [vmem:[%s0 + $0x1c8] sm:$0xff]
    %v130 = vld [vmem:[%s0 + $0x1d0] sm:$0xff]
    %v131 = vld [vmem:[%s0 + $0x1d8] sm:$0xff]
    %v132 = vld [vmem:[%s0 + $0x1e0] sm:$0xff]
    %v133 = vld [vmem:[%s0 + $0x1e8] sm:$0xff]
    %v134 = vld [vmem:[%s0 + $0x1f0] sm:$0xff]
    %v135 = vld [vmem:[%s0 + $0x1f8] sm:$0xff]
    %v136 = vld [vmem:[%s0 + $0x200] sm:$0xff]
    %v137 = vld [vmem:[%s0 + $0x208] sm:$0xff]
    %v138 = vld [vmem:[%s0 + $0x210] sm:$0xff]
    %v139 = vld [vmem:[%s0 + $0x218] sm:$0xff]
    %v140 = vld [vmem:[%s0 + $0x220] sm:$0xff]
    %v141 = vld [vmem:[%s0 + $0x228] sm:$0xff]
    %v142 = vld [vmem:[%s0 + $0x230] sm:$0xff]
    %v143 = vld [vmem:[%s0 + $0x238] sm:$0xff]
    %v144 = vld [vmem:[%s0 + $0x240] sm:$0xff]
    %v145 = vld [vmem:[%s0 + $0x248] sm:$0xff]
    %v146 = vld [vmem:[%s0 + $0x250] sm:$0xff]
    %v147 = vld [vmem:[%s0 + $0x258] sm:$0xff]
    %v148 = vld [vmem:[%s0 + $0x260] sm:$0xff]
    %v149 = vld [vmem:[%s0 + $0x268] sm:$0xff]
    %v150 = vld [vmem:[%s0 + $0x270] sm:$0xff]
    %v151 = vld [vmem:[%s0 + $0x278] sm:$0xff]
    %v152 = vld [vmem:[%s0 + $0x280] sm:$0xff]
    %v153 = vld [vmem:[%s0 + $0x288] sm:$0xff]
    %v154 = vld [vmem:[%s0 + $0x290] sm:$0xff]
    %v155 = vld [vmem:[%s0 + $0x298] sm:$0xff]
    %v156 = vld [vmem:[%s0 + $0x2a0] sm:$0xff]
    %v157 = vld [vmem:[%s0 + $0x2a8] sm:$0xff]
    %v158 = vld [vmem:[%s0 + $0x2b0] sm:$0xff]
    %v159 = vld [vmem:[%s0 + $0x2b8] sm:$0xff]
    %v160 = vld [vmem:[%s0 + $0x2c0] sm:$0xff]
    %v161 = vld [vmem:[%s0 + $0x2c8] sm:$0xff]
    %v162 = vld [vmem:[%s0 + $0x2d0] sm:$0xff]
    %v163 = vld [vmem:[%s0 + $0x2d8] sm:$0xff]
    %v164 = vld [vmem:[%s0 + $0x2e0] sm:$0xff]
    %v165 = vld [vmem:[%s0 + $0x2e8] sm:$0xff]
    %v166 = vld [vmem:[%s0 + $0x2f0] sm:$0xff]
    %v167 = vld [vmem:[%s0 + $0x2f8] sm:$0xff]
    %v168 = vld [vmem:[#allocation2] sm:$0xff]
    %v169 = vld [vmem:[#allocation2 + $0x8] sm:$0xff]
    %v170 = vld [vmem:[#allocation2 + $0x10] sm:$0xff]
    %v171 = vld [vmem:[#allocation2 + $0x18] sm:$0xff]
    %v172 = vld [vmem:[#allocation2 + $0x20] sm:$0xff]
    %v173 = vld [vmem:[#allocation2 + $0x28] sm:$0xff]
    %v174 = vld [vmem:[#allocation2 + $0x30] sm:$0xff]
    %v175 = vld [vmem:[#allocation2 + $0x38] sm:$0xff]
    %v176 = vld [vmem:[#allocation2 + $0x40] sm:$0xff]
    %v177 = vld [vmem:[#allocation2 + $0x48] sm:$0xff]
    %v178 = vld [vmem:[#allocation2 + $0x50] sm:$0xff]
    %v179 = vld [vmem:[#allocation2 + $0x58] sm:$0xff]
    %v180 = vld [vmem:[#allocation2 + $0x60] sm:$0xff]
    %v181 = vld [vmem:[#allocation2 + $0x68] sm:$0xff]
    %v182 = vld [vmem:[#allocation2 + $0x70] sm:$0xff]
    %v183 = vld [vmem:[#allocation2 + $0x78] sm:$0xff]
    %v184 = vld [vmem:[#allocation2 + $0x80] sm:$0xff]
    %v185 = vld [vmem:[#allocation2 + $0x88] sm:$0xff]
    %v186 = vld [vmem:[#allocation2 + $0x90] sm:$0xff]
    %v187 = vld [vmem:[#allocation2 + $0x98] sm:$0xff]
    %v188 = vld [vmem:[#allocation2 + $0xa0] sm:$0xff]
    %v189 = vld [vmem:[#allocation2 + $0xa8] sm:$0xff]
    %v190 = vld [vmem:[#allocation2 + $0xb0] sm:$0xff]
    %v191 = vld [vmem:[#allocation2 + $0xb8] sm:$0xff]
    %v192 = vld [vmem:[#allocation2 + $0xc0] sm:$0xff]
    %v193 = vld [vmem:[#allocation2 + $0xc8] sm:$0xff]
    %v194 = vld [vmem:[#allocation2 + $0xd0] sm:$0xff]
    %v195 = vld [vmem:[#allocation2 + $0xd8] sm:$0xff]
    %v196 = vld [vmem:[#allocation2 + $0xe0] sm:$0xff]
    %v197 = vld [vmem:[#allocation2 + $0xe8] sm:$0xff]
    %v198 = vld [vmem:[#allocation2 + $0xf0] sm:$0xff]
    %v199 = vld [vmem:[#allocation2 + $0xf8] sm:$0xff]
    %v200 = vld [vmem:[#allocation2 + $0x100] sm:$0xff]
    %v201 = vld [vmem:[#allocation2 + $0x108] sm:$0xff]
    %v202 = vld [vmem:[#allocation2 + $0x110] sm:$0xff]
    %v203 = vld [vmem:[#allocation2 + $0x118] sm:$0xff]
    %v204 = vld [vmem:[#allocation2 + $0x120] sm:$0xff]
    %v205 = vld [vmem:[#allocation2 + $0x128] sm:$0xff]
    %v206 = vld [vmem:[#allocation2 + $0x130] sm:$0xff]
    %v207 = vld [vmem:[#allocation2 + $0x138] sm:$0xff]
    %v208 = vld [vmem:[#allocation2 + $0x140] sm:$0xff]
    %v209 = vld [vmem:[#allocation2 + $0x148] sm:$0xff]
    %v210 = vld [vmem:[#allocation2 + $0x150] sm:$0xff]
    %v211 = vld [vmem:[#allocation2 + $0x158] sm:$0xff]
    %v212 = vld [vmem:[#allocation2 + $0x160] sm:$0xff]
    %v213 = vld [vmem:[#allocation2 + $0x168] sm:$0xff]
    %v214 = vld [vmem:[#allocation2 + $0x170] sm:$0xff]
    %v215 = vld [vmem:[#allocation2 + $0x178] sm:$0xff]
    %v216 = vld [vmem:[#allocation2 + $0x180] sm:$0xff]
    %v217 = vld [vmem:[#allocation2 + $0x188] sm:$0xff]
    %v218 = vld [vmem:[#allocation2 + $0x190] sm:$0xff]
    %v219 = vld [vmem:[#allocation2 + $0x198] sm:$0xff]
    %v220 = vld [vmem:[#allocation2 + $0x1a0] sm:$0xff]
    %v221 = vld [vmem:[#allocation2 + $0x1a8] sm:$0xff]
    %v222 = vld [vmem:[#allocation2 + $0x1b0] sm:$0xff]
    %v223 = vld [vmem:[#allocation2 + $0x1b8] sm:$0xff]
    %v224 = vld [vmem:[#allocation2 + $0x1c0] sm:$0xff]
    %v225 = vld [vmem:[#allocation2 + $0x1c8] sm:$0xff]
    %v226 = vld [vmem:[#allocation2 + $0x1d0] sm:$0xff]
    %v227 = vld [vmem:[#allocation2 + $0x1d8] sm:$0xff]
    %v228 = vld [vmem:[#allocation2 + $0x1e0] sm:$0xff]
    %v229 = vld [vmem:[#allocation2 + $0x1e8] sm:$0xff]
    %v230 = vld [vmem:[#allocation2 + $0x1f0] sm:$0xff]
    %v231 = vld [vmem:[#allocation2 + $0x1f8] sm:$0xff]
    %v232 = vld [vmem:[#allocation2 + $0x200] sm:$0xff]
    %v233 = vld [vmem:[#allocation2 + $0x208] sm:$0xff]
    %v234 = vld [vmem:[#allocation2 + $0x210] sm:$0xff]
    %v235 = vld [vmem:[#allocation2 + $0x218] sm:$0xff]
    %v236 = vld [vmem:[#allocation2 + $0x220] sm:$0xff]
    %v237 = vld [vmem:[#allocation2 + $0x228] sm:$0xff]
    %v238 = vld [vmem:[#allocation2 + $0x230] sm:$0xff]
    %v239 = vld [vmem:[#allocation2 + $0x238] sm:$0xff]
    %v240 = vld [vmem:[#allocation2 + $0x240] sm:$0xff]
    %v241 = vld [vmem:[#allocation2 + $0x248] sm:$0xff]
    %v242 = vld [vmem:[#allocation2 + $0x250] sm:$0xff]
    %v243 = vld [vmem:[#allocation2 + $0x258] sm:$0xff]
    %v244 = vld [vmem:[#allocation2 + $0x260] sm:$0xff]
    %v245 = vld [vmem:[#allocation2 + $0x268] sm:$0xff]
    %v246 = vld [vmem:[#allocation2 + $0x270] sm:$0xff]
    %v247 = vld [vmem:[#allocation2 + $0x278] sm:$0xff]
    %v248 = vld [vmem:[#allocation2 + $0x280] sm:$0xff]
    %v249 = vld [vmem:[#allocation2 + $0x288] sm:$0xff]
    %v250 = vld [vmem:[#allocation2 + $0x290] sm:$0xff]
    %v251 = vld [vmem:[#allocation2 + $0x298] sm:$0xff]
    %v252 = vld [vmem:[#allocation2 + $0x2a0] sm:$0xff]
    %v253 = vld [vmem:[#allocation2 + $0x2a8] sm:$0xff]
    %v254 = vld [vmem:[#allocation2 + $0x2b0] sm:$0xff]
    %v255 = vld [vmem:[#allocation2 + $0x2b8] sm:$0xff]
    %v256 = vld [vmem:[#allocation2 + $0x2c0] sm:$0xff]
    %v257 = vld [vmem:[#allocation2 + $0x2c8] sm:$0xff]
    %v258 = vld [vmem:[#allocation2 + $0x2d0] sm:$0xff]
    %v259 = vld [vmem:[#allocation2 + $0x2d8] sm:$0xff]
    %v260 = vld [vmem:[#allocation2 + $0x2e0] sm:$0xff]
    %v261 = vld [vmem:[#allocation2 + $0x2e8] sm:$0xff]
    %v262 = vld [vmem:[#allocation2 + $0x2f0] sm:$0xff]
    %v263 = vld [vmem:[#allocation2 + $0x2f8] sm:$0xff]
    %v264 = vld [vmem:[#allocation2 + $0x300] sm:$0xff]
    %v265 = vld [vmem:[#allocation2 + $0x308] sm:$0xff]
    %v266 = vld [vmem:[#allocation2 + $0x310] sm:$0xff]
    %v267 = vld [vmem:[#allocation2 + $0x318] sm:$0xff]
    %v268 = vld [vmem:[#allocation2 + $0x320] sm:$0xff]
    %v269 = vld [vmem:[#allocation2 + $0x328] sm:$0xff]
    %v270 = vld [vmem:[#allocation2 + $0x330] sm:$0xff]
    %v271 = vld [vmem:[#allocation2 + $0x338] sm:$0xff]
    %v272 = vld [vmem:[#allocation2 + $0x340] sm:$0xff]
    %v273 = vld [vmem:[#allocation2 + $0x348] sm:$0xff]
    %v274 = vld [vmem:[#allocation2 + $0x350] sm:$0xff]
    %v275 = vld [vmem:[#allocation2 + $0x358] sm:$0xff]
    %v276 = vld [vmem:[#allocation2 + $0x360] sm:$0xff]
    %v277 = vld [vmem:[#allocation2 + $0x368] sm:$0xff]
    %v278 = vld [vmem:[#allocation2 + $0x370] sm:$0xff]
    %v279 = vld [vmem:[#allocation2 + $0x378] sm:$0xff]
    %v280 = vld [vmem:[#allocation2 + $0x380] sm:$0xff]
    %v281 = vld [vmem:[#allocation2 + $0x388] sm:$0xff]
    %v282 = vld [vmem:[#allocation2 + $0x390] sm:$0xff]
    %v283 = vld [vmem:[#allocation2 + $0x398] sm:$0xff]
    %v284 = vld [vmem:[#allocation2 + $0x3a0] sm:$0xff]
    %v285 = vld [vmem:[#allocation2 + $0x3a8] sm:$0xff]
    %v286 = vld [vmem:[#allocation2 + $0x3b0] sm:$0xff]
    %v287 = vld [vmem:[#allocation2 + $0x3b8] sm:$0xff]
    %v288 = vld [vmem:[#allocation2 + $0x3c0] sm:$0xff]
    %v289 = vld [vmem:[#allocation2 + $0x3c8] sm:$0xff]
    %v290 = vld [vmem:[#allocation2 + $0x3d0] sm:$0xff]
    %v291 = vld [vmem:[#allocation2 + $0x3d8] sm:$0xff]
    %v292 = vld [vmem:[#allocation2 + $0x3e0] sm:$0xff]
    %v293 = vld [vmem:[#allocation2 + $0x3e8] sm:$0xff]
    %v294 = vld [vmem:[#allocation2 + $0x3f0] sm:$0xff]
    %v295 = vld [vmem:[#allocation2 + $0x3f8] sm:$0xff]
    %v296 = vld [vmem:[#allocation2 + $0x400] sm:$0xff]
    %v297 = vld [vmem:[#allocation2 + $0x408] sm:$0xff]
    %v298 = vld [vmem:[#allocation2 + $0x410] sm:$0xff]
    %v299 = vld [vmem:[#allocation2 + $0x418] sm:$0xff]
    %v300 = vld [vmem:[#allocation2 + $0x420] sm:$0xff]
    %v301 = vld [vmem:[#allocation2 + $0x428] sm:$0xff]
    %v302 = vld [vmem:[#allocation2 + $0x430] sm:$0xff]
    %v303 = vld [vmem:[#allocation2 + $0x438] sm:$0xff]
    %v304 = vld [vmem:[#allocation2 + $0x440] sm:$0xff]
    %v305 = vld [vmem:[#allocation2 + $0x448] sm:$0xff]
    %v306 = vld [vmem:[#allocation2 + $0x450] sm:$0xff]
    %v307 = vld [vmem:[#allocation2 + $0x458] sm:$0xff]
    %v308 = vld [vmem:[#allocation2 + $0x460] sm:$0xff]
    %v309 = vld [vmem:[#allocation2 + $0x468] sm:$0xff]
    %v310 = vld [vmem:[#allocation2 + $0x470] sm:$0xff]
    %v311 = vld [vmem:[#allocation2 + $0x478] sm:$0xff]
    %v312 = vld [vmem:[#allocation2 + $0x480] sm:$0xff]
    %v313 = vld [vmem:[#allocation2 + $0x488] sm:$0xff]
    %v314 = vld [vmem:[#allocation2 + $0x490] sm:$0xff]
    %v315 = vld [vmem:[#allocation2 + $0x498] sm:$0xff]
    %v316 = vld [vmem:[#allocation2 + $0x4a0] sm:$0xff]
    %v317 = vld [vmem:[#allocation2 + $0x4a8] sm:$0xff]
    %v318 = vld [vmem:[#allocation2 + $0x4b0] sm:$0xff]
    %v319 = vld [vmem:[#allocation2 + $0x4b8] sm:$0xff]
    %v320 = vld [vmem:[#allocation2 + $0x4c0] sm:$0xff]
    %v321 = vld [vmem:[#allocation2 + $0x4c8] sm:$0xff]
    %v322 = vld [vmem:[#allocation2 + $0x4d0] sm:$0xff]
    %v323 = vld [vmem:[#allocation2 + $0x4d8] sm:$0xff]
    %v324 = vld [vmem:[#allocation2 + $0x4e0] sm:$0xff]
    %v325 = vld [vmem:[#allocation2 + $0x4e8] sm:$0xff]
    %v326 = vld [vmem:[#allocation2 + $0x4f0] sm:$0xff]
    %v327 = vld [vmem:[#allocation2 + $0x4f8] sm:$0xff]
    %v328 = vld [vmem:[#allocation2 + $0x500] sm:$0xff]
    %v329 = vld [vmem:[#allocation2 + $0x508] sm:$0xff]
    %v330 = vld [vmem:[#allocation2 + $0x510] sm:$0xff]
    %v331 = vld [vmem:[#allocation2 + $0x518] sm:$0xff]
    %v332 = vld [vmem:[#allocation2 + $0x520] sm:$0xff]
    %v333 = vld [vmem:[#allocation2 + $0x528] sm:$0xff]
    %v334 = vld [vmem:[#allocation2 + $0x530] sm:$0xff]
    %v335 = vld [vmem:[#allocation2 + $0x538] sm:$0xff]
    %v336 = vld [vmem:[#allocation2 + $0x540] sm:$0xff]
    %v337 = vld [vmem:[#allocation2 + $0x548] sm:$0xff]
    %v338 = vld [vmem:[#allocation2 + $0x550] sm:$0xff]
    %v339 = vld [vmem:[#allocation2 + $0x558] sm:$0xff]
    %v340 = vld [vmem:[#allocation2 + $0x560] sm:$0xff]
    %v341 = vld [vmem:[#allocation2 + $0x568] sm:$0xff]
    %v342 = vld [vmem:[#allocation2 + $0x570] sm:$0xff]
    %v343 = vld [vmem:[#allocation2 + $0x578] sm:$0xff]
    %v344 = vld [vmem:[#allocation2 + $0x580] sm:$0xff]
    %v345 = vld [vmem:[#allocation2 + $0x588] sm:$0xff]
    %v346 = vld [vmem:[#allocation2 + $0x590] sm:$0xff]
    %v347 = vld [vmem:[#allocation2 + $0x598] sm:$0xff]
    %v348 = vld [vmem:[#allocation2 + $0x5a0] sm:$0xff]
    %v349 = vld [vmem:[#allocation2 + $0x5a8] sm:$0xff]
    %v350 = vld [vmem:[#allocation2 + $0x5b0] sm:$0xff]
    %v351 = vld [vmem:[#allocation2 + $0x5b8] sm:$0xff]
    %v352 = vld [vmem:[#allocation2 + $0x5c0] sm:$0xff]
    %v353 = vld [vmem:[#allocation2 + $0x5c8] sm:$0xff]
    %v354 = vld [vmem:[#allocation2 + $0x5d0] sm:$0xff]
    %v355 = vld [vmem:[#allocation2 + $0x5d8] sm:$0xff]
    %v356 = vld [vmem:[#allocation2 + $0x5e0] sm:$0xff]
    %v357 = vld [vmem:[#allocation2 + $0x5e8] sm:$0xff]
    %v358 = vld [vmem:[#allocation2 + $0x5f0] sm:$0xff]
    %v359 = vld [vmem:[#allocation2 + $0x5f8] sm:$0xff]
    %v360 = vld [vmem:[#allocation2 + $0x600] sm:$0xff]
    %v361 = vld [vmem:[#allocation2 + $0x608] sm:$0xff]
    %v362 = vld [vmem:[#allocation2 + $0x610] sm:$0xff]
    %v363 = vld [vmem:[#allocation2 + $0x618] sm:$0xff]
    %v364 = vld [vmem:[#allocation2 + $0x620] sm:$0xff]
    %v365 = vld [vmem:[#allocation2 + $0x628] sm:$0xff]
    %v366 = vld [vmem:[#allocation2 + $0x630] sm:$0xff]
    %v367 = vld [vmem:[#allocation2 + $0x638] sm:$0xff]
    %v368 = vld [vmem:[#allocation2 + $0x640] sm:$0xff]
    %v369 = vld [vmem:[#allocation2 + $0x648] sm:$0xff]
    %v370 = vld [vmem:[#allocation2 + $0x650] sm:$0xff]
    %v371 = vld [vmem:[#allocation2 + $0x658] sm:$0xff]
    %v372 = vld [vmem:[#allocation2 + $0x660] sm:$0xff]
    %v373 = vld [vmem:[#allocation2 + $0x668] sm:$0xff]
    %v374 = vld [vmem:[#allocation2 + $0x670] sm:$0xff]
    %v375 = vld [vmem:[#allocation2 + $0x678] sm:$0xff]
    %v376 = vld [vmem:[#allocation2 + $0x680] sm:$0xff]
    %v377 = vld [vmem:[#allocation2 + $0x688] sm:$0xff]
    %v378 = vld [vmem:[#allocation2 + $0x690] sm:$0xff]
    %v379 = vld [vmem:[#allocation2 + $0x698] sm:$0xff]
    %v380 = vld [vmem:[#allocation2 + $0x6a0] sm:$0xff]
    %v381 = vld [vmem:[#allocation2 + $0x6a8] sm:$0xff]
    %v382 = vld [vmem:[#allocation2 + $0x6b0] sm:$0xff]
    %v383 = vld [vmem:[#allocation2 + $0x6b8] sm:$0xff]
    %v384 = vld [vmem:[#allocation2 + $0x6c0] sm:$0xff]
    %v385 = vld [vmem:[#allocation2 + $0x6c8] sm:$0xff]
    %v386 = vld [vmem:[#allocation2 + $0x6d0] sm:$0xff]
    %v387 = vld [vmem:[#allocation2 + $0x6d8] sm:$0xff]
    %v388 = vld [vmem:[#allocation2 + $0x6e0] sm:$0xff]
    %v389 = vld [vmem:[#allocation2 + $0x6e8] sm:$0xff]
    %v390 = vld [vmem:[#allocation2 + $0x6f0] sm:$0xff]
    %v391 = vld [vmem:[#allocation2 + $0x6f8] sm:$0xff]
    %v392 = vld [vmem:[#allocation2 + $0x700] sm:$0xff]
    %v393 = vld [vmem:[#allocation2 + $0x708] sm:$0xff]
    %v394 = vld [vmem:[#allocation2 + $0x710] sm:$0xff]
    %v395 = vld [vmem:[#allocation2 + $0x718] sm:$0xff]
    %v396 = vld [vmem:[#allocation2 + $0x720] sm:$0xff]
    %v397 = vld [vmem:[#allocation2 + $0x728] sm:$0xff]
    %v398 = vld [vmem:[#allocation2 + $0x730] sm:$0xff]
    %v399 = vld [vmem:[#allocation2 + $0x738] sm:$0xff]
    %v400 = vld [vmem:[#allocation2 + $0x740] sm:$0xff]
    %v401 = vld [vmem:[#allocation2 + $0x748] sm:$0xff]
    %v402 = vld [vmem:[#allocation2 + $0x750] sm:$0xff]
    %v403 = vld [vmem:[#allocation2 + $0x758] sm:$0xff]
    %v404 = vld [vmem:[#allocation2 + $0x760] sm:$0xff]
    %v405 = vld [vmem:[#allocation2 + $0x768] sm:$0xff]
    %v406 = vld [vmem:[#allocation2 + $0x770] sm:$0xff]
    %v407 = vld [vmem:[#allocation2 + $0x778] sm:$0xff]
    %v408 = vld [vmem:[#allocation2 + $0x780] sm:$0xff]
    %v409 = vld [vmem:[#allocation2 + $0x788] sm:$0xff]
    %v410 = vld [vmem:[#allocation2 + $0x790] sm:$0xff]
    %v411 = vld [vmem:[#allocation2 + $0x798] sm:$0xff]
    %v412 = vld [vmem:[#allocation2 + $0x7a0] sm:$0xff]
    %v413 = vld [vmem:[#allocation2 + $0x7a8] sm:$0xff]
    %v414 = vld [vmem:[#allocation2 + $0x7b0] sm:$0xff]
    %v415 = vld [vmem:[#allocation2 + $0x7b8] sm:$0xff]
    %v416 = vld [vmem:[#allocation2 + $0x7c0] sm:$0xff]
    %v417 = vld [vmem:[#allocation2 + $0x7c8] sm:$0xff]
    %v418 = vld [vmem:[#allocation2 + $0x7d0] sm:$0xff]
    %v419 = vld [vmem:[#allocation2 + $0x7d8] sm:$0xff]
    %v420 = vld [vmem:[#allocation2 + $0x7e0] sm:$0xff]
    %v421 = vld [vmem:[#allocation2 + $0x7e8] sm:$0xff]
    %v422 = vld [vmem:[#allocation2 + $0x7f0] sm:$0xff]
    %v423 = vld [vmem:[#allocation2 + $0x7f8] sm:$0xff]
    %v424 = vld [vmem:[#allocation2 + $0x800] sm:$0xff]
    %v425 = vld [vmem:[#allocation2 + $0x808] sm:$0xff]
    %v426 = vld [vmem:[#allocation2 + $0x810] sm:$0xff]
    %v427 = vld [vmem:[#allocation2 + $0x818] sm:$0xff]
    %v428 = vld [vmem:[#allocation2 + $0x820] sm:$0xff]
    %v429 = vld [vmem:[#allocation2 + $0x828] sm:$0xff]
    %v430 = vld [vmem:[#allocation2 + $0x830] sm:$0xff]
    %v431 = vld [vmem:[#allocation2 + $0x838] sm:$0xff]
    %v432 = vld [vmem:[#allocation2 + $0x840] sm:$0xff]
    %v433 = vld [vmem:[#allocation2 + $0x848] sm:$0xff]
    %v434 = vld [vmem:[#allocation2 + $0x850] sm:$0xff]
    %v435 = vld [vmem:[#allocation2 + $0x858] sm:$0xff]
    %v436 = vld [vmem:[#allocation2 + $0x860] sm:$0xff]
    %v437 = vld [vmem:[#allocation2 + $0x868] sm:$0xff]
    %v438 = vld [vmem:[#allocation2 + $0x870] sm:$0xff]
    %v439 = vld [vmem:[#allocation2 + $0x878] sm:$0xff]
    %v440 = vld [vmem:[#allocation2 + $0x880] sm:$0xff]
    %v441 = vld [vmem:[#allocation2 + $0x888] sm:$0xff]
    %v442 = vld [vmem:[#allocation2 + $0x890] sm:$0xff]
    %v443 = vld [vmem:[#allocation2 + $0x898] sm:$0xff]
    %v444 = vld [vmem:[#allocation2 + $0x8a0] sm:$0xff]
    %v445 = vld [vmem:[#allocation2 + $0x8a8] sm:$0xff]
    %v446 = vld [vmem:[#allocation2 + $0x8b0] sm:$0xff]
    %v447 = vld [vmem:[#allocation2 + $0x8b8] sm:$0xff]
    %v448 = vld [vmem:[#allocation2 + $0x8c0] sm:$0xff]
    %v449 = vld [vmem:[#allocation2 + $0x8c8] sm:$0xff]
    %v450 = vld [vmem:[#allocation2 + $0x8d0] sm:$0xff]
    %v451 = vld [vmem:[#allocation2 + $0x8d8] sm:$0xff]
    %v452 = vld [vmem:[#allocation2 + $0x8e0] sm:$0xff]
    %v453 = vld [vmem:[#allocation2 + $0x8e8] sm:$0xff]
    %v454 = vld [vmem:[#allocation2 + $0x8f0] sm:$0xff]
    %v455 = vld [vmem:[#allocation2 + $0x8f8] sm:$0xff]
    %v456 = vld [vmem:[#allocation2 + $0x900] sm:$0xff]
    %v457 = vld [vmem:[#allocation2 + $0x908] sm:$0xff]
    %v458 = vld [vmem:[#allocation2 + $0x910] sm:$0xff]
    %v459 = vld [vmem:[#allocation2 + $0x918] sm:$0xff]
    %v460 = vld [vmem:[#allocation2 + $0x920] sm:$0xff]
    %v461 = vld [vmem:[#allocation2 + $0x928] sm:$0xff]
    %v462 = vld [vmem:[#allocation2 + $0x930] sm:$0xff]
    %v463 = vld [vmem:[#allocation2 + $0x938] sm:$0xff]
    %v464 = vld [vmem:[#allocation2 + $0x940] sm:$0xff]
    %v465 = vld [vmem:[#allocation2 + $0x948] sm:$0xff]
    %v466 = vld [vmem:[#allocation2 + $0x950] sm:$0xff]
    %v467 = vld [vmem:[#allocation2 + $0x958] sm:$0xff]
    %v468 = vld [vmem:[#allocation2 + $0x960] sm:$0xff]
    %v469 = vld [vmem:[#allocation2 + $0x968] sm:$0xff]
    %v470 = vld [vmem:[#allocation2 + $0x970] sm:$0xff]
    %v471 = vld [vmem:[#allocation2 + $0x978] sm:$0xff]
    %v472 = vld [vmem:[#allocation2 + $0x980] sm:$0xff]
    %v473 = vld [vmem:[#allocation2 + $0x988] sm:$0xff]
    %v474 = vld [vmem:[#allocation2 + $0x990] sm:$0xff]
    %v475 = vld [vmem:[#allocation2 + $0x998] sm:$0xff]
    %v476 = vld [vmem:[#allocation2 + $0x9a0] sm:$0xff]
    %v477 = vld [vmem:[#allocation2 + $0x9a8] sm:$0xff]
    %v478 = vld [vmem:[#allocation2 + $0x9b0] sm:$0xff]
    %v479 = vld [vmem:[#allocation2 + $0x9b8] sm:$0xff]
    %v480 = vld [vmem:[#allocation2 + $0x9c0] sm:$0xff]
    %v481 = vld [vmem:[#allocation2 + $0x9c8] sm:$0xff]
    %v482 = vld [vmem:[#allocation2 + $0x9d0] sm:$0xff]
    %v483 = vld [vmem:[#allocation2 + $0x9d8] sm:$0xff]
    %v484 = vld [vmem:[#allocation2 + $0x9e0] sm:$0xff]
    %v485 = vld [vmem:[#allocation2 + $0x9e8] sm:$0xff]
    %v486 = vld [vmem:[#allocation2 + $0x9f0] sm:$0xff]
    %v487 = vld [vmem:[#allocation2 + $0x9f8] sm:$0xff]
    %v488 = vld [vmem:[#allocation2 + $0xa00] sm:$0xff]
    %v489 = vld [vmem:[#allocation2 + $0xa08] sm:$0xff]
    %v490 = vld [vmem:[#allocation2 + $0xa10] sm:$0xff]
    %v491 = vld [vmem:[#allocation2 + $0xa18] sm:$0xff]
    %v492 = vld [vmem:[#allocation2 + $0xa20] sm:$0xff]
    %v493 = vld [vmem:[#allocation2 + $0xa28] sm:$0xff]
    %v494 = vld [vmem:[#allocation2 + $0xa30] sm:$0xff]
    %v495 = vld [vmem:[#allocation2 + $0xa38] sm:$0xff]
    %v496 = vld [vmem:[#allocation2 + $0xa40] sm:$0xff]
    %v497 = vld [vmem:[#allocation2 + $0xa48] sm:$0xff]
    %v498 = vld [vmem:[#allocation2 + $0xa50] sm:$0xff]
    %v499 = vld [vmem:[#allocation2 + $0xa58] sm:$0xff]
    %v500 = vld [vmem:[#allocation2 + $0xa60] sm:$0xff]
    %v501 = vld [vmem:[#allocation2 + $0xa68] sm:$0xff]
    %v502 = vld [vmem:[#allocation2 + $0xa70] sm:$0xff]
    %v503 = vld [vmem:[#allocation2 + $0xa78] sm:$0xff]
    %v504 = vld [vmem:[#allocation2 + $0xa80] sm:$0xff]
    %v505 = vld [vmem:[#allocation2 + $0xa88] sm:$0xff]
    %v506 = vld [vmem:[#allocation2 + $0xa90] sm:$0xff]
    %v507 = vld [vmem:[#allocation2 + $0xa98] sm:$0xff]
    %v508 = vld [vmem:[#allocation2 + $0xaa0] sm:$0xff]
    %v509 = vld [vmem:[#allocation2 + $0xaa8] sm:$0xff]
    %v510 = vld [vmem:[#allocation2 + $0xab0] sm:$0xff]
    %v511 = vld [vmem:[#allocation2 + $0xab8] sm:$0xff]
    %v512 = vld [vmem:[#allocation2 + $0xac0] sm:$0xff]
    %v513 = vld [vmem:[#allocation2 + $0xac8] sm:$0xff]
    %v514 = vld [vmem:[#allocation2 + $0xad0] sm:$0xff]
    %v515 = vld [vmem:[#allocation2 + $0xad8] sm:$0xff]
    %v516 = vld [vmem:[#allocation2 + $0xae0] sm:$0xff]
    %v517 = vld [vmem:[#allocation2 + $0xae8] sm:$0xff]
    %v518 = vld [vmem:[#allocation2 + $0xaf0] sm:$0xff]
    %v519 = vld [vmem:[#allocation2 + $0xaf8] sm:$0xff]
    %v520 = vld [vmem:[#allocation2 + $0xb00] sm:$0xff]
    %v521 = vld [vmem:[#allocation2 + $0xb08] sm:$0xff]
    %v522 = vld [vmem:[#allocation2 + $0xb10] sm:$0xff]
    %v523 = vld [vmem:[#allocation2 + $0xb18] sm:$0xff]
    %v524 = vld [vmem:[#allocation2 + $0xb20] sm:$0xff]
    %v525 = vld [vmem:[#allocation2 + $0xb28] sm:$0xff]
    %v526 = vld [vmem:[#allocation2 + $0xb30] sm:$0xff]
    %v527 = vld [vmem:[#allocation2 + $0xb38] sm:$0xff]
    %v528 = vld [vmem:[#allocation2 + $0xb40] sm:$0xff]
    %v529 = vld [vmem:[#allocation2 + $0xb48] sm:$0xff]
    %v530 = vld [vmem:[#allocation2 + $0xb50] sm:$0xff]
    %v531 = vld [vmem:[#allocation2 + $0xb58] sm:$0xff]
    %v532 = vld [vmem:[#allocation2 + $0xb60] sm:$0xff]
    %v533 = vld [vmem:[#allocation2 + $0xb68] sm:$0xff]
    %v534 = vld [vmem:[#allocation2 + $0xb70] sm:$0xff]
    %v535 = vld [vmem:[#allocation2 + $0xb78] sm:$0xff]
    %v536 = vld [vmem:[#allocation2 + $0xb80] sm:$0xff]
    %v537 = vld [vmem:[#allocation2 + $0xb88] sm:$0xff]
    %v538 = vld [vmem:[#allocation2 + $0xb90] sm:$0xff]
    %v539 = vld [vmem:[#allocation2 + $0xb98] sm:$0xff]
    %v540 = vld [vmem:[#allocation2 + $0xba0] sm:$0xff]
    %v541 = vld [vmem:[#allocation2 + $0xba8] sm:$0xff]
    %v542 = vld [vmem:[#allocation2 + $0xbb0] sm:$0xff]
    %v543 = vld [vmem:[#allocation2 + $0xbb8] sm:$0xff]
    %v544 = vld [vmem:[#allocation2 + $0xbc0] sm:$0xff]
    %v545 = vld [vmem:[#allocation2 + $0xbc8] sm:$0xff]
    %v546 = vld [vmem:[#allocation2 + $0xbd0] sm:$0xff]
    %v547 = vld [vmem:[#allocation2 + $0xbd8] sm:$0xff]
    %v548 = vld [vmem:[#allocation2 + $0xbe0] sm:$0xff]
    %v549 = vld [vmem:[#allocation2 + $0xbe8] sm:$0xff]
    %v550 = vld [vmem:[#allocation2 + $0xbf0] sm:$0xff]
    %v551 = vld [vmem:[#allocation2 + $0xbf8] sm:$0xff]
    %v552 = vld [vmem:[#allocation4] sm:$0xff]
    %v554 = vlaneseq
    %v555 = vshrl.u32 %v554, 7
    %v556 = vsub.s32 0, %v555
    %v557 = vrot.slane %v552, %v556
    %v558 = vlaneseq
    %v559 = vshrl.u32 %v558, 7
    %v560 = vsub.s32 1, %v559
    %v561 = vrot.slane %v552, %v560
    %v562 = vlaneseq
    %v563 = vshrl.u32 %v562, 7
    %v564 = vsub.s32 2, %v563
    %v565 = vrot.slane %v552, %v564
    %v566 = vlaneseq
    %v567 = vshrl.u32 %v566, 7
    %v568 = vsub.s32 3, %v567
    %v569 = vrot.slane %v552, %v568
    %v570 = vlaneseq
    %v571 = vshrl.u32 %v570, 7
    %v572 = vsub.s32 4, %v571
    %v573 = vrot.slane %v552, %v572
    %v574 = vlaneseq
    %v575 = vshrl.u32 %v574, 7
    %v576 = vsub.s32 5, %v575
    %v577 = vrot.slane %v552, %v576
    %v578 = vlaneseq
    %v579 = vshrl.u32 %v578, 7
    %v580 = vsub.s32 6, %v579
    %v581 = vrot.slane %v552, %v580
    %v582 = vlaneseq
    %v583 = vshrl.u32 %v582, 7
    %v584 = vsub.s32 7, %v583
    %v585 = vrot.slane %v552, %v584
    %v690 = vunpack.c.l.b16 %v72
    %v691 = vunpack.c.h.b16 %v72
    %v692 = vunpack.c.l.b16 %v73
    %v693 = vunpack.c.h.b16 %v73
    %v694 = vunpack.c.l.b16 %v74
    %v695 = vunpack.c.h.b16 %v74
    %v696 = vunpack.c.l.b16 %v75
    %v697 = vunpack.c.h.b16 %v75
    %v698 = vunpack.c.l.b16 %v76
    %v699 = vunpack.c.h.b16 %v76
    %v700 = vunpack.c.l.b16 %v77
    %v701 = vunpack.c.h.b16 %v77
    %v702 = vunpack.c.l.b16 %v78
    %v703 = vunpack.c.h.b16 %v78
    %v704 = vunpack.c.l.b16 %v79
    %v705 = vunpack.c.h.b16 %v79
    %v706 = vunpack.c.l.b16 %v80
    %v707 = vunpack.c.h.b16 %v80
    %v708 = vunpack.c.l.b16 %v81
    %v709 = vunpack.c.h.b16 %v81
    %v710 = vunpack.c.l.b16 %v82
    %v711 = vunpack.c.h.b16 %v82
    %v712 = vunpack.c.l.b16 %v83
    %v713 = vunpack.c.h.b16 %v83
    %v714 = vunpack.c.l.b16 %v84
    %v715 = vunpack.c.h.b16 %v84
    %v716 = vunpack.c.l.b16 %v85
    %v717 = vunpack.c.h.b16 %v85
    %v718 = vunpack.c.l.b16 %v86
    %v719 = vunpack.c.h.b16 %v86
    %v720 = vunpack.c.l.b16 %v87
    %v721 = vunpack.c.h.b16 %v87
    %v722 = vunpack.c.l.b16 %v88
    %v723 = vunpack.c.h.b16 %v88
    %v724 = vunpack.c.l.b16 %v89
    %v725 = vunpack.c.h.b16 %v89
    %v726 = vunpack.c.l.b16 %v90
    %v727 = vunpack.c.h.b16 %v90
    %v728 = vunpack.c.l.b16 %v91
    %v729 = vunpack.c.h.b16 %v91
    %v730 = vunpack.c.l.b16 %v92
    %v731 = vunpack.c.h.b16 %v92
    %v732 = vunpack.c.l.b16 %v93
    %v733 = vunpack.c.h.b16 %v93
    %v734 = vunpack.c.l.b16 %v94
    %v735 = vunpack.c.h.b16 %v94
    %v736 = vunpack.c.l.b16 %v95
    %v737 = vunpack.c.h.b16 %v95
    %v738 = vunpack.c.l.b16 %v96
    %v739 = vunpack.c.h.b16 %v96
    %v740 = vunpack.c.l.b16 %v97
    %v741 = vunpack.c.h.b16 %v97
    %v742 = vunpack.c.l.b16 %v98
    %v743 = vunpack.c.h.b16 %v98
    %v744 = vunpack.c.l.b16 %v99
    %v745 = vunpack.c.h.b16 %v99
    %v746 = vunpack.c.l.b16 %v100
    %v747 = vunpack.c.h.b16 %v100
    %v748 = vunpack.c.l.b16 %v101
    %v749 = vunpack.c.h.b16 %v101
    %v750 = vunpack.c.l.b16 %v102
    %v751 = vunpack.c.h.b16 %v102
    %v752 = vunpack.c.l.b16 %v103
    %v753 = vunpack.c.h.b16 %v103
    %v754 = vunpack.c.l.b16 %v104
    %v755 = vunpack.c.h.b16 %v104
    %v756 = vunpack.c.l.b16 %v105
    %v757 = vunpack.c.h.b16 %v105
    %v758 = vunpack.c.l.b16 %v106
    %v759 = vunpack.c.h.b16 %v106
    %v760 = vunpack.c.l.b16 %v107
    %v761 = vunpack.c.h.b16 %v107
    %v762 = vunpack.c.l.b16 %v108
    %v763 = vunpack.c.h.b16 %v108
    %v764 = vunpack.c.l.b16 %v109
    %v765 = vunpack.c.h.b16 %v109
    %v766 = vunpack.c.l.b16 %v110
    %v767 = vunpack.c.h.b16 %v110
    %v768 = vunpack.c.l.b16 %v111
    %v769 = vunpack.c.h.b16 %v111
    %v770 = vunpack.c.l.b16 %v112
    %v771 = vunpack.c.h.b16 %v112
    %v772 = vunpack.c.l.b16 %v113
    %v773 = vunpack.c.h.b16 %v113
    %v774 = vunpack.c.l.b16 %v114
    %v775 = vunpack.c.h.b16 %v114
    %v776 = vunpack.c.l.b16 %v115
    %v777 = vunpack.c.h.b16 %v115
    %v778 = vunpack.c.l.b16 %v116
    %v779 = vunpack.c.h.b16 %v116
    %v780 = vunpack.c.l.b16 %v117
    %v781 = vunpack.c.h.b16 %v117
    %v782 = vunpack.c.l.b16 %v118
    %v783 = vunpack.c.h.b16 %v118
    %v784 = vunpack.c.l.b16 %v119
    %v785 = vunpack.c.h.b16 %v119
    %v786 = vunpack.c.l.b16 %v120
    %v787 = vunpack.c.h.b16 %v120
    %v788 = vunpack.c.l.b16 %v121
    %v789 = vunpack.c.h.b16 %v121
    %v790 = vunpack.c.l.b16 %v122
    %v791 = vunpack.c.h.b16 %v122
    %v792 = vunpack.c.l.b16 %v123
    %v793 = vunpack.c.h.b16 %v123
    %v794 = vunpack.c.l.b16 %v124
    %v795 = vunpack.c.h.b16 %v124
    %v796 = vunpack.c.l.b16 %v125
    %v797 = vunpack.c.h.b16 %v125
    %v798 = vunpack.c.l.b16 %v126
    %v799 = vunpack.c.h.b16 %v126
    %v800 = vunpack.c.l.b16 %v127
    %v801 = vunpack.c.h.b16 %v127
    %v802 = vunpack.c.l.b16 %v128
    %v803 = vunpack.c.h.b16 %v128
    %v804 = vunpack.c.l.b16 %v129
    %v805 = vunpack.c.h.b16 %v129
    %v806 = vunpack.c.l.b16 %v130
    %v807 = vunpack.c.h.b16 %v130
    %v808 = vunpack.c.l.b16 %v131
    %v809 = vunpack.c.h.b16 %v131
    %v810 = vunpack.c.l.b16 %v132
    %v811 = vunpack.c.h.b16 %v132
    %v812 = vunpack.c.l.b16 %v133
    %v813 = vunpack.c.h.b16 %v133
    %v814 = vunpack.c.l.b16 %v134
    %v815 = vunpack.c.h.b16 %v134
    %v816 = vunpack.c.l.b16 %v135
    %v817 = vunpack.c.h.b16 %v135
    %v818 = vunpack.c.l.b16 %v136
    %v819 = vunpack.c.h.b16 %v136
    %v820 = vunpack.c.l.b16 %v137
    %v821 = vunpack.c.h.b16 %v137
    %v822 = vunpack.c.l.b16 %v138
    %v823 = vunpack.c.h.b16 %v138
    %v824 = vunpack.c.l.b16 %v139
    %v825 = vunpack.c.h.b16 %v139
    %v826 = vunpack.c.l.b16 %v140
    %v827 = vunpack.c.h.b16 %v140
    %v828 = vunpack.c.l.b16 %v141
    %v829 = vunpack.c.h.b16 %v141
    %v830 = vunpack.c.l.b16 %v142
    %v831 = vunpack.c.h.b16 %v142
    %v832 = vunpack.c.l.b16 %v143
    %v833 = vunpack.c.h.b16 %v143
    %v834 = vunpack.c.l.b16 %v144
    %v835 = vunpack.c.h.b16 %v144
    %v836 = vunpack.c.l.b16 %v145
    %v837 = vunpack.c.h.b16 %v145
    %v838 = vunpack.c.l.b16 %v146
    %v839 = vunpack.c.h.b16 %v146
    %v840 = vunpack.c.l.b16 %v147
    %v841 = vunpack.c.h.b16 %v147
    %v842 = vunpack.c.l.b16 %v148
    %v843 = vunpack.c.h.b16 %v148
    %v844 = vunpack.c.l.b16 %v149
    %v845 = vunpack.c.h.b16 %v149
    %v846 = vunpack.c.l.b16 %v150
    %v847 = vunpack.c.h.b16 %v150
    %v848 = vunpack.c.l.b16 %v151
    %v849 = vunpack.c.h.b16 %v151
    %v850 = vunpack.c.l.b16 %v152
    %v851 = vunpack.c.h.b16 %v152
    %v852 = vunpack.c.l.b16 %v153
    %v853 = vunpack.c.h.b16 %v153
    %v854 = vunpack.c.l.b16 %v154
    %v855 = vunpack.c.h.b16 %v154
    %v856 = vunpack.c.l.b16 %v155
    %v857 = vunpack.c.h.b16 %v155
    %v858 = vunpack.c.l.b16 %v156
    %v859 = vunpack.c.h.b16 %v156
    %v860 = vunpack.c.l.b16 %v157
    %v861 = vunpack.c.h.b16 %v157
    %v862 = vunpack.c.l.b16 %v158
    %v863 = vunpack.c.h.b16 %v158
    %v864 = vunpack.c.l.b16 %v159
    %v865 = vunpack.c.h.b16 %v159
    %v866 = vunpack.c.l.b16 %v160
    %v867 = vunpack.c.h.b16 %v160
    %v868 = vunpack.c.l.b16 %v161
    %v869 = vunpack.c.h.b16 %v161
    %v870 = vunpack.c.l.b16 %v162
    %v871 = vunpack.c.h.b16 %v162
    %v872 = vunpack.c.l.b16 %v163
    %v873 = vunpack.c.h.b16 %v163
    %v874 = vunpack.c.l.b16 %v164
    %v875 = vunpack.c.h.b16 %v164
    %v876 = vunpack.c.l.b16 %v165
    %v877 = vunpack.c.h.b16 %v165
    %v878 = vunpack.c.l.b16 %v166
    %v879 = vunpack.c.h.b16 %v166
    %v880 = vunpack.c.l.b16 %v167
    %v881 = vunpack.c.h.b16 %v167
    %v882 = vpack.c.b16 %v696, %v690
    %v883 = vpack.c.b16 %v697, %v691
    %v884 = vpack.c.b16 %v698, %v692
    %v885 = vpack.c.b16 %v699, %v693
    %v886 = vpack.c.b16 %v700, %v694
    %v887 = vpack.c.b16 %v701, %v695
    %v888 = vpack.c.b16 %v708, %v702
    %v889 = vpack.c.b16 %v709, %v703
    %v890 = vpack.c.b16 %v710, %v704
    %v891 = vpack.c.b16 %v711, %v705
    %v892 = vpack.c.b16 %v712, %v706
    %v893 = vpack.c.b16 %v713, %v707
    %v894 = vpack.c.b16 %v720, %v714
    %v895 = vpack.c.b16 %v721, %v715
    %v896 = vpack.c.b16 %v722, %v716
    %v897 = vpack.c.b16 %v723, %v717
    %v898 = vpack.c.b16 %v724, %v718
    %v899 = vpack.c.b16 %v725, %v719
    %v900 = vpack.c.b16 %v732, %v726
    %v901 = vpack.c.b16 %v733, %v727
    %v902 = vpack.c.b16 %v734, %v728
    %v903 = vpack.c.b16 %v735, %v729
    %v904 = vpack.c.b16 %v736, %v730
    %v905 = vpack.c.b16 %v737, %v731
    %v906 = vpack.c.b16 %v744, %v738
    %v907 = vpack.c.b16 %v745, %v739
    %v908 = vpack.c.b16 %v746, %v740
    %v909 = vpack.c.b16 %v747, %v741
    %v910 = vpack.c.b16 %v748, %v742
    %v911 = vpack.c.b16 %v749, %v743
    %v912 = vpack.c.b16 %v756, %v750
    %v913 = vpack.c.b16 %v757, %v751
    %v914 = vpack.c.b16 %v758, %v752
    %v915 = vpack.c.b16 %v759, %v753
    %v916 = vpack.c.b16 %v760, %v754
    %v917 = vpack.c.b16 %v761, %v755
    %v918 = vpack.c.b16 %v768, %v762
    %v919 = vpack.c.b16 %v769, %v763
    %v920 = vpack.c.b16 %v770, %v764
    %v921 = vpack.c.b16 %v771, %v765
    %v922 = vpack.c.b16 %v772, %v766
    %v923 = vpack.c.b16 %v773, %v767
    %v924 = vpack.c.b16 %v780, %v774
    %v925 = vpack.c.b16 %v781, %v775
    %v926 = vpack.c.b16 %v782, %v776
    %v927 = vpack.c.b16 %v783, %v777
    %v928 = vpack.c.b16 %v784, %v778
    %v929 = vpack.c.b16 %v785, %v779
    %v930 = vpack.c.b16 %v792, %v786
    %v931 = vpack.c.b16 %v793, %v787
    %v932 = vpack.c.b16 %v794, %v788
    %v933 = vpack.c.b16 %v795, %v789
    %v934 = vpack.c.b16 %v796, %v790
    %v935 = vpack.c.b16 %v797, %v791
    %v936 = vpack.c.b16 %v804, %v798
    %v937 = vpack.c.b16 %v805, %v799
    %v938 = vpack.c.b16 %v806, %v800
    %v939 = vpack.c.b16 %v807, %v801
    %v940 = vpack.c.b16 %v808, %v802
    %v941 = vpack.c.b16 %v809, %v803
    %v942 = vpack.c.b16 %v816, %v810
    %v943 = vpack.c.b16 %v817, %v811
    %v944 = vpack.c.b16 %v818, %v812
    %v945 = vpack.c.b16 %v819, %v813
    %v946 = vpack.c.b16 %v820, %v814
    %v947 = vpack.c.b16 %v821, %v815
    %v948 = vpack.c.b16 %v828, %v822
    %v949 = vpack.c.b16 %v829, %v823
    %v950 = vpack.c.b16 %v830, %v824
    %v951 = vpack.c.b16 %v831, %v825
    %v952 = vpack.c.b16 %v832, %v826
    %v953 = vpack.c.b16 %v833, %v827
    %v954 = vpack.c.b16 %v840, %v834
    %v955 = vpack.c.b16 %v841, %v835
    %v956 = vpack.c.b16 %v842, %v836
    %v957 = vpack.c.b16 %v843, %v837
    %v958 = vpack.c.b16 %v844, %v838
    %v959 = vpack.c.b16 %v845, %v839
    %v960 = vpack.c.b16 %v852, %v846
    %v961 = vpack.c.b16 %v853, %v847
    %v962 = vpack.c.b16 %v854, %v848
    %v963 = vpack.c.b16 %v855, %v849
    %v964 = vpack.c.b16 %v856, %v850
    %v965 = vpack.c.b16 %v857, %v851
    %v966 = vpack.c.b16 %v864, %v858
    %v967 = vpack.c.b16 %v865, %v859
    %v968 = vpack.c.b16 %v866, %v860
    %v969 = vpack.c.b16 %v867, %v861
    %v970 = vpack.c.b16 %v868, %v862
    %v971 = vpack.c.b16 %v869, %v863
    %v972 = vpack.c.b16 %v876, %v870
    %v973 = vpack.c.b16 %v877, %v871
    %v974 = vpack.c.b16 %v878, %v872
    %v975 = vpack.c.b16 %v879, %v873
    %v976 = vpack.c.b16 %v880, %v874
    %v977 = vpack.c.b16 %v881, %v875
    %v1458 = vunpack.c.l.b16 %v168
    %v1459 = vunpack.c.h.b16 %v168
    %v1460 = vunpack.c.l.b16 %v169
    %v1461 = vunpack.c.h.b16 %v169
    %v1462 = vunpack.c.l.b16 %v170
    %v1463 = vunpack.c.h.b16 %v170
    %v1464 = vunpack.c.l.b16 %v171
    %v1465 = vunpack.c.h.b16 %v171
    %v1466 = vunpack.c.l.b16 %v172
    %v1467 = vunpack.c.h.b16 %v172
    %v1468 = vunpack.c.l.b16 %v173
    %v1469 = vunpack.c.h.b16 %v173
    %v1470 = vunpack.c.l.b16 %v174
    %v1471 = vunpack.c.h.b16 %v174
    %v1472 = vunpack.c.l.b16 %v175
    %v1473 = vunpack.c.h.b16 %v175
    %v1474 = vunpack.c.l.b16 %v176
    %v1475 = vunpack.c.h.b16 %v176
    %v1476 = vunpack.c.l.b16 %v177
    %v1477 = vunpack.c.h.b16 %v177
    %v1478 = vunpack.c.l.b16 %v178
    %v1479 = vunpack.c.h.b16 %v178
    %v1480 = vunpack.c.l.b16 %v179
    %v1481 = vunpack.c.h.b16 %v179
    %v1482 = vunpack.c.l.b16 %v180
    %v1483 = vunpack.c.h.b16 %v180
    %v1484 = vunpack.c.l.b16 %v181
    %v1485 = vunpack.c.h.b16 %v181
    %v1486 = vunpack.c.l.b16 %v182
    %v1487 = vunpack.c.h.b16 %v182
    %v1488 = vunpack.c.l.b16 %v183
    %v1489 = vunpack.c.h.b16 %v183
    %v1490 = vunpack.c.l.b16 %v184
    %v1491 = vunpack.c.h.b16 %v184
    %v1492 = vunpack.c.l.b16 %v185
    %v1493 = vunpack.c.h.b16 %v185
    %v1494 = vunpack.c.l.b16 %v186
    %v1495 = vunpack.c.h.b16 %v186
    %v1496 = vunpack.c.l.b16 %v187
    %v1497 = vunpack.c.h.b16 %v187
    %v1498 = vunpack.c.l.b16 %v188
    %v1499 = vunpack.c.h.b16 %v188
    %v1500 = vunpack.c.l.b16 %v189
    %v1501 = vunpack.c.h.b16 %v189
    %v1502 = vunpack.c.l.b16 %v190
    %v1503 = vunpack.c.h.b16 %v190
    %v1504 = vunpack.c.l.b16 %v191
    %v1505 = vunpack.c.h.b16 %v191
    %v1506 = vunpack.c.l.b16 %v192
    %v1507 = vunpack.c.h.b16 %v192
    %v1508 = vunpack.c.l.b16 %v193
    %v1509 = vunpack.c.h.b16 %v193
    %v1510 = vunpack.c.l.b16 %v194
    %v1511 = vunpack.c.h.b16 %v194
    %v1512 = vunpack.c.l.b16 %v195
    %v1513 = vunpack.c.h.b16 %v195
    %v1514 = vunpack.c.l.b16 %v196
    %v1515 = vunpack.c.h.b16 %v196
    %v1516 = vunpack.c.l.b16 %v197
    %v1517 = vunpack.c.h.b16 %v197
    %v1518 = vunpack.c.l.b16 %v198
    %v1519 = vunpack.c.h.b16 %v198
    %v1520 = vunpack.c.l.b16 %v199
    %v1521 = vunpack.c.h.b16 %v199
    %v1522 = vunpack.c.l.b16 %v200
    %v1523 = vunpack.c.h.b16 %v200
    %v1524 = vunpack.c.l.b16 %v201
    %v1525 = vunpack.c.h.b16 %v201
    %v1526 = vunpack.c.l.b16 %v202
    %v1527 = vunpack.c.h.b16 %v202
    %v1528 = vunpack.c.l.b16 %v203
    %v1529 = vunpack.c.h.b16 %v203
    %v1530 = vunpack.c.l.b16 %v204
    %v1531 = vunpack.c.h.b16 %v204
    %v1532 = vunpack.c.l.b16 %v205
    %v1533 = vunpack.c.h.b16 %v205
    %v1534 = vunpack.c.l.b16 %v206
    %v1535 = vunpack.c.h.b16 %v206
    %v1536 = vunpack.c.l.b16 %v207
    %v1537 = vunpack.c.h.b16 %v207
    %v1538 = vunpack.c.l.b16 %v208
    %v1539 = vunpack.c.h.b16 %v208
    %v1540 = vunpack.c.l.b16 %v209
    %v1541 = vunpack.c.h.b16 %v209
    %v1542 = vunpack.c.l.b16 %v210
    %v1543 = vunpack.c.h.b16 %v210
    %v1544 = vunpack.c.l.b16 %v211
    %v1545 = vunpack.c.h.b16 %v211
    %v1546 = vunpack.c.l.b16 %v212
    %v1547 = vunpack.c.h.b16 %v212
    %v1548 = vunpack.c.l.b16 %v213
    %v1549 = vunpack.c.h.b16 %v213
    %v1550 = vunpack.c.l.b16 %v214
    %v1551 = vunpack.c.h.b16 %v214
    %v1552 = vunpack.c.l.b16 %v215
    %v1553 = vunpack.c.h.b16 %v215
    %v1554 = vunpack.c.l.b16 %v216
    %v1555 = vunpack.c.h.b16 %v216
    %v1556 = vunpack.c.l.b16 %v217
    %v1557 = vunpack.c.h.b16 %v217
    %v1558 = vunpack.c.l.b16 %v218
    %v1559 = vunpack.c.h.b16 %v218
    %v1560 = vunpack.c.l.b16 %v219
    %v1561 = vunpack.c.h.b16 %v219
    %v1562 = vunpack.c.l.b16 %v220
    %v1563 = vunpack.c.h.b16 %v220
    %v1564 = vunpack.c.l.b16 %v221
    %v1565 = vunpack.c.h.b16 %v221
    %v1566 = vunpack.c.l.b16 %v222
    %v1567 = vunpack.c.h.b16 %v222
    %v1568 = vunpack.c.l.b16 %v223
    %v1569 = vunpack.c.h.b16 %v223
    %v1570 = vunpack.c.l.b16 %v224
    %v1571 = vunpack.c.h.b16 %v224
    %v1572 = vunpack.c.l.b16 %v225
    %v1573 = vunpack.c.h.b16 %v225
    %v1574 = vunpack.c.l.b16 %v226
    %v1575 = vunpack.c.h.b16 %v226
    %v1576 = vunpack.c.l.b16 %v227
    %v1577 = vunpack.c.h.b16 %v227
    %v1578 = vunpack.c.l.b16 %v228
    %v1579 = vunpack.c.h.b16 %v228
    %v1580 = vunpack.c.l.b16 %v229
    %v1581 = vunpack.c.h.b16 %v229
    %v1582 = vunpack.c.l.b16 %v230
    %v1583 = vunpack.c.h.b16 %v230
    %v1584 = vunpack.c.l.b16 %v231
    %v1585 = vunpack.c.h.b16 %v231
    %v1586 = vunpack.c.l.b16 %v232
    %v1587 = vunpack.c.h.b16 %v232
    %v1588 = vunpack.c.l.b16 %v233
    %v1589 = vunpack.c.h.b16 %v233
    %v1590 = vunpack.c.l.b16 %v234
    %v1591 = vunpack.c.h.b16 %v234
    %v1592 = vunpack.c.l.b16 %v235
    %v1593 = vunpack.c.h.b16 %v235
    %v1594 = vunpack.c.l.b16 %v236
    %v1595 = vunpack.c.h.b16 %v236
    %v1596 = vunpack.c.l.b16 %v237
    %v1597 = vunpack.c.h.b16 %v237
    %v1598 = vunpack.c.l.b16 %v238
    %v1599 = vunpack.c.h.b16 %v238
    %v1600 = vunpack.c.l.b16 %v239
    %v1601 = vunpack.c.h.b16 %v239
    %v1602 = vunpack.c.l.b16 %v240
    %v1603 = vunpack.c.h.b16 %v240
    %v1604 = vunpack.c.l.b16 %v241
    %v1605 = vunpack.c.h.b16 %v241
    %v1606 = vunpack.c.l.b16 %v242
    %v1607 = vunpack.c.h.b16 %v242
    %v1608 = vunpack.c.l.b16 %v243
    %v1609 = vunpack.c.h.b16 %v243
    %v1610 = vunpack.c.l.b16 %v244
    %v1611 = vunpack.c.h.b16 %v244
    %v1612 = vunpack.c.l.b16 %v245
    %v1613 = vunpack.c.h.b16 %v245
    %v1614 = vunpack.c.l.b16 %v246
    %v1615 = vunpack.c.h.b16 %v246
    %v1616 = vunpack.c.l.b16 %v247
    %v1617 = vunpack.c.h.b16 %v247
    %v1618 = vunpack.c.l.b16 %v248
    %v1619 = vunpack.c.h.b16 %v248
    %v1620 = vunpack.c.l.b16 %v249
    %v1621 = vunpack.c.h.b16 %v249
    %v1622 = vunpack.c.l.b16 %v250
    %v1623 = vunpack.c.h.b16 %v250
    %v1624 = vunpack.c.l.b16 %v251
    %v1625 = vunpack.c.h.b16 %v251
    %v1626 = vunpack.c.l.b16 %v252
    %v1627 = vunpack.c.h.b16 %v252
    %v1628 = vunpack.c.l.b16 %v253
    %v1629 = vunpack.c.h.b16 %v253
    %v1630 = vunpack.c.l.b16 %v254
    %v1631 = vunpack.c.h.b16 %v254
    %v1632 = vunpack.c.l.b16 %v255
    %v1633 = vunpack.c.h.b16 %v255
    %v1634 = vunpack.c.l.b16 %v256
    %v1635 = vunpack.c.h.b16 %v256
    %v1636 = vunpack.c.l.b16 %v257
    %v1637 = vunpack.c.h.b16 %v257
    %v1638 = vunpack.c.l.b16 %v258
    %v1639 = vunpack.c.h.b16 %v258
    %v1640 = vunpack.c.l.b16 %v259
    %v1641 = vunpack.c.h.b16 %v259
    %v1642 = vunpack.c.l.b16 %v260
    %v1643 = vunpack.c.h.b16 %v260
    %v1644 = vunpack.c.l.b16 %v261
    %v1645 = vunpack.c.h.b16 %v261
    %v1646 = vunpack.c.l.b16 %v262
    %v1647 = vunpack.c.h.b16 %v262
    %v1648 = vunpack.c.l.b16 %v263
    %v1649 = vunpack.c.h.b16 %v263
    %v1650 = vunpack.c.l.b16 %v264
    %v1651 = vunpack.c.h.b16 %v264
    %v1652 = vunpack.c.l.b16 %v265
    %v1653 = vunpack.c.h.b16 %v265
    %v1654 = vunpack.c.l.b16 %v266
    %v1655 = vunpack.c.h.b16 %v266
    %v1656 = vunpack.c.l.b16 %v267
    %v1657 = vunpack.c.h.b16 %v267
    %v1658 = vunpack.c.l.b16 %v268
    %v1659 = vunpack.c.h.b16 %v268
    %v1660 = vunpack.c.l.b16 %v269
    %v1661 = vunpack.c.h.b16 %v269
    %v1662 = vunpack.c.l.b16 %v270
    %v1663 = vunpack.c.h.b16 %v270
    %v1664 = vunpack.c.l.b16 %v271
    %v1665 = vunpack.c.h.b16 %v271
    %v1666 = vunpack.c.l.b16 %v272
    %v1667 = vunpack.c.h.b16 %v272
    %v1668 = vunpack.c.l.b16 %v273
    %v1669 = vunpack.c.h.b16 %v273
    %v1670 = vunpack.c.l.b16 %v274
    %v1671 = vunpack.c.h.b16 %v274
    %v1672 = vunpack.c.l.b16 %v275
    %v1673 = vunpack.c.h.b16 %v275
    %v1674 = vunpack.c.l.b16 %v276
    %v1675 = vunpack.c.h.b16 %v276
    %v1676 = vunpack.c.l.b16 %v277
    %v1677 = vunpack.c.h.b16 %v277
    %v1678 = vunpack.c.l.b16 %v278
    %v1679 = vunpack.c.h.b16 %v278
    %v1680 = vunpack.c.l.b16 %v279
    %v1681 = vunpack.c.h.b16 %v279
    %v1682 = vunpack.c.l.b16 %v280
    %v1683 = vunpack.c.h.b16 %v280
    %v1684 = vunpack.c.l.b16 %v281
    %v1685 = vunpack.c.h.b16 %v281
    %v1686 = vunpack.c.l.b16 %v282
    %v1687 = vunpack.c.h.b16 %v282
    %v1688 = vunpack.c.l.b16 %v283
    %v1689 = vunpack.c.h.b16 %v283
    %v1690 = vunpack.c.l.b16 %v284
    %v1691 = vunpack.c.h.b16 %v284
    %v1692 = vunpack.c.l.b16 %v285
    %v1693 = vunpack.c.h.b16 %v285
    %v1694 = vunpack.c.l.b16 %v286
    %v1695 = vunpack.c.h.b16 %v286
    %v1696 = vunpack.c.l.b16 %v287
    %v1697 = vunpack.c.h.b16 %v287
    %v1698 = vunpack.c.l.b16 %v288
    %v1699 = vunpack.c.h.b16 %v288
    %v1700 = vunpack.c.l.b16 %v289
    %v1701 = vunpack.c.h.b16 %v289
    %v1702 = vunpack.c.l.b16 %v290
    %v1703 = vunpack.c.h.b16 %v290
    %v1704 = vunpack.c.l.b16 %v291
    %v1705 = vunpack.c.h.b16 %v291
    %v1706 = vunpack.c.l.b16 %v292
    %v1707 = vunpack.c.h.b16 %v292
    %v1708 = vunpack.c.l.b16 %v293
    %v1709 = vunpack.c.h.b16 %v293
    %v1710 = vunpack.c.l.b16 %v294
    %v1711 = vunpack.c.h.b16 %v294
    %v1712 = vunpack.c.l.b16 %v295
    %v1713 = vunpack.c.h.b16 %v295
    %v1714 = vunpack.c.l.b16 %v296
    %v1715 = vunpack.c.h.b16 %v296
    %v1716 = vunpack.c.l.b16 %v297
    %v1717 = vunpack.c.h.b16 %v297
    %v1718 = vunpack.c.l.b16 %v298
    %v1719 = vunpack.c.h.b16 %v298
    %v1720 = vunpack.c.l.b16 %v299
    %v1721 = vunpack.c.h.b16 %v299
    %v1722 = vunpack.c.l.b16 %v300
    %v1723 = vunpack.c.h.b16 %v300
    %v1724 = vunpack.c.l.b16 %v301
    %v1725 = vunpack.c.h.b16 %v301
    %v1726 = vunpack.c.l.b16 %v302
    %v1727 = vunpack.c.h.b16 %v302
    %v1728 = vunpack.c.l.b16 %v303
    %v1729 = vunpack.c.h.b16 %v303
    %v1730 = vunpack.c.l.b16 %v304
    %v1731 = vunpack.c.h.b16 %v304
    %v1732 = vunpack.c.l.b16 %v305
    %v1733 = vunpack.c.h.b16 %v305
    %v1734 = vunpack.c.l.b16 %v306
    %v1735 = vunpack.c.h.b16 %v306
    %v1736 = vunpack.c.l.b16 %v307
    %v1737 = vunpack.c.h.b16 %v307
    %v1738 = vunpack.c.l.b16 %v308
    %v1739 = vunpack.c.h.b16 %v308
    %v1740 = vunpack.c.l.b16 %v309
    %v1741 = vunpack.c.h.b16 %v309
    %v1742 = vunpack.c.l.b16 %v310
    %v1743 = vunpack.c.h.b16 %v310
    %v1744 = vunpack.c.l.b16 %v311
    %v1745 = vunpack.c.h.b16 %v311
    %v1746 = vunpack.c.l.b16 %v312
    %v1747 = vunpack.c.h.b16 %v312
    %v1748 = vunpack.c.l.b16 %v313
    %v1749 = vunpack.c.h.b16 %v313
    %v1750 = vunpack.c.l.b16 %v314
    %v1751 = vunpack.c.h.b16 %v314
    %v1752 = vunpack.c.l.b16 %v315
    %v1753 = vunpack.c.h.b16 %v315
    %v1754 = vunpack.c.l.b16 %v316
    %v1755 = vunpack.c.h.b16 %v316
    %v1756 = vunpack.c.l.b16 %v317
    %v1757 = vunpack.c.h.b16 %v317
    %v1758 = vunpack.c.l.b16 %v318
    %v1759 = vunpack.c.h.b16 %v318
    %v1760 = vunpack.c.l.b16 %v319
    %v1761 = vunpack.c.h.b16 %v319
    %v1762 = vunpack.c.l.b16 %v320
    %v1763 = vunpack.c.h.b16 %v320
    %v1764 = vunpack.c.l.b16 %v321
    %v1765 = vunpack.c.h.b16 %v321
    %v1766 = vunpack.c.l.b16 %v322
    %v1767 = vunpack.c.h.b16 %v322
    %v1768 = vunpack.c.l.b16 %v323
    %v1769 = vunpack.c.h.b16 %v323
    %v1770 = vunpack.c.l.b16 %v324
    %v1771 = vunpack.c.h.b16 %v324
    %v1772 = vunpack.c.l.b16 %v325
    %v1773 = vunpack.c.h.b16 %v325
    %v1774 = vunpack.c.l.b16 %v326
    %v1775 = vunpack.c.h.b16 %v326
    %v1776 = vunpack.c.l.b16 %v327
    %v1777 = vunpack.c.h.b16 %v327
    %v1778 = vunpack.c.l.b16 %v328
    %v1779 = vunpack.c.h.b16 %v328
    %v1780 = vunpack.c.l.b16 %v329
    %v1781 = vunpack.c.h.b16 %v329
    %v1782 = vunpack.c.l.b16 %v330
    %v1783 = vunpack.c.h.b16 %v330
    %v1784 = vunpack.c.l.b16 %v331
    %v1785 = vunpack.c.h.b16 %v331
    %v1786 = vunpack.c.l.b16 %v332
    %v1787 = vunpack.c.h.b16 %v332
    %v1788 = vunpack.c.l.b16 %v333
    %v1789 = vunpack.c.h.b16 %v333
    %v1790 = vunpack.c.l.b16 %v334
    %v1791 = vunpack.c.h.b16 %v334
    %v1792 = vunpack.c.l.b16 %v335
    %v1793 = vunpack.c.h.b16 %v335
    %v1794 = vunpack.c.l.b16 %v336
    %v1795 = vunpack.c.h.b16 %v336
    %v1796 = vunpack.c.l.b16 %v337
    %v1797 = vunpack.c.h.b16 %v337
    %v1798 = vunpack.c.l.b16 %v338
    %v1799 = vunpack.c.h.b16 %v338
    %v1800 = vunpack.c.l.b16 %v339
    %v1801 = vunpack.c.h.b16 %v339
    %v1802 = vunpack.c.l.b16 %v340
    %v1803 = vunpack.c.h.b16 %v340
    %v1804 = vunpack.c.l.b16 %v341
    %v1805 = vunpack.c.h.b16 %v341
    %v1806 = vunpack.c.l.b16 %v342
    %v1807 = vunpack.c.h.b16 %v342
    %v1808 = vunpack.c.l.b16 %v343
    %v1809 = vunpack.c.h.b16 %v343
    %v1810 = vunpack.c.l.b16 %v344
    %v1811 = vunpack.c.h.b16 %v344
    %v1812 = vunpack.c.l.b16 %v345
    %v1813 = vunpack.c.h.b16 %v345
    %v1814 = vunpack.c.l.b16 %v346
    %v1815 = vunpack.c.h.b16 %v346
    %v1816 = vunpack.c.l.b16 %v347
    %v1817 = vunpack.c.h.b16 %v347
    %v1818 = vunpack.c.l.b16 %v348
    %v1819 = vunpack.c.h.b16 %v348
    %v1820 = vunpack.c.l.b16 %v349
    %v1821 = vunpack.c.h.b16 %v349
    %v1822 = vunpack.c.l.b16 %v350
    %v1823 = vunpack.c.h.b16 %v350
    %v1824 = vunpack.c.l.b16 %v351
    %v1825 = vunpack.c.h.b16 %v351
    %v1826 = vunpack.c.l.b16 %v352
    %v1827 = vunpack.c.h.b16 %v352
    %v1828 = vunpack.c.l.b16 %v353
    %v1829 = vunpack.c.h.b16 %v353
    %v1830 = vunpack.c.l.b16 %v354
    %v1831 = vunpack.c.h.b16 %v354
    %v1832 = vunpack.c.l.b16 %v355
    %v1833 = vunpack.c.h.b16 %v355
    %v1834 = vunpack.c.l.b16 %v356
    %v1835 = vunpack.c.h.b16 %v356
    %v1836 = vunpack.c.l.b16 %v357
    %v1837 = vunpack.c.h.b16 %v357
    %v1838 = vunpack.c.l.b16 %v358
    %v1839 = vunpack.c.h.b16 %v358
    %v1840 = vunpack.c.l.b16 %v359
    %v1841 = vunpack.c.h.b16 %v359
    %v1842 = vunpack.c.l.b16 %v360
    %v1843 = vunpack.c.h.b16 %v360
    %v1844 = vunpack.c.l.b16 %v361
    %v1845 = vunpack.c.h.b16 %v361
    %v1846 = vunpack.c.l.b16 %v362
    %v1847 = vunpack.c.h.b16 %v362
    %v1848 = vunpack.c.l.b16 %v363
    %v1849 = vunpack.c.h.b16 %v363
    %v1850 = vunpack.c.l.b16 %v364
    %v1851 = vunpack.c.h.b16 %v364
    %v1852 = vunpack.c.l.b16 %v365
    %v1853 = vunpack.c.h.b16 %v365
    %v1854 = vunpack.c.l.b16 %v366
    %v1855 = vunpack.c.h.b16 %v366
    %v1856 = vunpack.c.l.b16 %v367
    %v1857 = vunpack.c.h.b16 %v367
    %v1858 = vunpack.c.l.b16 %v368
    %v1859 = vunpack.c.h.b16 %v368
    %v1860 = vunpack.c.l.b16 %v369
    %v1861 = vunpack.c.h.b16 %v369
    %v1862 = vunpack.c.l.b16 %v370
    %v1863 = vunpack.c.h.b16 %v370
    %v1864 = vunpack.c.l.b16 %v371
    %v1865 = vunpack.c.h.b16 %v371
    %v1866 = vunpack.c.l.b16 %v372
    %v1867 = vunpack.c.h.b16 %v372
    %v1868 = vunpack.c.l.b16 %v373
    %v1869 = vunpack.c.h.b16 %v373
    %v1870 = vunpack.c.l.b16 %v374
    %v1871 = vunpack.c.h.b16 %v374
    %v1872 = vunpack.c.l.b16 %v375
    %v1873 = vunpack.c.h.b16 %v375
    %v1874 = vunpack.c.l.b16 %v376
    %v1875 = vunpack.c.h.b16 %v376
    %v1876 = vunpack.c.l.b16 %v377
    %v1877 = vunpack.c.h.b16 %v377
    %v1878 = vunpack.c.l.b16 %v378
    %v1879 = vunpack.c.h.b16 %v378
    %v1880 = vunpack.c.l.b16 %v379
    %v1881 = vunpack.c.h.b16 %v379
    %v1882 = vunpack.c.l.b16 %v380
    %v1883 = vunpack.c.h.b16 %v380
    %v1884 = vunpack.c.l.b16 %v381
    %v1885 = vunpack.c.h.b16 %v381
    %v1886 = vunpack.c.l.b16 %v382
    %v1887 = vunpack.c.h.b16 %v382
    %v1888 = vunpack.c.l.b16 %v383
    %v1889 = vunpack.c.h.b16 %v383
    %v1890 = vunpack.c.l.b16 %v384
    %v1891 = vunpack.c.h.b16 %v384
    %v1892 = vunpack.c.l.b16 %v385
    %v1893 = vunpack.c.h.b16 %v385
    %v1894 = vunpack.c.l.b16 %v386
    %v1895 = vunpack.c.h.b16 %v386
    %v1896 = vunpack.c.l.b16 %v387
    %v1897 = vunpack.c.h.b16 %v387
    %v1898 = vunpack.c.l.b16 %v388
    %v1899 = vunpack.c.h.b16 %v388
    %v1900 = vunpack.c.l.b16 %v389
    %v1901 = vunpack.c.h.b16 %v389
    %v1902 = vunpack.c.l.b16 %v390
    %v1903 = vunpack.c.h.b16 %v390
    %v1904 = vunpack.c.l.b16 %v391
    %v1905 = vunpack.c.h.b16 %v391
    %v1906 = vunpack.c.l.b16 %v392
    %v1907 = vunpack.c.h.b16 %v392
    %v1908 = vunpack.c.l.b16 %v393
    %v1909 = vunpack.c.h.b16 %v393
    %v1910 = vunpack.c.l.b16 %v394
    %v1911 = vunpack.c.h.b16 %v394
    %v1912 = vunpack.c.l.b16 %v395
    %v1913 = vunpack.c.h.b16 %v395
    %v1914 = vunpack.c.l.b16 %v396
    %v1915 = vunpack.c.h.b16 %v396
    %v1916 = vunpack.c.l.b16 %v397
    %v1917 = vunpack.c.h.b16 %v397
    %v1918 = vunpack.c.l.b16 %v398
    %v1919 = vunpack.c.h.b16 %v398
    %v1920 = vunpack.c.l.b16 %v399
    %v1921 = vunpack.c.h.b16 %v399
    %v1922 = vunpack.c.l.b16 %v400
    %v1923 = vunpack.c.h.b16 %v400
    %v1924 = vunpack.c.l.b16 %v401
    %v1925 = vunpack.c.h.b16 %v401
    %v1926 = vunpack.c.l.b16 %v402
    %v1927 = vunpack.c.h.b16 %v402
    %v1928 = vunpack.c.l.b16 %v403
    %v1929 = vunpack.c.h.b16 %v403
    %v1930 = vunpack.c.l.b16 %v404
    %v1931 = vunpack.c.h.b16 %v404
    %v1932 = vunpack.c.l.b16 %v405
    %v1933 = vunpack.c.h.b16 %v405
    %v1934 = vunpack.c.l.b16 %v406
    %v1935 = vunpack.c.h.b16 %v406
    %v1936 = vunpack.c.l.b16 %v407
    %v1937 = vunpack.c.h.b16 %v407
    %v1938 = vunpack.c.l.b16 %v408
    %v1939 = vunpack.c.h.b16 %v408
    %v1940 = vunpack.c.l.b16 %v409
    %v1941 = vunpack.c.h.b16 %v409
    %v1942 = vunpack.c.l.b16 %v410
    %v1943 = vunpack.c.h.b16 %v410
    %v1944 = vunpack.c.l.b16 %v411
    %v1945 = vunpack.c.h.b16 %v411
    %v1946 = vunpack.c.l.b16 %v412
    %v1947 = vunpack.c.h.b16 %v412
    %v1948 = vunpack.c.l.b16 %v413
    %v1949 = vunpack.c.h.b16 %v413
    %v1950 = vunpack.c.l.b16 %v414
    %v1951 = vunpack.c.h.b16 %v414
    %v1952 = vunpack.c.l.b16 %v415
    %v1953 = vunpack.c.h.b16 %v415
    %v1954 = vunpack.c.l.b16 %v416
    %v1955 = vunpack.c.h.b16 %v416
    %v1956 = vunpack.c.l.b16 %v417
    %v1957 = vunpack.c.h.b16 %v417
    %v1958 = vunpack.c.l.b16 %v418
    %v1959 = vunpack.c.h.b16 %v418
    %v1960 = vunpack.c.l.b16 %v419
    %v1961 = vunpack.c.h.b16 %v419
    %v1962 = vunpack.c.l.b16 %v420
    %v1963 = vunpack.c.h.b16 %v420
    %v1964 = vunpack.c.l.b16 %v421
    %v1965 = vunpack.c.h.b16 %v421
    %v1966 = vunpack.c.l.b16 %v422
    %v1967 = vunpack.c.h.b16 %v422
    %v1968 = vunpack.c.l.b16 %v423
    %v1969 = vunpack.c.h.b16 %v423
    %v1970 = vunpack.c.l.b16 %v424
    %v1971 = vunpack.c.h.b16 %v424
    %v1972 = vunpack.c.l.b16 %v425
    %v1973 = vunpack.c.h.b16 %v425
    %v1974 = vunpack.c.l.b16 %v426
    %v1975 = vunpack.c.h.b16 %v426
    %v1976 = vunpack.c.l.b16 %v427
    %v1977 = vunpack.c.h.b16 %v427
    %v1978 = vunpack.c.l.b16 %v428
    %v1979 = vunpack.c.h.b16 %v428
    %v1980 = vunpack.c.l.b16 %v429
    %v1981 = vunpack.c.h.b16 %v429
    %v1982 = vunpack.c.l.b16 %v430
    %v1983 = vunpack.c.h.b16 %v430
    %v1984 = vunpack.c.l.b16 %v431
    %v1985 = vunpack.c.h.b16 %v431
    %v1986 = vunpack.c.l.b16 %v432
    %v1987 = vunpack.c.h.b16 %v432
    %v1988 = vunpack.c.l.b16 %v433
    %v1989 = vunpack.c.h.b16 %v433
    %v1990 = vunpack.c.l.b16 %v434
    %v1991 = vunpack.c.h.b16 %v434
    %v1992 = vunpack.c.l.b16 %v435
    %v1993 = vunpack.c.h.b16 %v435
    %v1994 = vunpack.c.l.b16 %v436
    %v1995 = vunpack.c.h.b16 %v436
    %v1996 = vunpack.c.l.b16 %v437
    %v1997 = vunpack.c.h.b16 %v437
    %v1998 = vunpack.c.l.b16 %v438
    %v1999 = vunpack.c.h.b16 %v438
    %v2000 = vunpack.c.l.b16 %v439
    %v2001 = vunpack.c.h.b16 %v439
    %v2002 = vunpack.c.l.b16 %v440
    %v2003 = vunpack.c.h.b16 %v440
    %v2004 = vunpack.c.l.b16 %v441
    %v2005 = vunpack.c.h.b16 %v441
    %v2006 = vunpack.c.l.b16 %v442
    %v2007 = vunpack.c.h.b16 %v442
    %v2008 = vunpack.c.l.b16 %v443
    %v2009 = vunpack.c.h.b16 %v443
    %v2010 = vunpack.c.l.b16 %v444
    %v2011 = vunpack.c.h.b16 %v444
    %v2012 = vunpack.c.l.b16 %v445
    %v2013 = vunpack.c.h.b16 %v445
    %v2014 = vunpack.c.l.b16 %v446
    %v2015 = vunpack.c.h.b16 %v446
    %v2016 = vunpack.c.l.b16 %v447
    %v2017 = vunpack.c.h.b16 %v447
    %v2018 = vunpack.c.l.b16 %v448
    %v2019 = vunpack.c.h.b16 %v448
    %v2020 = vunpack.c.l.b16 %v449
    %v2021 = vunpack.c.h.b16 %v449
    %v2022 = vunpack.c.l.b16 %v450
    %v2023 = vunpack.c.h.b16 %v450
    %v2024 = vunpack.c.l.b16 %v451
    %v2025 = vunpack.c.h.b16 %v451
    %v2026 = vunpack.c.l.b16 %v452
    %v2027 = vunpack.c.h.b16 %v452
    %v2028 = vunpack.c.l.b16 %v453
    %v2029 = vunpack.c.h.b16 %v453
    %v2030 = vunpack.c.l.b16 %v454
    %v2031 = vunpack.c.h.b16 %v454
    %v2032 = vunpack.c.l.b16 %v455
    %v2033 = vunpack.c.h.b16 %v455
    %v2034 = vunpack.c.l.b16 %v456
    %v2035 = vunpack.c.h.b16 %v456
    %v2036 = vunpack.c.l.b16 %v457
    %v2037 = vunpack.c.h.b16 %v457
    %v2038 = vunpack.c.l.b16 %v458
    %v2039 = vunpack.c.h.b16 %v458
    %v2040 = vunpack.c.l.b16 %v459
    %v2041 = vunpack.c.h.b16 %v459
    %v2042 = vunpack.c.l.b16 %v460
    %v2043 = vunpack.c.h.b16 %v460
    %v2044 = vunpack.c.l.b16 %v461
    %v2045 = vunpack.c.h.b16 %v461
    %v2046 = vunpack.c.l.b16 %v462
    %v2047 = vunpack.c.h.b16 %v462
    %v2048 = vunpack.c.l.b16 %v463
    %v2049 = vunpack.c.h.b16 %v463
    %v2050 = vunpack.c.l.b16 %v464
    %v2051 = vunpack.c.h.b16 %v464
    %v2052 = vunpack.c.l.b16 %v465
    %v2053 = vunpack.c.h.b16 %v465
    %v2054 = vunpack.c.l.b16 %v466
    %v2055 = vunpack.c.h.b16 %v466
    %v2056 = vunpack.c.l.b16 %v467
    %v2057 = vunpack.c.h.b16 %v467
    %v2058 = vunpack.c.l.b16 %v468
    %v2059 = vunpack.c.h.b16 %v468
    %v2060 = vunpack.c.l.b16 %v469
    %v2061 = vunpack.c.h.b16 %v469
    %v2062 = vunpack.c.l.b16 %v470
    %v2063 = vunpack.c.h.b16 %v470
    %v2064 = vunpack.c.l.b16 %v471
    %v2065 = vunpack.c.h.b16 %v471
    %v2066 = vunpack.c.l.b16 %v472
    %v2067 = vunpack.c.h.b16 %v472
    %v2068 = vunpack.c.l.b16 %v473
    %v2069 = vunpack.c.h.b16 %v473
    %v2070 = vunpack.c.l.b16 %v474
    %v2071 = vunpack.c.h.b16 %v474
    %v2072 = vunpack.c.l.b16 %v475
    %v2073 = vunpack.c.h.b16 %v475
    %v2074 = vunpack.c.l.b16 %v476
    %v2075 = vunpack.c.h.b16 %v476
    %v2076 = vunpack.c.l.b16 %v477
    %v2077 = vunpack.c.h.b16 %v477
    %v2078 = vunpack.c.l.b16 %v478
    %v2079 = vunpack.c.h.b16 %v478
    %v2080 = vunpack.c.l.b16 %v479
    %v2081 = vunpack.c.h.b16 %v479
    %v2082 = vunpack.c.l.b16 %v480
    %v2083 = vunpack.c.h.b16 %v480
    %v2084 = vunpack.c.l.b16 %v481
    %v2085 = vunpack.c.h.b16 %v481
    %v2086 = vunpack.c.l.b16 %v482
    %v2087 = vunpack.c.h.b16 %v482
    %v2088 = vunpack.c.l.b16 %v483
    %v2089 = vunpack.c.h.b16 %v483
    %v2090 = vunpack.c.l.b16 %v484
    %v2091 = vunpack.c.h.b16 %v484
    %v2092 = vunpack.c.l.b16 %v485
    %v2093 = vunpack.c.h.b16 %v485
    %v2094 = vunpack.c.l.b16 %v486
    %v2095 = vunpack.c.h.b16 %v486
    %v2096 = vunpack.c.l.b16 %v487
    %v2097 = vunpack.c.h.b16 %v487
    %v2098 = vunpack.c.l.b16 %v488
    %v2099 = vunpack.c.h.b16 %v488
    %v2100 = vunpack.c.l.b16 %v489
    %v2101 = vunpack.c.h.b16 %v489
    %v2102 = vunpack.c.l.b16 %v490
    %v2103 = vunpack.c.h.b16 %v490
    %v2104 = vunpack.c.l.b16 %v491
    %v2105 = vunpack.c.h.b16 %v491
    %v2106 = vunpack.c.l.b16 %v492
    %v2107 = vunpack.c.h.b16 %v492
    %v2108 = vunpack.c.l.b16 %v493
    %v2109 = vunpack.c.h.b16 %v493
    %v2110 = vunpack.c.l.b16 %v494
    %v2111 = vunpack.c.h.b16 %v494
    %v2112 = vunpack.c.l.b16 %v495
    %v2113 = vunpack.c.h.b16 %v495
    %v2114 = vunpack.c.l.b16 %v496
    %v2115 = vunpack.c.h.b16 %v496
    %v2116 = vunpack.c.l.b16 %v497
    %v2117 = vunpack.c.h.b16 %v497
    %v2118 = vunpack.c.l.b16 %v498
    %v2119 = vunpack.c.h.b16 %v498
    %v2120 = vunpack.c.l.b16 %v499
    %v2121 = vunpack.c.h.b16 %v499
    %v2122 = vunpack.c.l.b16 %v500
    %v2123 = vunpack.c.h.b16 %v500
    %v2124 = vunpack.c.l.b16 %v501
    %v2125 = vunpack.c.h.b16 %v501
    %v2126 = vunpack.c.l.b16 %v502
    %v2127 = vunpack.c.h.b16 %v502
    %v2128 = vunpack.c.l.b16 %v503
    %v2129 = vunpack.c.h.b16 %v503
    %v2130 = vunpack.c.l.b16 %v504
    %v2131 = vunpack.c.h.b16 %v504
    %v2132 = vunpack.c.l.b16 %v505
    %v2133 = vunpack.c.h.b16 %v505
    %v2134 = vunpack.c.l.b16 %v506
    %v2135 = vunpack.c.h.b16 %v506
    %v2136 = vunpack.c.l.b16 %v507
    %v2137 = vunpack.c.h.b16 %v507
    %v2138 = vunpack.c.l.b16 %v508
    %v2139 = vunpack.c.h.b16 %v508
    %v2140 = vunpack.c.l.b16 %v509
    %v2141 = vunpack.c.h.b16 %v509
    %v2142 = vunpack.c.l.b16 %v510
    %v2143 = vunpack.c.h.b16 %v510
    %v2144 = vunpack.c.l.b16 %v511
    %v2145 = vunpack.c.h.b16 %v511
    %v2146 = vunpack.c.l.b16 %v512
    %v2147 = vunpack.c.h.b16 %v512
    %v2148 = vunpack.c.l.b16 %v513
    %v2149 = vunpack.c.h.b16 %v513
    %v2150 = vunpack.c.l.b16 %v514
    %v2151 = vunpack.c.h.b16 %v514
    %v2152 = vunpack.c.l.b16 %v515
    %v2153 = vunpack.c.h.b16 %v515
    %v2154 = vunpack.c.l.b16 %v516
    %v2155 = vunpack.c.h.b16 %v516
    %v2156 = vunpack.c.l.b16 %v517
    %v2157 = vunpack.c.h.b16 %v517
    %v2158 = vunpack.c.l.b16 %v518
    %v2159 = vunpack.c.h.b16 %v518
    %v2160 = vunpack.c.l.b16 %v519
    %v2161 = vunpack.c.h.b16 %v519
    %v2162 = vunpack.c.l.b16 %v520
    %v2163 = vunpack.c.h.b16 %v520
    %v2164 = vunpack.c.l.b16 %v521
    %v2165 = vunpack.c.h.b16 %v521
    %v2166 = vunpack.c.l.b16 %v522
    %v2167 = vunpack.c.h.b16 %v522
    %v2168 = vunpack.c.l.b16 %v523
    %v2169 = vunpack.c.h.b16 %v523
    %v2170 = vunpack.c.l.b16 %v524
    %v2171 = vunpack.c.h.b16 %v524
    %v2172 = vunpack.c.l.b16 %v525
    %v2173 = vunpack.c.h.b16 %v525
    %v2174 = vunpack.c.l.b16 %v526
    %v2175 = vunpack.c.h.b16 %v526
    %v2176 = vunpack.c.l.b16 %v527
    %v2177 = vunpack.c.h.b16 %v527
    %v2178 = vunpack.c.l.b16 %v528
    %v2179 = vunpack.c.h.b16 %v528
    %v2180 = vunpack.c.l.b16 %v529
    %v2181 = vunpack.c.h.b16 %v529
    %v2182 = vunpack.c.l.b16 %v530
    %v2183 = vunpack.c.h.b16 %v530
    %v2184 = vunpack.c.l.b16 %v531
    %v2185 = vunpack.c.h.b16 %v531
    %v2186 = vunpack.c.l.b16 %v532
    %v2187 = vunpack.c.h.b16 %v532
    %v2188 = vunpack.c.l.b16 %v533
    %v2189 = vunpack.c.h.b16 %v533
    %v2190 = vunpack.c.l.b16 %v534
    %v2191 = vunpack.c.h.b16 %v534
    %v2192 = vunpack.c.l.b16 %v535
    %v2193 = vunpack.c.h.b16 %v535
    %v2194 = vunpack.c.l.b16 %v536
    %v2195 = vunpack.c.h.b16 %v536
    %v2196 = vunpack.c.l.b16 %v537
    %v2197 = vunpack.c.h.b16 %v537
    %v2198 = vunpack.c.l.b16 %v538
    %v2199 = vunpack.c.h.b16 %v538
    %v2200 = vunpack.c.l.b16 %v539
    %v2201 = vunpack.c.h.b16 %v539
    %v2202 = vunpack.c.l.b16 %v540
    %v2203 = vunpack.c.h.b16 %v540
    %v2204 = vunpack.c.l.b16 %v541
    %v2205 = vunpack.c.h.b16 %v541
    %v2206 = vunpack.c.l.b16 %v542
    %v2207 = vunpack.c.h.b16 %v542
    %v2208 = vunpack.c.l.b16 %v543
    %v2209 = vunpack.c.h.b16 %v543
    %v2210 = vunpack.c.l.b16 %v544
    %v2211 = vunpack.c.h.b16 %v544
    %v2212 = vunpack.c.l.b16 %v545
    %v2213 = vunpack.c.h.b16 %v545
    %v2214 = vunpack.c.l.b16 %v546
    %v2215 = vunpack.c.h.b16 %v546
    %v2216 = vunpack.c.l.b16 %v547
    %v2217 = vunpack.c.h.b16 %v547
    %v2218 = vunpack.c.l.b16 %v548
    %v2219 = vunpack.c.h.b16 %v548
    %v2220 = vunpack.c.l.b16 %v549
    %v2221 = vunpack.c.h.b16 %v549
    %v2222 = vunpack.c.l.b16 %v550
    %v2223 = vunpack.c.h.b16 %v550
    %v2224 = vunpack.c.l.b16 %v551
    %v2225 = vunpack.c.h.b16 %v551
    %v2226 = vpack.c.b16 %v1466, %v1458
    %v2227 = vpack.c.b16 %v1467, %v1459
    %v2228 = vpack.c.b16 %v1468, %v1460
    %v2229 = vpack.c.b16 %v1469, %v1461
    %v2230 = vpack.c.b16 %v1470, %v1462
    %v2231 = vpack.c.b16 %v1471, %v1463
    %v2232 = vpack.c.b16 %v1472, %v1464
    %v2233 = vpack.c.b16 %v1473, %v1465
    %v2234 = vpack.c.b16 %v1482, %v1474
    %v2235 = vpack.c.b16 %v1483, %v1475
    %v2236 = vpack.c.b16 %v1484, %v1476
    %v2237 = vpack.c.b16 %v1485, %v1477
    %v2238 = vpack.c.b16 %v1486, %v1478
    %v2239 = vpack.c.b16 %v1487, %v1479
    %v2240 = vpack.c.b16 %v1488, %v1480
    %v2241 = vpack.c.b16 %v1489, %v1481
    %v2242 = vpack.c.b16 %v1498, %v1490
    %v2243 = vpack.c.b16 %v1499, %v1491
    %v2244 = vpack.c.b16 %v1500, %v1492
    %v2245 = vpack.c.b16 %v1501, %v1493
    %v2246 = vpack.c.b16 %v1502, %v1494
    %v2247 = vpack.c.b16 %v1503, %v1495
    %v2248 = vpack.c.b16 %v1504, %v1496
    %v2249 = vpack.c.b16 %v1505, %v1497
    %v2250 = vpack.c.b16 %v1514, %v1506
    %v2251 = vpack.c.b16 %v1515, %v1507
    %v2252 = vpack.c.b16 %v1516, %v1508
    %v2253 = vpack.c.b16 %v1517, %v1509
    %v2254 = vpack.c.b16 %v1518, %v1510
    %v2255 = vpack.c.b16 %v1519, %v1511
    %v2256 = vpack.c.b16 %v1520, %v1512
    %v2257 = vpack.c.b16 %v1521, %v1513
    %v2258 = vpack.c.b16 %v1530, %v1522
    %v2259 = vpack.c.b16 %v1531, %v1523
    %v2260 = vpack.c.b16 %v1532, %v1524
    %v2261 = vpack.c.b16 %v1533, %v1525
    %v2262 = vpack.c.b16 %v1534, %v1526
    %v2263 = vpack.c.b16 %v1535, %v1527
    %v2264 = vpack.c.b16 %v1536, %v1528
    %v2265 = vpack.c.b16 %v1537, %v1529
    %v2266 = vpack.c.b16 %v1546, %v1538
    %v2267 = vpack.c.b16 %v1547, %v1539
    %v2268 = vpack.c.b16 %v1548, %v1540
    %v2269 = vpack.c.b16 %v1549, %v1541
    %v2270 = vpack.c.b16 %v1550, %v1542
    %v2271 = vpack.c.b16 %v1551, %v1543
    %v2272 = vpack.c.b16 %v1552, %v1544
    %v2273 = vpack.c.b16 %v1553, %v1545
    %v2274 = vpack.c.b16 %v1562, %v1554
    %v2275 = vpack.c.b16 %v1563, %v1555
    %v2276 = vpack.c.b16 %v1564, %v1556
    %v2277 = vpack.c.b16 %v1565, %v1557
    %v2278 = vpack.c.b16 %v1566, %v1558
    %v2279 = vpack.c.b16 %v1567, %v1559
    %v2280 = vpack.c.b16 %v1568, %v1560
    %v2281 = vpack.c.b16 %v1569, %v1561
    %v2282 = vpack.c.b16 %v1578, %v1570
    %v2283 = vpack.c.b16 %v1579, %v1571
    %v2284 = vpack.c.b16 %v1580, %v1572
    %v2285 = vpack.c.b16 %v1581, %v1573
    %v2286 = vpack.c.b16 %v1582, %v1574
    %v2287 = vpack.c.b16 %v1583, %v1575
    %v2288 = vpack.c.b16 %v1584, %v1576
    %v2289 = vpack.c.b16 %v1585, %v1577
    %v2290 = vpack.c.b16 %v1594, %v1586
    %v2291 = vpack.c.b16 %v1595, %v1587
    %v2292 = vpack.c.b16 %v1596, %v1588
    %v2293 = vpack.c.b16 %v1597, %v1589
    %v2294 = vpack.c.b16 %v1598, %v1590
    %v2295 = vpack.c.b16 %v1599, %v1591
    %v2296 = vpack.c.b16 %v1600, %v1592
    %v2297 = vpack.c.b16 %v1601, %v1593
    %v2298 = vpack.c.b16 %v1610, %v1602
    %v2299 = vpack.c.b16 %v1611, %v1603
    %v2300 = vpack.c.b16 %v1612, %v1604
    %v2301 = vpack.c.b16 %v1613, %v1605
    %v2302 = vpack.c.b16 %v1614, %v1606
    %v2303 = vpack.c.b16 %v1615, %v1607
    %v2304 = vpack.c.b16 %v1616, %v1608
    %v2305 = vpack.c.b16 %v1617, %v1609
    %v2306 = vpack.c.b16 %v1626, %v1618
    %v2307 = vpack.c.b16 %v1627, %v1619
    %v2308 = vpack.c.b16 %v1628, %v1620
    %v2309 = vpack.c.b16 %v1629, %v1621
    %v2310 = vpack.c.b16 %v1630, %v1622
    %v2311 = vpack.c.b16 %v1631, %v1623
    %v2312 = vpack.c.b16 %v1632, %v1624
    %v2313 = vpack.c.b16 %v1633, %v1625
    %v2314 = vpack.c.b16 %v1642, %v1634
    %v2315 = vpack.c.b16 %v1643, %v1635
    %v2316 = vpack.c.b16 %v1644, %v1636
    %v2317 = vpack.c.b16 %v1645, %v1637
    %v2318 = vpack.c.b16 %v1646, %v1638
    %v2319 = vpack.c.b16 %v1647, %v1639
    %v2320 = vpack.c.b16 %v1648, %v1640
    %v2321 = vpack.c.b16 %v1649, %v1641
    %v2322 = vpack.c.b16 %v1658, %v1650
    %v2323 = vpack.c.b16 %v1659, %v1651
    %v2324 = vpack.c.b16 %v1660, %v1652
    %v2325 = vpack.c.b16 %v1661, %v1653
    %v2326 = vpack.c.b16 %v1662, %v1654
    %v2327 = vpack.c.b16 %v1663, %v1655
    %v2328 = vpack.c.b16 %v1664, %v1656
    %v2329 = vpack.c.b16 %v1665, %v1657
    %v2330 = vpack.c.b16 %v1674, %v1666
    %v2331 = vpack.c.b16 %v1675, %v1667
    %v2332 = vpack.c.b16 %v1676, %v1668
    %v2333 = vpack.c.b16 %v1677, %v1669
    %v2334 = vpack.c.b16 %v1678, %v1670
    %v2335 = vpack.c.b16 %v1679, %v1671
    %v2336 = vpack.c.b16 %v1680, %v1672
    %v2337 = vpack.c.b16 %v1681, %v1673
    %v2338 = vpack.c.b16 %v1690, %v1682
    %v2339 = vpack.c.b16 %v1691, %v1683
    %v2340 = vpack.c.b16 %v1692, %v1684
    %v2341 = vpack.c.b16 %v1693, %v1685
    %v2342 = vpack.c.b16 %v1694, %v1686
    %v2343 = vpack.c.b16 %v1695, %v1687
    %v2344 = vpack.c.b16 %v1696, %v1688
    %v2345 = vpack.c.b16 %v1697, %v1689
    %v2346 = vpack.c.b16 %v1706, %v1698
    %v2347 = vpack.c.b16 %v1707, %v1699
    %v2348 = vpack.c.b16 %v1708, %v1700
    %v2349 = vpack.c.b16 %v1709, %v1701
    %v2350 = vpack.c.b16 %v1710, %v1702
    %v2351 = vpack.c.b16 %v1711, %v1703
    %v2352 = vpack.c.b16 %v1712, %v1704
    %v2353 = vpack.c.b16 %v1713, %v1705
    %v2354 = vpack.c.b16 %v1722, %v1714
    %v2355 = vpack.c.b16 %v1723, %v1715
    %v2356 = vpack.c.b16 %v1724, %v1716
    %v2357 = vpack.c.b16 %v1725, %v1717
    %v2358 = vpack.c.b16 %v1726, %v1718
    %v2359 = vpack.c.b16 %v1727, %v1719
    %v2360 = vpack.c.b16 %v1728, %v1720
    %v2361 = vpack.c.b16 %v1729, %v1721
    %v2362 = vpack.c.b16 %v1738, %v1730
    %v2363 = vpack.c.b16 %v1739, %v1731
    %v2364 = vpack.c.b16 %v1740, %v1732
    %v2365 = vpack.c.b16 %v1741, %v1733
    %v2366 = vpack.c.b16 %v1742, %v1734
    %v2367 = vpack.c.b16 %v1743, %v1735
    %v2368 = vpack.c.b16 %v1744, %v1736
    %v2369 = vpack.c.b16 %v1745, %v1737
    %v2370 = vpack.c.b16 %v1754, %v1746
    %v2371 = vpack.c.b16 %v1755, %v1747
    %v2372 = vpack.c.b16 %v1756, %v1748
    %v2373 = vpack.c.b16 %v1757, %v1749
    %v2374 = vpack.c.b16 %v1758, %v1750
    %v2375 = vpack.c.b16 %v1759, %v1751
    %v2376 = vpack.c.b16 %v1760, %v1752
    %v2377 = vpack.c.b16 %v1761, %v1753
    %v2378 = vpack.c.b16 %v1770, %v1762
    %v2379 = vpack.c.b16 %v1771, %v1763
    %v2380 = vpack.c.b16 %v1772, %v1764
    %v2381 = vpack.c.b16 %v1773, %v1765
    %v2382 = vpack.c.b16 %v1774, %v1766
    %v2383 = vpack.c.b16 %v1775, %v1767
    %v2384 = vpack.c.b16 %v1776, %v1768
    %v2385 = vpack.c.b16 %v1777, %v1769
    %v2386 = vpack.c.b16 %v1786, %v1778
    %v2387 = vpack.c.b16 %v1787, %v1779
    %v2388 = vpack.c.b16 %v1788, %v1780
    %v2389 = vpack.c.b16 %v1789, %v1781
    %v2390 = vpack.c.b16 %v1790, %v1782
    %v2391 = vpack.c.b16 %v1791, %v1783
    %v2392 = vpack.c.b16 %v1792, %v1784
    %v2393 = vpack.c.b16 %v1793, %v1785
    %v2394 = vpack.c.b16 %v1802, %v1794
    %v2395 = vpack.c.b16 %v1803, %v1795
    %v2396 = vpack.c.b16 %v1804, %v1796
    %v2397 = vpack.c.b16 %v1805, %v1797
    %v2398 = vpack.c.b16 %v1806, %v1798
    %v2399 = vpack.c.b16 %v1807, %v1799
    %v2400 = vpack.c.b16 %v1808, %v1800
    %v2401 = vpack.c.b16 %v1809, %v1801
    %v2402 = vpack.c.b16 %v1818, %v1810
    %v2403 = vpack.c.b16 %v1819, %v1811
    %v2404 = vpack.c.b16 %v1820, %v1812
    %v2405 = vpack.c.b16 %v1821, %v1813
    %v2406 = vpack.c.b16 %v1822, %v1814
    %v2407 = vpack.c.b16 %v1823, %v1815
    %v2408 = vpack.c.b16 %v1824, %v1816
    %v2409 = vpack.c.b16 %v1825, %v1817
    %v2410 = vpack.c.b16 %v1834, %v1826
    %v2411 = vpack.c.b16 %v1835, %v1827
    %v2412 = vpack.c.b16 %v1836, %v1828
    %v2413 = vpack.c.b16 %v1837, %v1829
    %v2414 = vpack.c.b16 %v1838, %v1830
    %v2415 = vpack.c.b16 %v1839, %v1831
    %v2416 = vpack.c.b16 %v1840, %v1832
    %v2417 = vpack.c.b16 %v1841, %v1833
    %v2418 = vpack.c.b16 %v1850, %v1842
    %v2419 = vpack.c.b16 %v1851, %v1843
    %v2420 = vpack.c.b16 %v1852, %v1844
    %v2421 = vpack.c.b16 %v1853, %v1845
    %v2422 = vpack.c.b16 %v1854, %v1846
    %v2423 = vpack.c.b16 %v1855, %v1847
    %v2424 = vpack.c.b16 %v1856, %v1848
    %v2425 = vpack.c.b16 %v1857, %v1849
    %v2426 = vpack.c.b16 %v1866, %v1858
    %v2427 = vpack.c.b16 %v1867, %v1859
    %v2428 = vpack.c.b16 %v1868, %v1860
    %v2429 = vpack.c.b16 %v1869, %v1861
    %v2430 = vpack.c.b16 %v1870, %v1862
    %v2431 = vpack.c.b16 %v1871, %v1863
    %v2432 = vpack.c.b16 %v1872, %v1864
    %v2433 = vpack.c.b16 %v1873, %v1865
    %v2434 = vpack.c.b16 %v1882, %v1874
    %v2435 = vpack.c.b16 %v1883, %v1875
    %v2436 = vpack.c.b16 %v1884, %v1876
    %v2437 = vpack.c.b16 %v1885, %v1877
    %v2438 = vpack.c.b16 %v1886, %v1878
    %v2439 = vpack.c.b16 %v1887, %v1879
    %v2440 = vpack.c.b16 %v1888, %v1880
    %v2441 = vpack.c.b16 %v1889, %v1881
    %v2442 = vpack.c.b16 %v1898, %v1890
    %v2443 = vpack.c.b16 %v1899, %v1891
    %v2444 = vpack.c.b16 %v1900, %v1892
    %v2445 = vpack.c.b16 %v1901, %v1893
    %v2446 = vpack.c.b16 %v1902, %v1894
    %v2447 = vpack.c.b16 %v1903, %v1895
    %v2448 = vpack.c.b16 %v1904, %v1896
    %v2449 = vpack.c.b16 %v1905, %v1897
    %v2450 = vpack.c.b16 %v1914, %v1906
    %v2451 = vpack.c.b16 %v1915, %v1907
    %v2452 = vpack.c.b16 %v1916, %v1908
    %v2453 = vpack.c.b16 %v1917, %v1909
    %v2454 = vpack.c.b16 %v1918, %v1910
    %v2455 = vpack.c.b16 %v1919, %v1911
    %v2456 = vpack.c.b16 %v1920, %v1912
    %v2457 = vpack.c.b16 %v1921, %v1913
    %v2458 = vpack.c.b16 %v1930, %v1922
    %v2459 = vpack.c.b16 %v1931, %v1923
    %v2460 = vpack.c.b16 %v1932, %v1924
    %v2461 = vpack.c.b16 %v1933, %v1925
    %v2462 = vpack.c.b16 %v1934, %v1926
    %v2463 = vpack.c.b16 %v1935, %v1927
    %v2464 = vpack.c.b16 %v1936, %v1928
    %v2465 = vpack.c.b16 %v1937, %v1929
    %v2466 = vpack.c.b16 %v1946, %v1938
    %v2467 = vpack.c.b16 %v1947, %v1939
    %v2468 = vpack.c.b16 %v1948, %v1940
    %v2469 = vpack.c.b16 %v1949, %v1941
    %v2470 = vpack.c.b16 %v1950, %v1942
    %v2471 = vpack.c.b16 %v1951, %v1943
    %v2472 = vpack.c.b16 %v1952, %v1944
    %v2473 = vpack.c.b16 %v1953, %v1945
    %v2474 = vpack.c.b16 %v1962, %v1954
    %v2475 = vpack.c.b16 %v1963, %v1955
    %v2476 = vpack.c.b16 %v1964, %v1956
    %v2477 = vpack.c.b16 %v1965, %v1957
    %v2478 = vpack.c.b16 %v1966, %v1958
    %v2479 = vpack.c.b16 %v1967, %v1959
    %v2480 = vpack.c.b16 %v1968, %v1960
    %v2481 = vpack.c.b16 %v1969, %v1961
    %v2482 = vpack.c.b16 %v1978, %v1970
    %v2483 = vpack.c.b16 %v1979, %v1971
    %v2484 = vpack.c.b16 %v1980, %v1972
    %v2485 = vpack.c.b16 %v1981, %v1973
    %v2486 = vpack.c.b16 %v1982, %v1974
    %v2487 = vpack.c.b16 %v1983, %v1975
    %v2488 = vpack.c.b16 %v1984, %v1976
    %v2489 = vpack.c.b16 %v1985, %v1977
    %v2490 = vpack.c.b16 %v1994, %v1986
    %v2491 = vpack.c.b16 %v1995, %v1987
    %v2492 = vpack.c.b16 %v1996, %v1988
    %v2493 = vpack.c.b16 %v1997, %v1989
    %v2494 = vpack.c.b16 %v1998, %v1990
    %v2495 = vpack.c.b16 %v1999, %v1991
    %v2496 = vpack.c.b16 %v2000, %v1992
    %v2497 = vpack.c.b16 %v2001, %v1993
    %v2498 = vpack.c.b16 %v2010, %v2002
    %v2499 = vpack.c.b16 %v2011, %v2003
    %v2500 = vpack.c.b16 %v2012, %v2004
    %v2501 = vpack.c.b16 %v2013, %v2005
    %v2502 = vpack.c.b16 %v2014, %v2006
    %v2503 = vpack.c.b16 %v2015, %v2007
    %v2504 = vpack.c.b16 %v2016, %v2008
    %v2505 = vpack.c.b16 %v2017, %v2009
    %v2506 = vpack.c.b16 %v2026, %v2018
    %v2507 = vpack.c.b16 %v2027, %v2019
    %v2508 = vpack.c.b16 %v2028, %v2020
    %v2509 = vpack.c.b16 %v2029, %v2021
    %v2510 = vpack.c.b16 %v2030, %v2022
    %v2511 = vpack.c.b16 %v2031, %v2023
    %v2512 = vpack.c.b16 %v2032, %v2024
    %v2513 = vpack.c.b16 %v2033, %v2025
    %v2514 = vpack.c.b16 %v2042, %v2034
    %v2515 = vpack.c.b16 %v2043, %v2035
    %v2516 = vpack.c.b16 %v2044, %v2036
    %v2517 = vpack.c.b16 %v2045, %v2037
    %v2518 = vpack.c.b16 %v2046, %v2038
    %v2519 = vpack.c.b16 %v2047, %v2039
    %v2520 = vpack.c.b16 %v2048, %v2040
    %v2521 = vpack.c.b16 %v2049, %v2041
    %v2522 = vpack.c.b16 %v2058, %v2050
    %v2523 = vpack.c.b16 %v2059, %v2051
    %v2524 = vpack.c.b16 %v2060, %v2052
    %v2525 = vpack.c.b16 %v2061, %v2053
    %v2526 = vpack.c.b16 %v2062, %v2054
    %v2527 = vpack.c.b16 %v2063, %v2055
    %v2528 = vpack.c.b16 %v2064, %v2056
    %v2529 = vpack.c.b16 %v2065, %v2057
    %v2530 = vpack.c.b16 %v2074, %v2066
    %v2531 = vpack.c.b16 %v2075, %v2067
    %v2532 = vpack.c.b16 %v2076, %v2068
    %v2533 = vpack.c.b16 %v2077, %v2069
    %v2534 = vpack.c.b16 %v2078, %v2070
    %v2535 = vpack.c.b16 %v2079, %v2071
    %v2536 = vpack.c.b16 %v2080, %v2072
    %v2537 = vpack.c.b16 %v2081, %v2073
    %v2538 = vpack.c.b16 %v2090, %v2082
    %v2539 = vpack.c.b16 %v2091, %v2083
    %v2540 = vpack.c.b16 %v2092, %v2084
    %v2541 = vpack.c.b16 %v2093, %v2085
    %v2542 = vpack.c.b16 %v2094, %v2086
    %v2543 = vpack.c.b16 %v2095, %v2087
    %v2544 = vpack.c.b16 %v2096, %v2088
    %v2545 = vpack.c.b16 %v2097, %v2089
    %v2546 = vpack.c.b16 %v2106, %v2098
    %v2547 = vpack.c.b16 %v2107, %v2099
    %v2548 = vpack.c.b16 %v2108, %v2100
    %v2549 = vpack.c.b16 %v2109, %v2101
    %v2550 = vpack.c.b16 %v2110, %v2102
    %v2551 = vpack.c.b16 %v2111, %v2103
    %v2552 = vpack.c.b16 %v2112, %v2104
    %v2553 = vpack.c.b16 %v2113, %v2105
    %v2554 = vpack.c.b16 %v2122, %v2114
    %v2555 = vpack.c.b16 %v2123, %v2115
    %v2556 = vpack.c.b16 %v2124, %v2116
    %v2557 = vpack.c.b16 %v2125, %v2117
    %v2558 = vpack.c.b16 %v2126, %v2118
    %v2559 = vpack.c.b16 %v2127, %v2119
    %v2560 = vpack.c.b16 %v2128, %v2120
    %v2561 = vpack.c.b16 %v2129, %v2121
    %v2562 = vpack.c.b16 %v2138, %v2130
    %v2563 = vpack.c.b16 %v2139, %v2131
    %v2564 = vpack.c.b16 %v2140, %v2132
    %v2565 = vpack.c.b16 %v2141, %v2133
    %v2566 = vpack.c.b16 %v2142, %v2134
    %v2567 = vpack.c.b16 %v2143, %v2135
    %v2568 = vpack.c.b16 %v2144, %v2136
    %v2569 = vpack.c.b16 %v2145, %v2137
    %v2570 = vpack.c.b16 %v2154, %v2146
    %v2571 = vpack.c.b16 %v2155, %v2147
    %v2572 = vpack.c.b16 %v2156, %v2148
    %v2573 = vpack.c.b16 %v2157, %v2149
    %v2574 = vpack.c.b16 %v2158, %v2150
    %v2575 = vpack.c.b16 %v2159, %v2151
    %v2576 = vpack.c.b16 %v2160, %v2152
    %v2577 = vpack.c.b16 %v2161, %v2153
    %v2578 = vpack.c.b16 %v2170, %v2162
    %v2579 = vpack.c.b16 %v2171, %v2163
    %v2580 = vpack.c.b16 %v2172, %v2164
    %v2581 = vpack.c.b16 %v2173, %v2165
    %v2582 = vpack.c.b16 %v2174, %v2166
    %v2583 = vpack.c.b16 %v2175, %v2167
    %v2584 = vpack.c.b16 %v2176, %v2168
    %v2585 = vpack.c.b16 %v2177, %v2169
    %v2586 = vpack.c.b16 %v2186, %v2178
    %v2587 = vpack.c.b16 %v2187, %v2179
    %v2588 = vpack.c.b16 %v2188, %v2180
    %v2589 = vpack.c.b16 %v2189, %v2181
    %v2590 = vpack.c.b16 %v2190, %v2182
    %v2591 = vpack.c.b16 %v2191, %v2183
    %v2592 = vpack.c.b16 %v2192, %v2184
    %v2593 = vpack.c.b16 %v2193, %v2185
    %v2594 = vpack.c.b16 %v2202, %v2194
    %v2595 = vpack.c.b16 %v2203, %v2195
    %v2596 = vpack.c.b16 %v2204, %v2196
    %v2597 = vpack.c.b16 %v2205, %v2197
    %v2598 = vpack.c.b16 %v2206, %v2198
    %v2599 = vpack.c.b16 %v2207, %v2199
    %v2600 = vpack.c.b16 %v2208, %v2200
    %v2601 = vpack.c.b16 %v2209, %v2201
    %v2602 = vpack.c.b16 %v2218, %v2210
    %v2603 = vpack.c.b16 %v2219, %v2211
    %v2604 = vpack.c.b16 %v2220, %v2212
    %v2605 = vpack.c.b16 %v2221, %v2213
    %v2606 = vpack.c.b16 %v2222, %v2214
    %v2607 = vpack.c.b16 %v2223, %v2215
    %v2608 = vpack.c.b16 %v2224, %v2216
    %v2609 = vpack.c.b16 %v2225, %v2217
    %2994 = vmatprep.subr.bf16.mxu0 %v2227
    %2995 = vmatpush1.bf16.msra.mxu0 %v2226
    %2996 = vmatprep.subr.bf16.mxu0 %v2235
    %2997 = vmatpush1.bf16.msra.mxu0 %v2234
    %2998 = vmatprep.subr.bf16.mxu0 %v2243
    %2999 = vmatpush1.bf16.msra.mxu0 %v2242
    %3000 = vmatprep.subr.bf16.mxu0 %v2251
    %3001 = vmatpush1.bf16.msra.mxu0 %v2250
    %3002 = vmatprep.subr.bf16.mxu0 %v2259
    %3003 = vmatpush1.bf16.msra.mxu0 %v2258
    %3004 = vmatprep.subr.bf16.mxu0 %v2267
    %3005 = vmatpush1.bf16.msra.mxu0 %v2266
    %3006 = vmatprep.subr.bf16.mxu0 %v2275
    %3007 = vmatpush1.bf16.msra.mxu0 %v2274
    %3008 = vmatprep.subr.bf16.mxu0 %v2283
    %3009 = vmatpush1.bf16.msra.mxu0 %v2282
    %3010 = vmatprep.subr.bf16.mxu0 %v2291
    %3011 = vmatpush1.bf16.msra.mxu0 %v2290
    %3012 = vmatprep.subr.bf16.mxu0 %v2299
    %3013 = vmatpush1.bf16.msra.mxu0 %v2298
    %3014 = vmatprep.subr.bf16.mxu0 %v2307
    %3015 = vmatpush1.bf16.msra.mxu0 %v2306
    %3016 = vmatprep.subr.bf16.mxu0 %v2315
    %3017 = vmatpush1.bf16.msra.mxu0 %v2314
    %3018 = vmatprep.subr.bf16.mxu0 %v2323
    %3019 = vmatpush1.bf16.msra.mxu0 %v2322
    %3020 = vmatprep.subr.bf16.mxu0 %v2331
    %3021 = vmatpush1.bf16.msra.mxu0 %v2330
    %3022 = vmatprep.subr.bf16.mxu0 %v2339
    %3023 = vmatpush1.bf16.msra.mxu0 %v2338
    %3024 = vmatprep.subr.bf16.mxu0 %v2347
    %3025 = vmatpush1.bf16.msra.mxu0 %v2346
    %3026 = vmatprep.mubr.bf16.mxu0 %v883
    %3027 = vmatmul.mubr.bf16.gmra.mrb[0].mxu0 %v882
    %v3028 = vpop.f32.mrb[0].mxu0
    %v3029 = vadd.f32 %v557, %v3028
    %v3030 = vpop.f32.mrb[0].mxu0
    %v3031 = vadd.f32 %v561, %v3030
    %v3032 = vpop.f32.mrb[0].mxu0
    %v3033 = vadd.f32 %v557, %v3032
    %v3034 = vpop.f32.mrb[0].mxu0
    %v3035 = vadd.f32 %v561, %v3034
    %3036 = vmatprep.mubr.bf16.mxu0 %v889
    %3037 = vmatmul.mubr.bf16.gmra.mrb[0].mxu0 %v888
    %v3038 = vpop.f32.mrb[0].mxu0
    %v3039 = vadd.f32 %v557, %v3038
    %v3040 = vpop.f32.mrb[0].mxu0
    %v3041 = vadd.f32 %v561, %v3040
    %v3042 = vpop.f32.mrb[0].mxu0
    %v3043 = vadd.f32 %v557, %v3042
    %v3044 = vpop.f32.mrb[0].mxu0
    %v3045 = vadd.f32 %v561, %v3044
    %3046 = vmatprep.mubr.bf16.mxu0 %v895
    %3047 = vmatmul.mubr.bf16.gmra.mrb[0].mxu0 %v894
    %v3048 = vpop.f32.mrb[0].mxu0
    %v3049 = vadd.f32 %v557, %v3048
    %v3050 = vpop.f32.mrb[0].mxu0
    %v3051 = vadd.f32 %v561, %v3050
    %v3052 = vpop.f32.mrb[0].mxu0
    %v3053 = vadd.f32 %v557, %v3052
    %v3054 = vpop.f32.mrb[0].mxu0
    %v3055 = vadd.f32 %v561, %v3054
    %3056 = vmatprep.mubr.bf16.mxu0 %v901
    %3057 = vmatmul.mubr.bf16.gmra.mrb[0].mxu0 %v900
    %v3058 = vpop.f32.mrb[0].mxu0
    %v3059 = vadd.f32 %v557, %v3058
    %v3060 = vpop.f32.mrb[0].mxu0
    %v3061 = vadd.f32 %v561, %v3060
    %v3062 = vpop.f32.mrb[0].mxu0
    %v3063 = vadd.f32 %v557, %v3062
    %v3064 = vpop.f32.mrb[0].mxu0
    %v3065 = vadd.f32 %v561, %v3064
    %3066 = vmatprep.mubr.bf16.mxu0 %v907
    %3067 = vmatmul.mubr.bf16.gmra.mrb[0].mxu0 %v906
    %v3068 = vpop.f32.mrb[0].mxu0
    %v3069 = vadd.f32 %v557, %v3068
    %v3070 = vpop.f32.mrb[0].mxu0
    %v3071 = vadd.f32 %v561, %v3070
    %v3072 = vpop.f32.mrb[0].mxu0
    %v3073 = vadd.f32 %v557, %v3072
    %v3074 = vpop.f32.mrb[0].mxu0
    %v3075 = vadd.f32 %v561, %v3074
    %3076 = vmatprep.mubr.bf16.mxu0 %v913
    %3077 = vmatmul.mubr.bf16.gmra.mrb[0].mxu0 %v912
    %v3078 = vpop.f32.mrb[0].mxu0
    %v3079 = vadd.f32 %v557, %v3078
    %v3080 = vpop.f32.mrb[0].mxu0
    %v3081 = vadd.f32 %v561, %v3080
    %v3082 = vpop.f32.mrb[0].mxu0
    %v3083 = vadd.f32 %v557, %v3082
    %v3084 = vpop.f32.mrb[0].mxu0
    %v3085 = vadd.f32 %v561, %v3084
    %3086 = vmatprep.mubr.bf16.mxu0 %v919
    %3087 = vmatmul.mubr.bf16.gmra.mrb[0].mxu0 %v918
    %v3088 = vpop.f32.mrb[0].mxu0
    %v3089 = vadd.f32 %v557, %v3088
    %v3090 = vpop.f32.mrb[0].mxu0
    %v3091 = vadd.f32 %v561, %v3090
    %v3092 = vpop.f32.mrb[0].mxu0
    %v3093 = vadd.f32 %v557, %v3092
    %v3094 = vpop.f32.mrb[0].mxu0
    %v3095 = vadd.f32 %v561, %v3094
    %3096 = vmatprep.mubr.bf16.mxu0 %v925
    %3097 = vmatmul.mubr.bf16.gmra.mrb[0].mxu0 %v924
    %v3098 = vpop.f32.mrb[0].mxu0
    %v3099 = vadd.f32 %v557, %v3098
    %v3100 = vpop.f32.mrb[0].mxu0
    %v3101 = vadd.f32 %v561, %v3100
    %v3102 = vpop.f32.mrb[0].mxu0
    %v3103 = vadd.f32 %v557, %v3102
    %v3104 = vpop.f32.mrb[0].mxu0
    %v3105 = vadd.f32 %v561, %v3104
    %3106 = vmatprep.mubr.bf16.mxu0 %v931
    %3107 = vmatmul.mubr.bf16.gmra.mrb[0].mxu0 %v930
    %v3108 = vpop.f32.mrb[0].mxu0
    %v3109 = vadd.f32 %v557, %v3108
    %v3110 = vpop.f32.mrb[0].mxu0
    %v3111 = vadd.f32 %v561, %v3110
    %v3112 = vpop.f32.mrb[0].mxu0
    %v3113 = vadd.f32 %v557, %v3112
    %v3114 = vpop.f32.mrb[0].mxu0
    %v3115 = vadd.f32 %v561, %v3114
    %3116 = vmatprep.mubr.bf16.mxu0 %v937
    %3117 = vmatmul.mubr.bf16.gmra.mrb[0].mxu0 %v936
    %v3118 = vpop.f32.mrb[0].mxu0
    %v3119 = vadd.f32 %v557, %v3118
    %v3120 = vpop.f32.mrb[0].mxu0
    %v3121 = vadd.f32 %v561, %v3120
    %v3122 = vpop.f32.mrb[0].mxu0
    %v3123 = vadd.f32 %v557, %v3122
    %v3124 = vpop.f32.mrb[0].mxu0
    %v3125 = vadd.f32 %v561, %v3124
    %3126 = vmatprep.mubr.bf16.mxu0 %v943
    %3127 = vmatmul.mubr.bf16.gmra.mrb[0].mxu0 %v942
    %v3128 = vpop.f32.mrb[0].mxu0
    %v3129 = vadd.f32 %v557, %v3128
    %v3130 = vpop.f32.mrb[0].mxu0
    %v3131 = vadd.f32 %v561, %v3130
    %v3132 = vpop.f32.mrb[0].mxu0
    %v3133 = vadd.f32 %v557, %v3132
    %v3134 = vpop.f32.mrb[0].mxu0
    %v3135 = vadd.f32 %v561, %v3134
    %3136 = vmatprep.mubr.bf16.mxu0 %v949
    %3137 = vmatmul.mubr.bf16.gmra.mrb[0].mxu0 %v948
    %v3138 = vpop.f32.mrb[0].mxu0
    %v3139 = vadd.f32 %v557, %v3138
    %v3140 = vpop.f32.mrb[0].mxu0
    %v3141 = vadd.f32 %v561, %v3140
    %v3142 = vpop.f32.mrb[0].mxu0
    %v3143 = vadd.f32 %v557, %v3142
    %v3144 = vpop.f32.mrb[0].mxu0
    %v3145 = vadd.f32 %v561, %v3144
    %3146 = vmatprep.mubr.bf16.mxu0 %v955
    %3147 = vmatmul.mubr.bf16.gmra.mrb[0].mxu0 %v954
    %v3148 = vpop.f32.mrb[0].mxu0
    %v3149 = vadd.f32 %v557, %v3148
    %v3150 = vpop.f32.mrb[0].mxu0
    %v3151 = vadd.f32 %v561, %v3150
    %v3152 = vpop.f32.mrb[0].mxu0
    %v3153 = vadd.f32 %v557, %v3152
    %v3154 = vpop.f32.mrb[0].mxu0
    %v3155 = vadd.f32 %v561, %v3154
    %3156 = vmatprep.mubr.bf16.mxu0 %v961
    %3157 = vmatmul.mubr.bf16.gmra.mrb[0].mxu0 %v960
    %v3158 = vpop.f32.mrb[0].mxu0
    %v3159 = vadd.f32 %v557, %v3158
    %v3160 = vpop.f32.mrb[0].mxu0
    %v3161 = vadd.f32 %v561, %v3160
    %v3162 = vpop.f32.mrb[0].mxu0
    %v3163 = vadd.f32 %v557, %v3162
    %v3164 = vpop.f32.mrb[0].mxu0
    %v3165 = vadd.f32 %v561, %v3164
    %3166 = vmatprep.mubr.bf16.mxu0 %v967
    %3167 = vmatmul.mubr.bf16.gmra.mrb[0].mxu0 %v966
    %v3168 = vpop.f32.mrb[0].mxu0
    %v3169 = vadd.f32 %v557, %v3168
    %v3170 = vpop.f32.mrb[0].mxu0
    %v3171 = vadd.f32 %v561, %v3170
    %v3172 = vpop.f32.mrb[0].mxu0
    %v3173 = vadd.f32 %v557, %v3172
    %v3174 = vpop.f32.mrb[0].mxu0
    %v3175 = vadd.f32 %v561, %v3174
    %3176 = vmatprep.mubr.bf16.mxu0 %v973
    %3177 = vmatmul.mubr.bf16.gmra.mrb[0].mxu0 %v972
    %v3178 = vpop.f32.mrb[0].mxu0
    %v3179 = vadd.f32 %v557, %v3178
    %v3180 = vpop.f32.mrb[0].mxu0
    %v3181 = vadd.f32 %v561, %v3180
    %v3182 = vpop.f32.mrb[0].mxu0
    %v3183 = vadd.f32 %v557, %v3182
    %v3184 = vpop.f32.mrb[0].mxu0
    %v3185 = vadd.f32 %v561, %v3184
    %3186 = vdwg.mxu0
    %3187 = vmatprep.subr.bf16.mxu0 %v2355
    %3188 = vmatpush1.bf16.msra.mxu0 %v2354
    %3189 = vmatprep.subr.bf16.mxu0 %v2363
    %3190 = vmatpush1.bf16.msra.mxu0 %v2362
    %3191 = vmatprep.subr.bf16.mxu0 %v2371
    %3192 = vmatpush1.bf16.msra.mxu0 %v2370
    %3193 = vmatprep.subr.bf16.mxu0 %v2379
    %3194 = vmatpush1.bf16.msra.mxu0 %v2378
    %3195 = vmatprep.subr.bf16.mxu0 %v2387
    %3196 = vmatpush1.bf16.msra.mxu0 %v2386
    %3197 = vmatprep.subr.bf16.mxu0 %v2395
    %3198 = vmatpush1.bf16.msra.mxu0 %v2394
    %3199 = vmatprep.subr.bf16.mxu0 %v2403
    %3200 = vmatpush1.bf16.msra.mxu0 %v2402
    %3201 = vmatprep.subr.bf16.mxu0 %v2411
    %3202 = vmatpush1.bf16.msra.mxu0 %v2410
    %3203 = vmatprep.subr.bf16.mxu0 %v2419
    %3204 = vmatpush1.bf16.msra.mxu0 %v2418
    %3205 = vmatprep.subr.bf16.mxu0 %v2427
    %3206 = vmatpush1.bf16.msra.mxu0 %v2426
    %3207 = vmatprep.subr.bf16.mxu0 %v2435
    %3208 = vmatpush1.bf16.msra.mxu0 %v2434
    %3209 = vmatprep.subr.bf16.mxu0 %v2443
    %3210 = vmatpush1.bf16.msra.mxu0 %v2442
    %3211 = vmatprep.subr.bf16.mxu0 %v2451
    %3212 = vmatpush1.bf16.msra.mxu0 %v2450
    %3213 = vmatprep.subr.bf16.mxu0 %v2459
    %3214 = vmatpush1.bf16.msra.mxu0 %v2458
    %3215 = vmatprep.subr.bf16.mxu0 %v2467
    %3216 = vmatpush1.bf16.msra.mxu0 %v2466
    %3217 = vmatprep.subr.bf16.mxu0 %v2475
    %3218 = vmatpush1.bf16.msra.mxu0 %v2474
    %3219 = vmatprep.mubr.bf16.mxu0 %v885
    %3220 = vmatmul.mubr.bf16.gmra.mrb[0].mxu0 %v884
    %v3221 = vpop.f32.mrb[0].mxu0
    %v3222 = vadd.f32 %v3029, %v3221
    %v3223 = vpop.f32.mrb[0].mxu0
    %v3224 = vadd.f32 %v3031, %v3223
    %v3225 = vpop.f32.mrb[0].mxu0
    %v3226 = vadd.f32 %v3033, %v3225
    %v3227 = vpop.f32.mrb[0].mxu0
    %v3228 = vadd.f32 %v3035, %v3227
    %3229 = vmatprep.mubr.bf16.mxu0 %v891
    %3230 = vmatmul.mubr.bf16.gmra.mrb[0].mxu0 %v890
    %v3231 = vpop.f32.mrb[0].mxu0
    %v3232 = vadd.f32 %v3039, %v3231
    %v3233 = vpop.f32.mrb[0].mxu0
    %v3234 = vadd.f32 %v3041, %v3233
    %v3235 = vpop.f32.mrb[0].mxu0
    %v3236 = vadd.f32 %v3043, %v3235
    %v3237 = vpop.f32.mrb[0].mxu0
    %v3238 = vadd.f32 %v3045, %v3237
    %3239 = vmatprep.mubr.bf16.mxu0 %v897
    %3240 = vmatmul.mubr.bf16.gmra.mrb[0].mxu0 %v896
    %v3241 = vpop.f32.mrb[0].mxu0
    %v3242 = vadd.f32 %v3049, %v3241
    %v3243 = vpop.f32.mrb[0].mxu0
    %v3244 = vadd.f32 %v3051, %v3243
    %v3245 = vpop.f32.mrb[0].mxu0
    %v3246 = vadd.f32 %v3053, %v3245
    %v3247 = vpop.f32.mrb[0].mxu0
    %v3248 = vadd.f32 %v3055, %v3247
    %3249 = vmatprep.mubr.bf16.mxu0 %v903
    %3250 = vmatmul.mubr.bf16.gmra.mrb[0].mxu0 %v902
    %v3251 = vpop.f32.mrb[0].mxu0
    %v3252 = vadd.f32 %v3059, %v3251
    %v3253 = vpop.f32.mrb[0].mxu0
    %v3254 = vadd.f32 %v3061, %v3253
    %v3255 = vpop.f32.mrb[0].mxu0
    %v3256 = vadd.f32 %v3063, %v3255
    %v3257 = vpop.f32.mrb[0].mxu0
    %v3258 = vadd.f32 %v3065, %v3257
    %3259 = vmatprep.mubr.bf16.mxu0 %v909
    %3260 = vmatmul.mubr.bf16.gmra.mrb[0].mxu0 %v908
    %v3261 = vpop.f32.mrb[0].mxu0
    %v3262 = vadd.f32 %v3069, %v3261
    %v3263 = vpop.f32.mrb[0].mxu0
    %v3264 = vadd.f32 %v3071, %v3263
    %v3265 = vpop.f32.mrb[0].mxu0
    %v3266 = vadd.f32 %v3073, %v3265
    %v3267 = vpop.f32.mrb[0].mxu0
    %v3268 = vadd.f32 %v3075, %v3267
    %3269 = vmatprep.mubr.bf16.mxu0 %v915
    %3270 = vmatmul.mubr.bf16.gmra.mrb[0].mxu0 %v914
    %v3271 = vpop.f32.mrb[0].mxu0
    %v3272 = vadd.f32 %v3079, %v3271
    %v3273 = vpop.f32.mrb[0].mxu0
    %v3274 = vadd.f32 %v3081, %v3273
    %v3275 = vpop.f32.mrb[0].mxu0
    %v3276 = vadd.f32 %v3083, %v3275
    %v3277 = vpop.f32.mrb[0].mxu0
    %v3278 = vadd.f32 %v3085, %v3277
    %3279 = vmatprep.mubr.bf16.mxu0 %v921
    %3280 = vmatmul.mubr.bf16.gmra.mrb[0].mxu0 %v920
    %v3281 = vpop.f32.mrb[0].mxu0
    %v3282 = vadd.f32 %v3089, %v3281
    %v3283 = vpop.f32.mrb[0].mxu0
    %v3284 = vadd.f32 %v3091, %v3283
    %v3285 = vpop.f32.mrb[0].mxu0
    %v3286 = vadd.f32 %v3093, %v3285
    %v3287 = vpop.f32.mrb[0].mxu0
    %v3288 = vadd.f32 %v3095, %v3287
    %3289 = vmatprep.mubr.bf16.mxu0 %v927
    %3290 = vmatmul.mubr.bf16.gmra.mrb[0].mxu0 %v926
    %v3291 = vpop.f32.mrb[0].mxu0
    %v3292 = vadd.f32 %v3099, %v3291
    %v3293 = vpop.f32.mrb[0].mxu0
    %v3294 = vadd.f32 %v3101, %v3293
    %v3295 = vpop.f32.mrb[0].mxu0
    %v3296 = vadd.f32 %v3103, %v3295
    %v3297 = vpop.f32.mrb[0].mxu0
    %v3298 = vadd.f32 %v3105, %v3297
    %3299 = vmatprep.mubr.bf16.mxu0 %v933
    %3300 = vmatmul.mubr.bf16.gmra.mrb[0].mxu0 %v932
    %v3301 = vpop.f32.mrb[0].mxu0
    %v3302 = vadd.f32 %v3109, %v3301
    %v3303 = vpop.f32.mrb[0].mxu0
    %v3304 = vadd.f32 %v3111, %v3303
    %v3305 = vpop.f32.mrb[0].mxu0
    %v3306 = vadd.f32 %v3113, %v3305
    %v3307 = vpop.f32.mrb[0].mxu0
    %v3308 = vadd.f32 %v3115, %v3307
    %3309 = vmatprep.mubr.bf16.mxu0 %v939
    %3310 = vmatmul.mubr.bf16.gmra.mrb[0].mxu0 %v938
    %v3311 = vpop.f32.mrb[0].mxu0
    %v3312 = vadd.f32 %v3119, %v3311
    %v3313 = vpop.f32.mrb[0].mxu0
    %v3314 = vadd.f32 %v3121, %v3313
    %v3315 = vpop.f32.mrb[0].mxu0
    %v3316 = vadd.f32 %v3123, %v3315
    %v3317 = vpop.f32.mrb[0].mxu0
    %v3318 = vadd.f32 %v3125, %v3317
    %3319 = vmatprep.mubr.bf16.mxu0 %v945
    %3320 = vmatmul.mubr.bf16.gmra.mrb[0].mxu0 %v944
    %v3321 = vpop.f32.mrb[0].mxu0
    %v3322 = vadd.f32 %v3129, %v3321
    %v3323 = vpop.f32.mrb[0].mxu0
    %v3324 = vadd.f32 %v3131, %v3323
    %v3325 = vpop.f32.mrb[0].mxu0
    %v3326 = vadd.f32 %v3133, %v3325
    %v3327 = vpop.f32.mrb[0].mxu0
    %v3328 = vadd.f32 %v3135, %v3327
    %3329 = vmatprep.mubr.bf16.mxu0 %v951
    %3330 = vmatmul.mubr.bf16.gmra.mrb[0].mxu0 %v950
    %v3331 = vpop.f32.mrb[0].mxu0
    %v3332 = vadd.f32 %v3139, %v3331
    %v3333 = vpop.f32.mrb[0].mxu0
    %v3334 = vadd.f32 %v3141, %v3333
    %v3335 = vpop.f32.mrb[0].mxu0
    %v3336 = vadd.f32 %v3143, %v3335
    %v3337 = vpop.f32.mrb[0].mxu0
    %v3338 = vadd.f32 %v3145, %v3337
    %3339 = vmatprep.mubr.bf16.mxu0 %v957
    %3340 = vmatmul.mubr.bf16.gmra.mrb[0].mxu0 %v956
    %v3341 = vpop.f32.mrb[0].mxu0
    %v3342 = vadd.f32 %v3149, %v3341
    %v3343 = vpop.f32.mrb[0].mxu0
    %v3344 = vadd.f32 %v3151, %v3343
    %v3345 = vpop.f32.mrb[0].mxu0
    %v3346 = vadd.f32 %v3153, %v3345
    %v3347 = vpop.f32.mrb[0].mxu0
    %v3348 = vadd.f32 %v3155, %v3347
    %3349 = vmatprep.mubr.bf16.mxu0 %v963
    %3350 = vmatmul.mubr.bf16.gmra.mrb[0].mxu0 %v962
    %v3351 = vpop.f32.mrb[0].mxu0
    %v3352 = vadd.f32 %v3159, %v3351
    %v3353 = vpop.f32.mrb[0].mxu0
    %v3354 = vadd.f32 %v3161, %v3353
    %v3355 = vpop.f32.mrb[0].mxu0
    %v3356 = vadd.f32 %v3163, %v3355
    %v3357 = vpop.f32.mrb[0].mxu0
    %v3358 = vadd.f32 %v3165, %v3357
    %3359 = vmatprep.mubr.bf16.mxu0 %v969
    %3360 = vmatmul.mubr.bf16.gmra.mrb[0].mxu0 %v968
    %v3361 = vpop.f32.mrb[0].mxu0
    %v3362 = vadd.f32 %v3169, %v3361
    %v3363 = vpop.f32.mrb[0].mxu0
    %v3364 = vadd.f32 %v3171, %v3363
    %v3365 = vpop.f32.mrb[0].mxu0
    %v3366 = vadd.f32 %v3173, %v3365
    %v3367 = vpop.f32.mrb[0].mxu0
    %v3368 = vadd.f32 %v3175, %v3367
    %3369 = vmatprep.mubr.bf16.mxu0 %v975
    %3370 = vmatmul.mubr.bf16.gmra.mrb[0].mxu0 %v974
    %v3371 = vpop.f32.mrb[0].mxu0
    %v3372 = vadd.f32 %v3179, %v3371
    %v3373 = vpop.f32.mrb[0].mxu0
    %v3374 = vadd.f32 %v3181, %v3373
    %v3375 = vpop.f32.mrb[0].mxu0
    %v3376 = vadd.f32 %v3183, %v3375
    %v3377 = vpop.f32.mrb[0].mxu0
    %v3378 = vadd.f32 %v3185, %v3377
    %3379 = vdwg.mxu0
    %3380 = vmatprep.subr.bf16.mxu0 %v2483
    %3381 = vmatpush1.bf16.msra.mxu0 %v2482
    %3382 = vmatprep.subr.bf16.mxu0 %v2491
    %3383 = vmatpush1.bf16.msra.mxu0 %v2490
    %3384 = vmatprep.subr.bf16.mxu0 %v2499
    %3385 = vmatpush1.bf16.msra.mxu0 %v2498
    %3386 = vmatprep.subr.bf16.mxu0 %v2507
    %3387 = vmatpush1.bf16.msra.mxu0 %v2506
    %3388 = vmatprep.subr.bf16.mxu0 %v2515
    %3389 = vmatpush1.bf16.msra.mxu0 %v2514
    %3390 = vmatprep.subr.bf16.mxu0 %v2523
    %3391 = vmatpush1.bf16.msra.mxu0 %v2522
    %3392 = vmatprep.subr.bf16.mxu0 %v2531
    %3393 = vmatpush1.bf16.msra.mxu0 %v2530
    %3394 = vmatprep.subr.bf16.mxu0 %v2539
    %3395 = vmatpush1.bf16.msra.mxu0 %v2538
    %3396 = vmatprep.subr.bf16.mxu0 %v2547
    %3397 = vmatpush1.bf16.msra.mxu0 %v2546
    %3398 = vmatprep.subr.bf16.mxu0 %v2555
    %3399 = vmatpush1.bf16.msra.mxu0 %v2554
    %3400 = vmatprep.subr.bf16.mxu0 %v2563
    %3401 = vmatpush1.bf16.msra.mxu0 %v2562
    %3402 = vmatprep.subr.bf16.mxu0 %v2571
    %3403 = vmatpush1.bf16.msra.mxu0 %v2570
    %3404 = vmatprep.subr.bf16.mxu0 %v2579
    %3405 = vmatpush1.bf16.msra.mxu0 %v2578
    %3406 = vmatprep.subr.bf16.mxu0 %v2587
    %3407 = vmatpush1.bf16.msra.mxu0 %v2586
    %3408 = vmatprep.subr.bf16.mxu0 %v2595
    %3409 = vmatpush1.bf16.msra.mxu0 %v2594
    %3410 = vmatprep.subr.bf16.mxu0 %v2603
    %3411 = vmatpush1.bf16.msra.mxu0 %v2602
    %3412 = vmatprep.mubr.bf16.mxu0 %v887
    %3413 = vmatmul.mubr.bf16.gmra.mrb[0].mxu0 %v886
    %v3414 = vpop.f32.mrb[0].mxu0
    %v3415 = vadd.f32 %v3222, %v3414
    %v3416 = vpop.f32.mrb[0].mxu0
    %v3417 = vadd.f32 %v3224, %v3416
    %v3418 = vpop.f32.mrb[0].mxu0
    %v3419 = vadd.f32 %v3226, %v3418
    %v3420 = vpop.f32.mrb[0].mxu0
    %v3421 = vadd.f32 %v3228, %v3420
    %3422 = vmatprep.mubr.bf16.mxu0 %v893
    %3423 = vmatmul.mubr.bf16.gmra.mrb[0].mxu0 %v892
    %v3424 = vpop.f32.mrb[0].mxu0
    %v3425 = vadd.f32 %v3232, %v3424
    %v3426 = vpop.f32.mrb[0].mxu0
    %v3427 = vadd.f32 %v3234, %v3426
    %v3428 = vpop.f32.mrb[0].mxu0
    %v3429 = vadd.f32 %v3236, %v3428
    %v3430 = vpop.f32.mrb[0].mxu0
    %v3431 = vadd.f32 %v3238, %v3430
    %3432 = vmatprep.mubr.bf16.mxu0 %v899
    %3433 = vmatmul.mubr.bf16.gmra.mrb[0].mxu0 %v898
    %v3434 = vpop.f32.mrb[0].mxu0
    %v3435 = vadd.f32 %v3242, %v3434
    %v3436 = vpop.f32.mrb[0].mxu0
    %v3437 = vadd.f32 %v3244, %v3436
    %v3438 = vpop.f32.mrb[0].mxu0
    %v3439 = vadd.f32 %v3246, %v3438
    %v3440 = vpop.f32.mrb[0].mxu0
    %v3441 = vadd.f32 %v3248, %v3440
    %3442 = vmatprep.mubr.bf16.mxu0 %v905
    %3443 = vmatmul.mubr.bf16.gmra.mrb[0].mxu0 %v904
    %v3444 = vpop.f32.mrb[0].mxu0
    %v3445 = vadd.f32 %v3252, %v3444
    %v3446 = vpop.f32.mrb[0].mxu0
    %v3447 = vadd.f32 %v3254, %v3446
    %v3448 = vpop.f32.mrb[0].mxu0
    %v3449 = vadd.f32 %v3256, %v3448
    %v3450 = vpop.f32.mrb[0].mxu0
    %v3451 = vadd.f32 %v3258, %v3450
    %3452 = vmatprep.mubr.bf16.mxu0 %v911
    %3453 = vmatmul.mubr.bf16.gmra.mrb[0].mxu0 %v910
    %v3454 = vpop.f32.mrb[0].mxu0
    %v3455 = vadd.f32 %v3262, %v3454
    %v3456 = vpop.f32.mrb[0].mxu0
    %v3457 = vadd.f32 %v3264, %v3456
    %v3458 = vpop.f32.mrb[0].mxu0
    %v3459 = vadd.f32 %v3266, %v3458
    %v3460 = vpop.f32.mrb[0].mxu0
    %v3461 = vadd.f32 %v3268, %v3460
    %3462 = vmatprep.mubr.bf16.mxu0 %v917
    %3463 = vmatmul.mubr.bf16.gmra.mrb[0].mxu0 %v916
    %v3464 = vpop.f32.mrb[0].mxu0
    %v3465 = vadd.f32 %v3272, %v3464
    %v3466 = vpop.f32.mrb[0].mxu0
    %v3467 = vadd.f32 %v3274, %v3466
    %v3468 = vpop.f32.mrb[0].mxu0
    %v3469 = vadd.f32 %v3276, %v3468
    %v3470 = vpop.f32.mrb[0].mxu0
    %v3471 = vadd.f32 %v3278, %v3470
    %3472 = vmatprep.mubr.bf16.mxu0 %v923
    %3473 = vmatmul.mubr.bf16.gmra.mrb[0].mxu0 %v922
    %v3474 = vpop.f32.mrb[0].mxu0
    %v3475 = vadd.f32 %v3282, %v3474
    %v3476 = vpop.f32.mrb[0].mxu0
    %v3477 = vadd.f32 %v3284, %v3476
    %v3478 = vpop.f32.mrb[0].mxu0
    %v3479 = vadd.f32 %v3286, %v3478
    %v3480 = vpop.f32.mrb[0].mxu0
    %v3481 = vadd.f32 %v3288, %v3480
    %3482 = vmatprep.mubr.bf16.mxu0 %v929
    %3483 = vmatmul.mubr.bf16.gmra.mrb[0].mxu0 %v928
    %v3484 = vpop.f32.mrb[0].mxu0
    %v3485 = vadd.f32 %v3292, %v3484
    %v3486 = vpop.f32.mrb[0].mxu0
    %v3487 = vadd.f32 %v3294, %v3486
    %v3488 = vpop.f32.mrb[0].mxu0
    %v3489 = vadd.f32 %v3296, %v3488
    %v3490 = vpop.f32.mrb[0].mxu0
    %v3491 = vadd.f32 %v3298, %v3490
    %3492 = vmatprep.mubr.bf16.mxu0 %v935
    %3493 = vmatmul.mubr.bf16.gmra.mrb[0].mxu0 %v934
    %v3494 = vpop.f32.mrb[0].mxu0
    %v3495 = vadd.f32 %v3302, %v3494
    %v3496 = vpop.f32.mrb[0].mxu0
    %v3497 = vadd.f32 %v3304, %v3496
    %v3498 = vpop.f32.mrb[0].mxu0
    %v3499 = vadd.f32 %v3306, %v3498
    %v3500 = vpop.f32.mrb[0].mxu0
    %v3501 = vadd.f32 %v3308, %v3500
    %3502 = vmatprep.mubr.bf16.mxu0 %v941
    %3503 = vmatmul.mubr.bf16.gmra.mrb[0].mxu0 %v940
    %v3504 = vpop.f32.mrb[0].mxu0
    %v3505 = vadd.f32 %v3312, %v3504
    %v3506 = vpop.f32.mrb[0].mxu0
    %v3507 = vadd.f32 %v3314, %v3506
    %v3508 = vpop.f32.mrb[0].mxu0
    %v3509 = vadd.f32 %v3316, %v3508
    %v3510 = vpop.f32.mrb[0].mxu0
    %v3511 = vadd.f32 %v3318, %v3510
    %3512 = vmatprep.mubr.bf16.mxu0 %v947
    %3513 = vmatmul.mubr.bf16.gmra.mrb[0].mxu0 %v946
    %v3514 = vpop.f32.mrb[0].mxu0
    %v3515 = vadd.f32 %v3322, %v3514
    %v3516 = vpop.f32.mrb[0].mxu0
    %v3517 = vadd.f32 %v3324, %v3516
    %v3518 = vpop.f32.mrb[0].mxu0
    %v3519 = vadd.f32 %v3326, %v3518
    %v3520 = vpop.f32.mrb[0].mxu0
    %v3521 = vadd.f32 %v3328, %v3520
    %3522 = vmatprep.mubr.bf16.mxu0 %v953
    %3523 = vmatmul.mubr.bf16.gmra.mrb[0].mxu0 %v952
    %v3524 = vpop.f32.mrb[0].mxu0
    %v3525 = vadd.f32 %v3332, %v3524
    %v3526 = vpop.f32.mrb[0].mxu0
    %v3527 = vadd.f32 %v3334, %v3526
    %v3528 = vpop.f32.mrb[0].mxu0
    %v3529 = vadd.f32 %v3336, %v3528
    %v3530 = vpop.f32.mrb[0].mxu0
    %v3531 = vadd.f32 %v3338, %v3530
    %3532 = vmatprep.mubr.bf16.mxu0 %v959
    %3533 = vmatmul.mubr.bf16.gmra.mrb[0].mxu0 %v958
    %v3534 = vpop.f32.mrb[0].mxu0
    %v3535 = vadd.f32 %v3342, %v3534
    %v3536 = vpop.f32.mrb[0].mxu0
    %v3537 = vadd.f32 %v3344, %v3536
    %v3538 = vpop.f32.mrb[0].mxu0
    %v3539 = vadd.f32 %v3346, %v3538
    %v3540 = vpop.f32.mrb[0].mxu0
    %v3541 = vadd.f32 %v3348, %v3540
    %3542 = vmatprep.mubr.bf16.mxu0 %v965
    %3543 = vmatmul.mubr.bf16.gmra.mrb[0].mxu0 %v964
    %v3544 = vpop.f32.mrb[0].mxu0
    %v3545 = vadd.f32 %v3352, %v3544
    %v3546 = vpop.f32.mrb[0].mxu0
    %v3547 = vadd.f32 %v3354, %v3546
    %v3548 = vpop.f32.mrb[0].mxu0
    %v3549 = vadd.f32 %v3356, %v3548
    %v3550 = vpop.f32.mrb[0].mxu0
    %v3551 = vadd.f32 %v3358, %v3550
    %3552 = vmatprep.mubr.bf16.mxu0 %v971
    %3553 = vmatmul.mubr.bf16.gmra.mrb[0].mxu0 %v970
    %v3554 = vpop.f32.mrb[0].mxu0
    %v3555 = vadd.f32 %v3362, %v3554
    %v3556 = vpop.f32.mrb[0].mxu0
    %v3557 = vadd.f32 %v3364, %v3556
    %v3558 = vpop.f32.mrb[0].mxu0
    %v3559 = vadd.f32 %v3366, %v3558
    %v3560 = vpop.f32.mrb[0].mxu0
    %v3561 = vadd.f32 %v3368, %v3560
    %3562 = vmatprep.mubr.bf16.mxu0 %v977
    %3563 = vmatmul.mubr.bf16.gmra.mrb[0].mxu0 %v976
    %v3564 = vpop.f32.mrb[0].mxu0
    %v3565 = vadd.f32 %v3372, %v3564
    %v3566 = vpop.f32.mrb[0].mxu0
    %v3567 = vadd.f32 %v3374, %v3566
    %v3568 = vpop.f32.mrb[0].mxu0
    %v3569 = vadd.f32 %v3376, %v3568
    %v3570 = vpop.f32.mrb[0].mxu0
    %v3571 = vadd.f32 %v3378, %v3570
    %3572 = vdwg.mxu0
    %3573 = vmatprep.subr.bf16.mxu0 %v2229
    %3574 = vmatpush1.bf16.msra.mxu0 %v2228
    %3575 = vmatprep.subr.bf16.mxu0 %v2237
    %3576 = vmatpush1.bf16.msra.mxu0 %v2236
    %3577 = vmatprep.subr.bf16.mxu0 %v2245
    %3578 = vmatpush1.bf16.msra.mxu0 %v2244
    %3579 = vmatprep.subr.bf16.mxu0 %v2253
    %3580 = vmatpush1.bf16.msra.mxu0 %v2252
    %3581 = vmatprep.subr.bf16.mxu0 %v2261
    %3582 = vmatpush1.bf16.msra.mxu0 %v2260
    %3583 = vmatprep.subr.bf16.mxu0 %v2269
    %3584 = vmatpush1.bf16.msra.mxu0 %v2268
    %3585 = vmatprep.subr.bf16.mxu0 %v2277
    %3586 = vmatpush1.bf16.msra.mxu0 %v2276
    %3587 = vmatprep.subr.bf16.mxu0 %v2285
    %3588 = vmatpush1.bf16.msra.mxu0 %v2284
    %3589 = vmatprep.subr.bf16.mxu0 %v2293
    %3590 = vmatpush1.bf16.msra.mxu0 %v2292
    %3591 = vmatprep.subr.bf16.mxu0 %v2301
    %3592 = vmatpush1.bf16.msra.mxu0 %v2300
    %3593 = vmatprep.subr.bf16.mxu0 %v2309
    %3594 = vmatpush1.bf16.msra.mxu0 %v2308
    %3595 = vmatprep.subr.bf16.mxu0 %v2317
    %3596 = vmatpush1.bf16.msra.mxu0 %v2316
    %3597 = vmatprep.subr.bf16.mxu0 %v2325
    %3598 = vmatpush1.bf16.msra.mxu0 %v2324
    %3599 = vmatprep.subr.bf16.mxu0 %v2333
    %3600 = vmatpush1.bf16.msra.mxu0 %v2332
    %3601 = vmatprep.subr.bf16.mxu0 %v2341
    %3602 = vmatpush1.bf16.msra.mxu0 %v2340
    %3603 = vmatprep.subr.bf16.mxu0 %v2349
    %3604 = vmatpush1.bf16.msra.mxu0 %v2348
    %3605 = vmatprep.mubr.bf16.mxu0 %v883
    %3606 = vmatmul.mubr.bf16.gmra.mrb[0].mxu0 %v882
    %v3607 = vpop.f32.mrb[0].mxu0
    %v3608 = vadd.f32 %v565, %v3607
    %v3609 = vpop.f32.mrb[0].mxu0
    %v3610 = vadd.f32 %v569, %v3609
    %v3611 = vpop.f32.mrb[0].mxu0
    %v3612 = vadd.f32 %v565, %v3611
    %v3613 = vpop.f32.mrb[0].mxu0
    %v3614 = vadd.f32 %v569, %v3613
    %3615 = vmatprep.mubr.bf16.mxu0 %v889
    %3616 = vmatmul.mubr.bf16.gmra.mrb[0].mxu0 %v888
    %v3617 = vpop.f32.mrb[0].mxu0
    %v3618 = vadd.f32 %v565, %v3617
    %v3619 = vpop.f32.mrb[0].mxu0
    %v3620 = vadd.f32 %v569, %v3619
    %v3621 = vpop.f32.mrb[0].mxu0
    %v3622 = vadd.f32 %v565, %v3621
    %v3623 = vpop.f32.mrb[0].mxu0
    %v3624 = vadd.f32 %v569, %v3623
    %3625 = vmatprep.mubr.bf16.mxu0 %v895
    %3626 = vmatmul.mubr.bf16.gmra.mrb[0].mxu0 %v894
    %v3627 = vpop.f32.mrb[0].mxu0
    %v3628 = vadd.f32 %v565, %v3627
    %v3629 = vpop.f32.mrb[0].mxu0
    %v3630 = vadd.f32 %v569, %v3629
    %v3631 = vpop.f32.mrb[0].mxu0
    %v3632 = vadd.f32 %v565, %v3631
    %v3633 = vpop.f32.mrb[0].mxu0
    %v3634 = vadd.f32 %v569, %v3633
    %3635 = vmatprep.mubr.bf16.mxu0 %v901
    %3636 = vmatmul.mubr.bf16.gmra.mrb[0].mxu0 %v900
    %v3637 = vpop.f32.mrb[0].mxu0
    %v3638 = vadd.f32 %v565, %v3637
    %v3639 = vpop.f32.mrb[0].mxu0
    %v3640 = vadd.f32 %v569, %v3639
    %v3641 = vpop.f32.mrb[0].mxu0
    %v3642 = vadd.f32 %v565, %v3641
    %v3643 = vpop.f32.mrb[0].mxu0
    %v3644 = vadd.f32 %v569, %v3643
    %3645 = vmatprep.mubr.bf16.mxu0 %v907
    %3646 = vmatmul.mubr.bf16.gmra.mrb[0].mxu0 %v906
    %v3647 = vpop.f32.mrb[0].mxu0
    %v3648 = vadd.f32 %v565, %v3647
    %v3649 = vpop.f32.mrb[0].mxu0
    %v3650 = vadd.f32 %v569, %v3649
    %v3651 = vpop.f32.mrb[0].mxu0
    %v3652 = vadd.f32 %v565, %v3651
    %v3653 = vpop.f32.mrb[0].mxu0
    %v3654 = vadd.f32 %v569, %v3653
    %3655 = vmatprep.mubr.bf16.mxu0 %v913
    %3656 = vmatmul.mubr.bf16.gmra.mrb[0].mxu0 %v912
    %v3657 = vpop.f32.mrb[0].mxu0
    %v3658 = vadd.f32 %v565, %v3657
    %v3659 = vpop.f32.mrb[0].mxu0
    %v3660 = vadd.f32 %v569, %v3659
    %v3661 = vpop.f32.mrb[0].mxu0
    %v3662 = vadd.f32 %v565, %v3661
    %v3663 = vpop.f32.mrb[0].mxu0
    %v3664 = vadd.f32 %v569, %v3663
    %3665 = vmatprep.mubr.bf16.mxu0 %v919
    %3666 = vmatmul.mubr.bf16.gmra.mrb[0].mxu0 %v918
    %v3667 = vpop.f32.mrb[0].mxu0
    %v3668 = vadd.f32 %v565, %v3667
    %v3669 = vpop.f32.mrb[0].mxu0
    %v3670 = vadd.f32 %v569, %v3669
    %v3671 = vpop.f32.mrb[0].mxu0
    %v3672 = vadd.f32 %v565, %v3671
    %v3673 = vpop.f32.mrb[0].mxu0
    %v3674 = vadd.f32 %v569, %v3673
    %3675 = vmatprep.mubr.bf16.mxu0 %v925
    %3676 = vmatmul.mubr.bf16.gmra.mrb[0].mxu0 %v924
    %v3677 = vpop.f32.mrb[0].mxu0
    %v3678 = vadd.f32 %v565, %v3677
    %v3679 = vpop.f32.mrb[0].mxu0
    %v3680 = vadd.f32 %v569, %v3679
    %v3681 = vpop.f32.mrb[0].mxu0
    %v3682 = vadd.f32 %v565, %v3681
    %v3683 = vpop.f32.mrb[0].mxu0
    %v3684 = vadd.f32 %v569, %v3683
    %3685 = vmatprep.mubr.bf16.mxu0 %v931
    %3686 = vmatmul.mubr.bf16.gmra.mrb[0].mxu0 %v930
    %v3687 = vpop.f32.mrb[0].mxu0
    %v3688 = vadd.f32 %v565, %v3687
    %v3689 = vpop.f32.mrb[0].mxu0
    %v3690 = vadd.f32 %v569, %v3689
    %v3691 = vpop.f32.mrb[0].mxu0
    %v3692 = vadd.f32 %v565, %v3691
    %v3693 = vpop.f32.mrb[0].mxu0
    %v3694 = vadd.f32 %v569, %v3693
    %3695 = vmatprep.mubr.bf16.mxu0 %v937
    %3696 = vmatmul.mubr.bf16.gmra.mrb[0].mxu0 %v936
    %v3697 = vpop.f32.mrb[0].mxu0
    %v3698 = vadd.f32 %v565, %v3697
    %v3699 = vpop.f32.mrb[0].mxu0
    %v3700 = vadd.f32 %v569, %v3699
    %v3701 = vpop.f32.mrb[0].mxu0
    %v3702 = vadd.f32 %v565, %v3701
    %v3703 = vpop.f32.mrb[0].mxu0
    %v3704 = vadd.f32 %v569, %v3703
    %3705 = vmatprep.mubr.bf16.mxu0 %v943
    %3706 = vmatmul.mubr.bf16.gmra.mrb[0].mxu0 %v942
    %v3707 = vpop.f32.mrb[0].mxu0
    %v3708 = vadd.f32 %v565, %v3707
    %v3709 = vpop.f32.mrb[0].mxu0
    %v3710 = vadd.f32 %v569, %v3709
    %v3711 = vpop.f32.mrb[0].mxu0
    %v3712 = vadd.f32 %v565, %v3711
    %v3713 = vpop.f32.mrb[0].mxu0
    %v3714 = vadd.f32 %v569, %v3713
    %3715 = vmatprep.mubr.bf16.mxu0 %v949
    %3716 = vmatmul.mubr.bf16.gmra.mrb[0].mxu0 %v948
    %v3717 = vpop.f32.mrb[0].mxu0
    %v3718 = vadd.f32 %v565, %v3717
    %v3719 = vpop.f32.mrb[0].mxu0
    %v3720 = vadd.f32 %v569, %v3719
    %v3721 = vpop.f32.mrb[0].mxu0
    %v3722 = vadd.f32 %v565, %v3721
    %v3723 = vpop.f32.mrb[0].mxu0
    %v3724 = vadd.f32 %v569, %v3723
    %3725 = vmatprep.mubr.bf16.mxu0 %v955
    %3726 = vmatmul.mubr.bf16.gmra.mrb[0].mxu0 %v954
    %v3727 = vpop.f32.mrb[0].mxu0
    %v3728 = vadd.f32 %v565, %v3727
    %v3729 = vpop.f32.mrb[0].mxu0
    %v3730 = vadd.f32 %v569, %v3729
    %v3731 = vpop.f32.mrb[0].mxu0
    %v3732 = vadd.f32 %v565, %v3731
    %v3733 = vpop.f32.mrb[0].mxu0
    %v3734 = vadd.f32 %v569, %v3733
    %3735 = vmatprep.mubr.bf16.mxu0 %v961
    %3736 = vmatmul.mubr.bf16.gmra.mrb[0].mxu0 %v960
    %v3737 = vpop.f32.mrb[0].mxu0
    %v3738 = vadd.f32 %v565, %v3737
    %v3739 = vpop.f32.mrb[0].mxu0
    %v3740 = vadd.f32 %v569, %v3739
    %v3741 = vpop.f32.mrb[0].mxu0
    %v3742 = vadd.f32 %v565, %v3741
    %v3743 = vpop.f32.mrb[0].mxu0
    %v3744 = vadd.f32 %v569, %v3743
    %3745 = vmatprep.mubr.bf16.mxu0 %v967
    %3746 = vmatmul.mubr.bf16.gmra.mrb[0].mxu0 %v966
    %v3747 = vpop.f32.mrb[0].mxu0
    %v3748 = vadd.f32 %v565, %v3747
    %v3749 = vpop.f32.mrb[0].mxu0
    %v3750 = vadd.f32 %v569, %v3749
    %v3751 = vpop.f32.mrb[0].mxu0
    %v3752 = vadd.f32 %v565, %v3751
    %v3753 = vpop.f32.mrb[0].mxu0
    %v3754 = vadd.f32 %v569, %v3753
    %3755 = vmatprep.mubr.bf16.mxu0 %v973
    %3756 = vmatmul.mubr.bf16.gmra.mrb[0].mxu0 %v972
    %v3757 = vpop.f32.mrb[0].mxu0
    %v3758 = vadd.f32 %v565, %v3757
    %v3759 = vpop.f32.mrb[0].mxu0
    %v3760 = vadd.f32 %v569, %v3759
    %v3761 = vpop.f32.mrb[0].mxu0
    %v3762 = vadd.f32 %v565, %v3761
    %v3763 = vpop.f32.mrb[0].mxu0
    %v3764 = vadd.f32 %v569, %v3763
    %3765 = vdwg.mxu0
    %3766 = vmatprep.subr.bf16.mxu0 %v2357
    %3767 = vmatpush1.bf16.msra.mxu0 %v2356
    %3768 = vmatprep.subr.bf16.mxu0 %v2365
    %3769 = vmatpush1.bf16.msra.mxu0 %v2364
    %3770 = vmatprep.subr.bf16.mxu0 %v2373
    %3771 = vmatpush1.bf16.msra.mxu0 %v2372
    %3772 = vmatprep.subr.bf16.mxu0 %v2381
    %3773 = vmatpush1.bf16.msra.mxu0 %v2380
    %3774 = vmatprep.subr.bf16.mxu0 %v2389
    %3775 = vmatpush1.bf16.msra.mxu0 %v2388
    %3776 = vmatprep.subr.bf16.mxu0 %v2397
    %3777 = vmatpush1.bf16.msra.mxu0 %v2396
    %3778 = vmatprep.subr.bf16.mxu0 %v2405
    %3779 = vmatpush1.bf16.msra.mxu0 %v2404
    %3780 = vmatprep.subr.bf16.mxu0 %v2413
    %3781 = vmatpush1.bf16.msra.mxu0 %v2412
    %3782 = vmatprep.subr.bf16.mxu0 %v2421
    %3783 = vmatpush1.bf16.msra.mxu0 %v2420
    %3784 = vmatprep.subr.bf16.mxu0 %v2429
    %3785 = vmatpush1.bf16.msra.mxu0 %v2428
    %3786 = vmatprep.subr.bf16.mxu0 %v2437
    %3787 = vmatpush1.bf16.msra.mxu0 %v2436
    %3788 = vmatprep.subr.bf16.mxu0 %v2445
    %3789 = vmatpush1.bf16.msra.mxu0 %v2444
    %3790 = vmatprep.subr.bf16.mxu0 %v2453
    %3791 = vmatpush1.bf16.msra.mxu0 %v2452
    %3792 = vmatprep.subr.bf16.mxu0 %v2461
    %3793 = vmatpush1.bf16.msra.mxu0 %v2460
    %3794 = vmatprep.subr.bf16.mxu0 %v2469
    %3795 = vmatpush1.bf16.msra.mxu0 %v2468
    %3796 = vmatprep.subr.bf16.mxu0 %v2477
    %3797 = vmatpush1.bf16.msra.mxu0 %v2476
    %3798 = vmatprep.mubr.bf16.mxu0 %v885
    %3799 = vmatmul.mubr.bf16.gmra.mrb[0].mxu0 %v884
    %v3800 = vpop.f32.mrb[0].mxu0
    %v3801 = vadd.f32 %v3608, %v3800
    %v3802 = vpop.f32.mrb[0].mxu0
    %v3803 = vadd.f32 %v3610, %v3802
    %v3804 = vpop.f32.mrb[0].mxu0
    %v3805 = vadd.f32 %v3612, %v3804
    %v3806 = vpop.f32.mrb[0].mxu0
    %v3807 = vadd.f32 %v3614, %v3806
    %3808 = vmatprep.mubr.bf16.mxu0 %v891
    %3809 = vmatmul.mubr.bf16.gmra.mrb[0].mxu0 %v890
    %v3810 = vpop.f32.mrb[0].mxu0
    %v3811 = vadd.f32 %v3618, %v3810
    %v3812 = vpop.f32.mrb[0].mxu0
    %v3813 = vadd.f32 %v3620, %v3812
    %v3814 = vpop.f32.mrb[0].mxu0
    %v3815 = vadd.f32 %v3622, %v3814
    %v3816 = vpop.f32.mrb[0].mxu0
    %v3817 = vadd.f32 %v3624, %v3816
    %3818 = vmatprep.mubr.bf16.mxu0 %v897
    %3819 = vmatmul.mubr.bf16.gmra.mrb[0].mxu0 %v896
    %v3820 = vpop.f32.mrb[0].mxu0
    %v3821 = vadd.f32 %v3628, %v3820
    %v3822 = vpop.f32.mrb[0].mxu0
    %v3823 = vadd.f32 %v3630, %v3822
    %v3824 = vpop.f32.mrb[0].mxu0
    %v3825 = vadd.f32 %v3632, %v3824
    %v3826 = vpop.f32.mrb[0].mxu0
    %v3827 = vadd.f32 %v3634, %v3826
    %3828 = vmatprep.mubr.bf16.mxu0 %v903
    %3829 = vmatmul.mubr.bf16.gmra.mrb[0].mxu0 %v902
    %v3830 = vpop.f32.mrb[0].mxu0
    %v3831 = vadd.f32 %v3638, %v3830
    %v3832 = vpop.f32.mrb[0].mxu0
    %v3833 = vadd.f32 %v3640, %v3832
    %v3834 = vpop.f32.mrb[0].mxu0
    %v3835 = vadd.f32 %v3642, %v3834
    %v3836 = vpop.f32.mrb[0].mxu0
    %v3837 = vadd.f32 %v3644, %v3836
    %3838 = vmatprep.mubr.bf16.mxu0 %v909
    %3839 = vmatmul.mubr.bf16.gmra.mrb[0].mxu0 %v908
    %v3840 = vpop.f32.mrb[0].mxu0
    %v3841 = vadd.f32 %v3648, %v3840
    %v3842 = vpop.f32.mrb[0].mxu0
    %v3843 = vadd.f32 %v3650, %v3842
    %v3844 = vpop.f32.mrb[0].mxu0
    %v3845 = vadd.f32 %v3652, %v3844
    %v3846 = vpop.f32.mrb[0].mxu0
    %v3847 = vadd.f32 %v3654, %v3846
    %3848 = vmatprep.mubr.bf16.mxu0 %v915
    %3849 = vmatmul.mubr.bf16.gmra.mrb[0].mxu0 %v914
    %v3850 = vpop.f32.mrb[0].mxu0
    %v3851 = vadd.f32 %v3658, %v3850
    %v3852 = vpop.f32.mrb[0].mxu0
    %v3853 = vadd.f32 %v3660, %v3852
    %v3854 = vpop.f32.mrb[0].mxu0
    %v3855 = vadd.f32 %v3662, %v3854
    %v3856 = vpop.f32.mrb[0].mxu0
    %v3857 = vadd.f32 %v3664, %v3856
    %3858 = vmatprep.mubr.bf16.mxu0 %v921
    %3859 = vmatmul.mubr.bf16.gmra.mrb[0].mxu0 %v920
    %v3860 = vpop.f32.mrb[0].mxu0
    %v3861 = vadd.f32 %v3668, %v3860
    %v3862 = vpop.f32.mrb[0].mxu0
    %v3863 = vadd.f32 %v3670, %v3862
    %v3864 = vpop.f32.mrb[0].mxu0
    %v3865 = vadd.f32 %v3672, %v3864
    %v3866 = vpop.f32.mrb[0].mxu0
    %v3867 = vadd.f32 %v3674, %v3866
    %3868 = vmatprep.mubr.bf16.mxu0 %v927
    %3869 = vmatmul.mubr.bf16.gmra.mrb[0].mxu0 %v926
    %v3870 = vpop.f32.mrb[0].mxu0
    %v3871 = vadd.f32 %v3678, %v3870
    %v3872 = vpop.f32.mrb[0].mxu0
    %v3873 = vadd.f32 %v3680, %v3872
    %v3874 = vpop.f32.mrb[0].mxu0
    %v3875 = vadd.f32 %v3682, %v3874
    %v3876 = vpop.f32.mrb[0].mxu0
    %v3877 = vadd.f32 %v3684, %v3876
    %3878 = vmatprep.mubr.bf16.mxu0 %v933
    %3879 = vmatmul.mubr.bf16.gmra.mrb[0].mxu0 %v932
    %v3880 = vpop.f32.mrb[0].mxu0
    %v3881 = vadd.f32 %v3688, %v3880
    %v3882 = vpop.f32.mrb[0].mxu0
    %v3883 = vadd.f32 %v3690, %v3882
    %v3884 = vpop.f32.mrb[0].mxu0
    %v3885 = vadd.f32 %v3692, %v3884
    %v3886 = vpop.f32.mrb[0].mxu0
    %v3887 = vadd.f32 %v3694, %v3886
    %3888 = vmatprep.mubr.bf16.mxu0 %v939
    %3889 = vmatmul.mubr.bf16.gmra.mrb[0].mxu0 %v938
    %v3890 = vpop.f32.mrb[0].mxu0
    %v3891 = vadd.f32 %v3698, %v3890
    %v3892 = vpop.f32.mrb[0].mxu0
    %v3893 = vadd.f32 %v3700, %v3892
    %v3894 = vpop.f32.mrb[0].mxu0
    %v3895 = vadd.f32 %v3702, %v3894
    %v3896 = vpop.f32.mrb[0].mxu0
    %v3897 = vadd.f32 %v3704, %v3896
    %3898 = vmatprep.mubr.bf16.mxu0 %v945
    %3899 = vmatmul.mubr.bf16.gmra.mrb[0].mxu0 %v944
    %v3900 = vpop.f32.mrb[0].mxu0
    %v3901 = vadd.f32 %v3708, %v3900
    %v3902 = vpop.f32.mrb[0].mxu0
    %v3903 = vadd.f32 %v3710, %v3902
    %v3904 = vpop.f32.mrb[0].mxu0
    %v3905 = vadd.f32 %v3712, %v3904
    %v3906 = vpop.f32.mrb[0].mxu0
    %v3907 = vadd.f32 %v3714, %v3906
    %3908 = vmatprep.mubr.bf16.mxu0 %v951
    %3909 = vmatmul.mubr.bf16.gmra.mrb[0].mxu0 %v950
    %v3910 = vpop.f32.mrb[0].mxu0
    %v3911 = vadd.f32 %v3718, %v3910
    %v3912 = vpop.f32.mrb[0].mxu0
    %v3913 = vadd.f32 %v3720, %v3912
    %v3914 = vpop.f32.mrb[0].mxu0
    %v3915 = vadd.f32 %v3722, %v3914
    %v3916 = vpop.f32.mrb[0].mxu0
    %v3917 = vadd.f32 %v3724, %v3916
    %3918 = vmatprep.mubr.bf16.mxu0 %v957
    %3919 = vmatmul.mubr.bf16.gmra.mrb[0].mxu0 %v956
    %v3920 = vpop.f32.mrb[0].mxu0
    %v3921 = vadd.f32 %v3728, %v3920
    %v3922 = vpop.f32.mrb[0].mxu0
    %v3923 = vadd.f32 %v3730, %v3922
    %v3924 = vpop.f32.mrb[0].mxu0
    %v3925 = vadd.f32 %v3732, %v3924
    %v3926 = vpop.f32.mrb[0].mxu0
    %v3927 = vadd.f32 %v3734, %v3926
    %3928 = vmatprep.mubr.bf16.mxu0 %v963
    %3929 = vmatmul.mubr.bf16.gmra.mrb[0].mxu0 %v962
    %v3930 = vpop.f32.mrb[0].mxu0
    %v3931 = vadd.f32 %v3738, %v3930
    %v3932 = vpop.f32.mrb[0].mxu0
    %v3933 = vadd.f32 %v3740, %v3932
    %v3934 = vpop.f32.mrb[0].mxu0
    %v3935 = vadd.f32 %v3742, %v3934
    %v3936 = vpop.f32.mrb[0].mxu0
    %v3937 = vadd.f32 %v3744, %v3936
    %3938 = vmatprep.mubr.bf16.mxu0 %v969
    %3939 = vmatmul.mubr.bf16.gmra.mrb[0].mxu0 %v968
    %v3940 = vpop.f32.mrb[0].mxu0
    %v3941 = vadd.f32 %v3748, %v3940
    %v3942 = vpop.f32.mrb[0].mxu0
    %v3943 = vadd.f32 %v3750, %v3942
    %v3944 = vpop.f32.mrb[0].mxu0
    %v3945 = vadd.f32 %v3752, %v3944
    %v3946 = vpop.f32.mrb[0].mxu0
    %v3947 = vadd.f32 %v3754, %v3946
    %3948 = vmatprep.mubr.bf16.mxu0 %v975
    %3949 = vmatmul.mubr.bf16.gmra.mrb[0].mxu0 %v974
    %v3950 = vpop.f32.mrb[0].mxu0
    %v3951 = vadd.f32 %v3758, %v3950
    %v3952 = vpop.f32.mrb[0].mxu0
    %v3953 = vadd.f32 %v3760, %v3952
    %v3954 = vpop.f32.mrb[0].mxu0
    %v3955 = vadd.f32 %v3762, %v3954
    %v3956 = vpop.f32.mrb[0].mxu0
    %v3957 = vadd.f32 %v3764, %v3956
    %3958 = vdwg.mxu0
    %3959 = vmatprep.subr.bf16.mxu0 %v2485
    %3960 = vmatpush1.bf16.msra.mxu0 %v2484
    %3961 = vmatprep.subr.bf16.mxu0 %v2493
    %3962 = vmatpush1.bf16.msra.mxu0 %v2492
    %3963 = vmatprep.subr.bf16.mxu0 %v2501
    %3964 = vmatpush1.bf16.msra.mxu0 %v2500
    %3965 = vmatprep.subr.bf16.mxu0 %v2509
    %3966 = vmatpush1.bf16.msra.mxu0 %v2508
    %3967 = vmatprep.subr.bf16.mxu0 %v2517
    %3968 = vmatpush1.bf16.msra.mxu0 %v2516
    %3969 = vmatprep.subr.bf16.mxu0 %v2525
    %3970 = vmatpush1.bf16.msra.mxu0 %v2524
    %3971 = vmatprep.subr.bf16.mxu0 %v2533
    %3972 = vmatpush1.bf16.msra.mxu0 %v2532
    %3973 = vmatprep.subr.bf16.mxu0 %v2541
    %3974 = vmatpush1.bf16.msra.mxu0 %v2540
    %3975 = vmatprep.subr.bf16.mxu0 %v2549
    %3976 = vmatpush1.bf16.msra.mxu0 %v2548
    %3977 = vmatprep.subr.bf16.mxu0 %v2557
    %3978 = vmatpush1.bf16.msra.mxu0 %v2556
    %3979 = vmatprep.subr.bf16.mxu0 %v2565
    %3980 = vmatpush1.bf16.msra.mxu0 %v2564
    %3981 = vmatprep.subr.bf16.mxu0 %v2573
    %3982 = vmatpush1.bf16.msra.mxu0 %v2572
    %3983 = vmatprep.subr.bf16.mxu0 %v2581
    %3984 = vmatpush1.bf16.msra.mxu0 %v2580
    %3985 = vmatprep.subr.bf16.mxu0 %v2589
    %3986 = vmatpush1.bf16.msra.mxu0 %v2588
    %3987 = vmatprep.subr.bf16.mxu0 %v2597
    %3988 = vmatpush1.bf16.msra.mxu0 %v2596
    %3989 = vmatprep.subr.bf16.mxu0 %v2605
    %3990 = vmatpush1.bf16.msra.mxu0 %v2604
    %3991 = vmatprep.mubr.bf16.mxu0 %v887
    %3992 = vmatmul.mubr.bf16.gmra.mrb[0].mxu0 %v886
    %v3993 = vpop.f32.mrb[0].mxu0
    %v3994 = vadd.f32 %v3801, %v3993
    %v3995 = vpop.f32.mrb[0].mxu0
    %v3996 = vadd.f32 %v3803, %v3995
    %v3997 = vpop.f32.mrb[0].mxu0
    %v3998 = vadd.f32 %v3805, %v3997
    %v3999 = vpop.f32.mrb[0].mxu0
    %v4000 = vadd.f32 %v3807, %v3999
    %4001 = vmatprep.mubr.bf16.mxu0 %v893
    %4002 = vmatmul.mubr.bf16.gmra.mrb[0].mxu0 %v892
    %v4003 = vpop.f32.mrb[0].mxu0
    %v4004 = vadd.f32 %v3811, %v4003
    %v4005 = vpop.f32.mrb[0].mxu0
    %v4006 = vadd.f32 %v3813, %v4005
    %v4007 = vpop.f32.mrb[0].mxu0
    %v4008 = vadd.f32 %v3815, %v4007
    %v4009 = vpop.f32.mrb[0].mxu0
    %v4010 = vadd.f32 %v3817, %v4009
    %4011 = vmatprep.mubr.bf16.mxu0 %v899
    %4012 = vmatmul.mubr.bf16.gmra.mrb[0].mxu0 %v898
    %v4013 = vpop.f32.mrb[0].mxu0
    %v4014 = vadd.f32 %v3821, %v4013
    %v4015 = vpop.f32.mrb[0].mxu0
    %v4016 = vadd.f32 %v3823, %v4015
    %v4017 = vpop.f32.mrb[0].mxu0
    %v4018 = vadd.f32 %v3825, %v4017
    %v4019 = vpop.f32.mrb[0].mxu0
    %v4020 = vadd.f32 %v3827, %v4019
    %4021 = vmatprep.mubr.bf16.mxu0 %v905
    %4022 = vmatmul.mubr.bf16.gmra.mrb[0].mxu0 %v904
    %v4023 = vpop.f32.mrb[0].mxu0
    %v4024 = vadd.f32 %v3831, %v4023
    %v4025 = vpop.f32.mrb[0].mxu0
    %v4026 = vadd.f32 %v3833, %v4025
    %v4027 = vpop.f32.mrb[0].mxu0
    %v4028 = vadd.f32 %v3835, %v4027
    %v4029 = vpop.f32.mrb[0].mxu0
    %v4030 = vadd.f32 %v3837, %v4029
    %4031 = vmatprep.mubr.bf16.mxu0 %v911
    %4032 = vmatmul.mubr.bf16.gmra.mrb[0].mxu0 %v910
    %v4033 = vpop.f32.mrb[0].mxu0
    %v4034 = vadd.f32 %v3841, %v4033
    %v4035 = vpop.f32.mrb[0].mxu0
    %v4036 = vadd.f32 %v3843, %v4035
    %v4037 = vpop.f32.mrb[0].mxu0
    %v4038 = vadd.f32 %v3845, %v4037
    %v4039 = vpop.f32.mrb[0].mxu0
    %v4040 = vadd.f32 %v3847, %v4039
    %4041 = vmatprep.mubr.bf16.mxu0 %v917
    %4042 = vmatmul.mubr.bf16.gmra.mrb[0].mxu0 %v916
    %v4043 = vpop.f32.mrb[0].mxu0
    %v4044 = vadd.f32 %v3851, %v4043
    %v4045 = vpop.f32.mrb[0].mxu0
    %v4046 = vadd.f32 %v3853, %v4045
    %v4047 = vpop.f32.mrb[0].mxu0
    %v4048 = vadd.f32 %v3855, %v4047
    %v4049 = vpop.f32.mrb[0].mxu0
    %v4050 = vadd.f32 %v3857, %v4049
    %4051 = vmatprep.mubr.bf16.mxu0 %v923
    %4052 = vmatmul.mubr.bf16.gmra.mrb[0].mxu0 %v922
    %v4053 = vpop.f32.mrb[0].mxu0
    %v4054 = vadd.f32 %v3861, %v4053
    %v4055 = vpop.f32.mrb[0].mxu0
    %v4056 = vadd.f32 %v3863, %v4055
    %v4057 = vpop.f32.mrb[0].mxu0
    %v4058 = vadd.f32 %v3865, %v4057
    %v4059 = vpop.f32.mrb[0].mxu0
    %v4060 = vadd.f32 %v3867, %v4059
    %4061 = vmatprep.mubr.bf16.mxu0 %v929
    %4062 = vmatmul.mubr.bf16.gmra.mrb[0].mxu0 %v928
    %v4063 = vpop.f32.mrb[0].mxu0
    %v4064 = vadd.f32 %v3871, %v4063
    %v4065 = vpop.f32.mrb[0].mxu0
    %v4066 = vadd.f32 %v3873, %v4065
    %v4067 = vpop.f32.mrb[0].mxu0
    %v4068 = vadd.f32 %v3875, %v4067
    %v4069 = vpop.f32.mrb[0].mxu0
    %v4070 = vadd.f32 %v3877, %v4069
    %4071 = vmatprep.mubr.bf16.mxu0 %v935
    %4072 = vmatmul.mubr.bf16.gmra.mrb[0].mxu0 %v934
    %v4073 = vpop.f32.mrb[0].mxu0
    %v4074 = vadd.f32 %v3881, %v4073
    %v4075 = vpop.f32.mrb[0].mxu0
    %v4076 = vadd.f32 %v3883, %v4075
    %v4077 = vpop.f32.mrb[0].mxu0
    %v4078 = vadd.f32 %v3885, %v4077
    %v4079 = vpop.f32.mrb[0].mxu0
    %v4080 = vadd.f32 %v3887, %v4079
    %4081 = vmatprep.mubr.bf16.mxu0 %v941
    %4082 = vmatmul.mubr.bf16.gmra.mrb[0].mxu0 %v940
    %v4083 = vpop.f32.mrb[0].mxu0
    %v4084 = vadd.f32 %v3891, %v4083
    %v4085 = vpop.f32.mrb[0].mxu0
    %v4086 = vadd.f32 %v3893, %v4085
    %v4087 = vpop.f32.mrb[0].mxu0
    %v4088 = vadd.f32 %v3895, %v4087
    %v4089 = vpop.f32.mrb[0].mxu0
    %v4090 = vadd.f32 %v3897, %v4089
    %4091 = vmatprep.mubr.bf16.mxu0 %v947
    %4092 = vmatmul.mubr.bf16.gmra.mrb[0].mxu0 %v946
    %v4093 = vpop.f32.mrb[0].mxu0
    %v4094 = vadd.f32 %v3901, %v4093
    %v4095 = vpop.f32.mrb[0].mxu0
    %v4096 = vadd.f32 %v3903, %v4095
    %v4097 = vpop.f32.mrb[0].mxu0
    %v4098 = vadd.f32 %v3905, %v4097
    %v4099 = vpop.f32.mrb[0].mxu0
    %v4100 = vadd.f32 %v3907, %v4099
    %4101 = vmatprep.mubr.bf16.mxu0 %v953
    %4102 = vmatmul.mubr.bf16.gmra.mrb[0].mxu0 %v952
    %v4103 = vpop.f32.mrb[0].mxu0
    %v4104 = vadd.f32 %v3911, %v4103
    %v4105 = vpop.f32.mrb[0].mxu0
    %v4106 = vadd.f32 %v3913, %v4105
    %v4107 = vpop.f32.mrb[0].mxu0
    %v4108 = vadd.f32 %v3915, %v4107
    %v4109 = vpop.f32.mrb[0].mxu0
    %v4110 = vadd.f32 %v3917, %v4109
    %4111 = vmatprep.mubr.bf16.mxu0 %v959
    %4112 = vmatmul.mubr.bf16.gmra.mrb[0].mxu0 %v958
    %v4113 = vpop.f32.mrb[0].mxu0
    %v4114 = vadd.f32 %v3921, %v4113
    %v4115 = vpop.f32.mrb[0].mxu0
    %v4116 = vadd.f32 %v3923, %v4115
    %v4117 = vpop.f32.mrb[0].mxu0
    %v4118 = vadd.f32 %v3925, %v4117
    %v4119 = vpop.f32.mrb[0].mxu0
    %v4120 = vadd.f32 %v3927, %v4119
    %4121 = vmatprep.mubr.bf16.mxu0 %v965
    %4122 = vmatmul.mubr.bf16.gmra.mrb[0].mxu0 %v964
    %v4123 = vpop.f32.mrb[0].mxu0
    %v4124 = vadd.f32 %v3931, %v4123
    %v4125 = vpop.f32.mrb[0].mxu0
    %v4126 = vadd.f32 %v3933, %v4125
    %v4127 = vpop.f32.mrb[0].mxu0
    %v4128 = vadd.f32 %v3935, %v4127
    %v4129 = vpop.f32.mrb[0].mxu0
    %v4130 = vadd.f32 %v3937, %v4129
    %4131 = vmatprep.mubr.bf16.mxu0 %v971
    %4132 = vmatmul.mubr.bf16.gmra.mrb[0].mxu0 %v970
    %v4133 = vpop.f32.mrb[0].mxu0
    %v4134 = vadd.f32 %v3941, %v4133
    %v4135 = vpop.f32.mrb[0].mxu0
    %v4136 = vadd.f32 %v3943, %v4135
    %v4137 = vpop.f32.mrb[0].mxu0
    %v4138 = vadd.f32 %v3945, %v4137
    %v4139 = vpop.f32.mrb[0].mxu0
    %v4140 = vadd.f32 %v3947, %v4139
    %4141 = vmatprep.mubr.bf16.mxu0 %v977
    %4142 = vmatmul.mubr.bf16.gmra.mrb[0].mxu0 %v976
    %v4143 = vpop.f32.mrb[0].mxu0
    %v4144 = vadd.f32 %v3951, %v4143
    %v4145 = vpop.f32.mrb[0].mxu0
    %v4146 = vadd.f32 %v3953, %v4145
    %v4147 = vpop.f32.mrb[0].mxu0
    %v4148 = vadd.f32 %v3955, %v4147
    %v4149 = vpop.f32.mrb[0].mxu0
    %v4150 = vadd.f32 %v3957, %v4149
    %4151 = vdwg.mxu0
    %4152 = vmatprep.subr.bf16.mxu0 %v2231
    %4153 = vmatpush1.bf16.msra.mxu0 %v2230
    %4154 = vmatprep.subr.bf16.mxu0 %v2239
    %4155 = vmatpush1.bf16.msra.mxu0 %v2238
    %4156 = vmatprep.subr.bf16.mxu0 %v2247
    %4157 = vmatpush1.bf16.msra.mxu0 %v2246
    %4158 = vmatprep.subr.bf16.mxu0 %v2255
    %4159 = vmatpush1.bf16.msra.mxu0 %v2254
    %4160 = vmatprep.subr.bf16.mxu0 %v2263
    %4161 = vmatpush1.bf16.msra.mxu0 %v2262
    %4162 = vmatprep.subr.bf16.mxu0 %v2271
    %4163 = vmatpush1.bf16.msra.mxu0 %v2270
    %4164 = vmatprep.subr.bf16.mxu0 %v2279
    %4165 = vmatpush1.bf16.msra.mxu0 %v2278
    %4166 = vmatprep.subr.bf16.mxu0 %v2287
    %4167 = vmatpush1.bf16.msra.mxu0 %v2286
    %4168 = vmatprep.subr.bf16.mxu0 %v2295
    %4169 = vmatpush1.bf16.msra.mxu0 %v2294
    %4170 = vmatprep.subr.bf16.mxu0 %v2303
    %4171 = vmatpush1.bf16.msra.mxu0 %v2302
    %4172 = vmatprep.subr.bf16.mxu0 %v2311
    %4173 = vmatpush1.bf16.msra.mxu0 %v2310
    %4174 = vmatprep.subr.bf16.mxu0 %v2319
    %4175 = vmatpush1.bf16.msra.mxu0 %v2318
    %4176 = vmatprep.subr.bf16.mxu0 %v2327
    %4177 = vmatpush1.bf16.msra.mxu0 %v2326
    %4178 = vmatprep.subr.bf16.mxu0 %v2335
    %4179 = vmatpush1.bf16.msra.mxu0 %v2334
    %4180 = vmatprep.subr.bf16.mxu0 %v2343
    %4181 = vmatpush1.bf16.msra.mxu0 %v2342
    %4182 = vmatprep.subr.bf16.mxu0 %v2351
    %4183 = vmatpush1.bf16.msra.mxu0 %v2350
    %4184 = vmatprep.mubr.bf16.mxu0 %v883
    %4185 = vmatmul.mubr.bf16.gmra.mrb[0].mxu0 %v882
    %v4186 = vpop.f32.mrb[0].mxu0
    %v4187 = vadd.f32 %v573, %v4186
    %v4188 = vpop.f32.mrb[0].mxu0
    %v4189 = vadd.f32 %v577, %v4188
    %v4190 = vpop.f32.mrb[0].mxu0
    %v4191 = vadd.f32 %v573, %v4190
    %v4192 = vpop.f32.mrb[0].mxu0
    %v4193 = vadd.f32 %v577, %v4192
    %4194 = vmatprep.mubr.bf16.mxu0 %v889
    %4195 = vmatmul.mubr.bf16.gmra.mrb[0].mxu0 %v888
    %v4196 = vpop.f32.mrb[0].mxu0
    %v4197 = vadd.f32 %v573, %v4196
    %v4198 = vpop.f32.mrb[0].mxu0
    %v4199 = vadd.f32 %v577, %v4198
    %v4200 = vpop.f32.mrb[0].mxu0
    %v4201 = vadd.f32 %v573, %v4200
    %v4202 = vpop.f32.mrb[0].mxu0
    %v4203 = vadd.f32 %v577, %v4202
    %4204 = vmatprep.mubr.bf16.mxu0 %v895
    %4205 = vmatmul.mubr.bf16.gmra.mrb[0].mxu0 %v894
    %v4206 = vpop.f32.mrb[0].mxu0
    %v4207 = vadd.f32 %v573, %v4206
    %v4208 = vpop.f32.mrb[0].mxu0
    %v4209 = vadd.f32 %v577, %v4208
    %v4210 = vpop.f32.mrb[0].mxu0
    %v4211 = vadd.f32 %v573, %v4210
    %v4212 = vpop.f32.mrb[0].mxu0
    %v4213 = vadd.f32 %v577, %v4212
    %4214 = vmatprep.mubr.bf16.mxu0 %v901
    %4215 = vmatmul.mubr.bf16.gmra.mrb[0].mxu0 %v900
    %v4216 = vpop.f32.mrb[0].mxu0
    %v4217 = vadd.f32 %v573, %v4216
    %v4218 = vpop.f32.mrb[0].mxu0
    %v4219 = vadd.f32 %v577, %v4218
    %v4220 = vpop.f32.mrb[0].mxu0
    %v4221 = vadd.f32 %v573, %v4220
    %v4222 = vpop.f32.mrb[0].mxu0
    %v4223 = vadd.f32 %v577, %v4222
    %4224 = vmatprep.mubr.bf16.mxu0 %v907
    %4225 = vmatmul.mubr.bf16.gmra.mrb[0].mxu0 %v906
    %v4226 = vpop.f32.mrb[0].mxu0
    %v4227 = vadd.f32 %v573, %v4226
    %v4228 = vpop.f32.mrb[0].mxu0
    %v4229 = vadd.f32 %v577, %v4228
    %v4230 = vpop.f32.mrb[0].mxu0
    %v4231 = vadd.f32 %v573, %v4230
    %v4232 = vpop.f32.mrb[0].mxu0
    %v4233 = vadd.f32 %v577, %v4232
    %4234 = vmatprep.mubr.bf16.mxu0 %v913
    %4235 = vmatmul.mubr.bf16.gmra.mrb[0].mxu0 %v912
    %v4236 = vpop.f32.mrb[0].mxu0
    %v4237 = vadd.f32 %v573, %v4236
    %v4238 = vpop.f32.mrb[0].mxu0
    %v4239 = vadd.f32 %v577, %v4238
    %v4240 = vpop.f32.mrb[0].mxu0
    %v4241 = vadd.f32 %v573, %v4240
    %v4242 = vpop.f32.mrb[0].mxu0
    %v4243 = vadd.f32 %v577, %v4242
    %4244 = vmatprep.mubr.bf16.mxu0 %v919
    %4245 = vmatmul.mubr.bf16.gmra.mrb[0].mxu0 %v918
    %v4246 = vpop.f32.mrb[0].mxu0
    %v4247 = vadd.f32 %v573, %v4246
    %v4248 = vpop.f32.mrb[0].mxu0
    %v4249 = vadd.f32 %v577, %v4248
    %v4250 = vpop.f32.mrb[0].mxu0
    %v4251 = vadd.f32 %v573, %v4250
    %v4252 = vpop.f32.mrb[0].mxu0
    %v4253 = vadd.f32 %v577, %v4252
    %4254 = vmatprep.mubr.bf16.mxu0 %v925
    %4255 = vmatmul.mubr.bf16.gmra.mrb[0].mxu0 %v924
    %v4256 = vpop.f32.mrb[0].mxu0
    %v4257 = vadd.f32 %v573, %v4256
    %v4258 = vpop.f32.mrb[0].mxu0
    %v4259 = vadd.f32 %v577, %v4258
    %v4260 = vpop.f32.mrb[0].mxu0
    %v4261 = vadd.f32 %v573, %v4260
    %v4262 = vpop.f32.mrb[0].mxu0
    %v4263 = vadd.f32 %v577, %v4262
    %4264 = vmatprep.mubr.bf16.mxu0 %v931
    %4265 = vmatmul.mubr.bf16.gmra.mrb[0].mxu0 %v930
    %v4266 = vpop.f32.mrb[0].mxu0
    %v4267 = vadd.f32 %v573, %v4266
    %v4268 = vpop.f32.mrb[0].mxu0
    %v4269 = vadd.f32 %v577, %v4268
    %v4270 = vpop.f32.mrb[0].mxu0
    %v4271 = vadd.f32 %v573, %v4270
    %v4272 = vpop.f32.mrb[0].mxu0
    %v4273 = vadd.f32 %v577, %v4272
    %4274 = vmatprep.mubr.bf16.mxu0 %v937
    %4275 = vmatmul.mubr.bf16.gmra.mrb[0].mxu0 %v936
    %v4276 = vpop.f32.mrb[0].mxu0
    %v4277 = vadd.f32 %v573, %v4276
    %v4278 = vpop.f32.mrb[0].mxu0
    %v4279 = vadd.f32 %v577, %v4278
    %v4280 = vpop.f32.mrb[0].mxu0
    %v4281 = vadd.f32 %v573, %v4280
    %v4282 = vpop.f32.mrb[0].mxu0
    %v4283 = vadd.f32 %v577, %v4282
    %4284 = vmatprep.mubr.bf16.mxu0 %v943
    %4285 = vmatmul.mubr.bf16.gmra.mrb[0].mxu0 %v942
    %v4286 = vpop.f32.mrb[0].mxu0
    %v4287 = vadd.f32 %v573, %v4286
    %v4288 = vpop.f32.mrb[0].mxu0
    %v4289 = vadd.f32 %v577, %v4288
    %v4290 = vpop.f32.mrb[0].mxu0
    %v4291 = vadd.f32 %v573, %v4290
    %v4292 = vpop.f32.mrb[0].mxu0
    %v4293 = vadd.f32 %v577, %v4292
    %4294 = vmatprep.mubr.bf16.mxu0 %v949
    %4295 = vmatmul.mubr.bf16.gmra.mrb[0].mxu0 %v948
    %v4296 = vpop.f32.mrb[0].mxu0
    %v4297 = vadd.f32 %v573, %v4296
    %v4298 = vpop.f32.mrb[0].mxu0
    %v4299 = vadd.f32 %v577, %v4298
    %v4300 = vpop.f32.mrb[0].mxu0
    %v4301 = vadd.f32 %v573, %v4300
    %v4302 = vpop.f32.mrb[0].mxu0
    %v4303 = vadd.f32 %v577, %v4302
    %4304 = vmatprep.mubr.bf16.mxu0 %v955
    %4305 = vmatmul.mubr.bf16.gmra.mrb[0].mxu0 %v954
    %v4306 = vpop.f32.mrb[0].mxu0
    %v4307 = vadd.f32 %v573, %v4306
    %v4308 = vpop.f32.mrb[0].mxu0
    %v4309 = vadd.f32 %v577, %v4308
    %v4310 = vpop.f32.mrb[0].mxu0
    %v4311 = vadd.f32 %v573, %v4310
    %v4312 = vpop.f32.mrb[0].mxu0
    %v4313 = vadd.f32 %v577, %v4312
    %4314 = vmatprep.mubr.bf16.mxu0 %v961
    %4315 = vmatmul.mubr.bf16.gmra.mrb[0].mxu0 %v960
    %v4316 = vpop.f32.mrb[0].mxu0
    %v4317 = vadd.f32 %v573, %v4316
    %v4318 = vpop.f32.mrb[0].mxu0
    %v4319 = vadd.f32 %v577, %v4318
    %v4320 = vpop.f32.mrb[0].mxu0
    %v4321 = vadd.f32 %v573, %v4320
    %v4322 = vpop.f32.mrb[0].mxu0
    %v4323 = vadd.f32 %v577, %v4322
    %4324 = vmatprep.mubr.bf16.mxu0 %v967
    %4325 = vmatmul.mubr.bf16.gmra.mrb[0].mxu0 %v966
    %v4326 = vpop.f32.mrb[0].mxu0
    %v4327 = vadd.f32 %v573, %v4326
    %v4328 = vpop.f32.mrb[0].mxu0
    %v4329 = vadd.f32 %v577, %v4328
    %v4330 = vpop.f32.mrb[0].mxu0
    %v4331 = vadd.f32 %v573, %v4330
    %v4332 = vpop.f32.mrb[0].mxu0
    %v4333 = vadd.f32 %v577, %v4332
    %4334 = vmatprep.mubr.bf16.mxu0 %v973
    %4335 = vmatmul.mubr.bf16.gmra.mrb[0].mxu0 %v972
    %v4336 = vpop.f32.mrb[0].mxu0
    %v4337 = vadd.f32 %v573, %v4336
    %v4338 = vpop.f32.mrb[0].mxu0
    %v4339 = vadd.f32 %v577, %v4338
    %v4340 = vpop.f32.mrb[0].mxu0
    %v4341 = vadd.f32 %v573, %v4340
    %v4342 = vpop.f32.mrb[0].mxu0
    %v4343 = vadd.f32 %v577, %v4342
    %4344 = vdwg.mxu0
    %4345 = vmatprep.subr.bf16.mxu0 %v2359
    %4346 = vmatpush1.bf16.msra.mxu0 %v2358
    %4347 = vmatprep.subr.bf16.mxu0 %v2367
    %4348 = vmatpush1.bf16.msra.mxu0 %v2366
    %4349 = vmatprep.subr.bf16.mxu0 %v2375
    %4350 = vmatpush1.bf16.msra.mxu0 %v2374
    %4351 = vmatprep.subr.bf16.mxu0 %v2383
    %4352 = vmatpush1.bf16.msra.mxu0 %v2382
    %4353 = vmatprep.subr.bf16.mxu0 %v2391
    %4354 = vmatpush1.bf16.msra.mxu0 %v2390
    %4355 = vmatprep.subr.bf16.mxu0 %v2399
    %4356 = vmatpush1.bf16.msra.mxu0 %v2398
    %4357 = vmatprep.subr.bf16.mxu0 %v2407
    %4358 = vmatpush1.bf16.msra.mxu0 %v2406
    %4359 = vmatprep.subr.bf16.mxu0 %v2415
    %4360 = vmatpush1.bf16.msra.mxu0 %v2414
    %4361 = vmatprep.subr.bf16.mxu0 %v2423
    %4362 = vmatpush1.bf16.msra.mxu0 %v2422
    %4363 = vmatprep.subr.bf16.mxu0 %v2431
    %4364 = vmatpush1.bf16.msra.mxu0 %v2430
    %4365 = vmatprep.subr.bf16.mxu0 %v2439
    %4366 = vmatpush1.bf16.msra.mxu0 %v2438
    %4367 = vmatprep.subr.bf16.mxu0 %v2447
    %4368 = vmatpush1.bf16.msra.mxu0 %v2446
    %4369 = vmatprep.subr.bf16.mxu0 %v2455
    %4370 = vmatpush1.bf16.msra.mxu0 %v2454
    %4371 = vmatprep.subr.bf16.mxu0 %v2463
    %4372 = vmatpush1.bf16.msra.mxu0 %v2462
    %4373 = vmatprep.subr.bf16.mxu0 %v2471
    %4374 = vmatpush1.bf16.msra.mxu0 %v2470
    %4375 = vmatprep.subr.bf16.mxu0 %v2479
    %4376 = vmatpush1.bf16.msra.mxu0 %v2478
    %4377 = vmatprep.mubr.bf16.mxu0 %v885
    %4378 = vmatmul.mubr.bf16.gmra.mrb[0].mxu0 %v884
    %v4379 = vpop.f32.mrb[0].mxu0
    %v4380 = vadd.f32 %v4187, %v4379
    %v4381 = vpop.f32.mrb[0].mxu0
    %v4382 = vadd.f32 %v4189, %v4381
    %v4383 = vpop.f32.mrb[0].mxu0
    %v4384 = vadd.f32 %v4191, %v4383
    %v4385 = vpop.f32.mrb[0].mxu0
    %v4386 = vadd.f32 %v4193, %v4385
    %4387 = vmatprep.mubr.bf16.mxu0 %v891
    %4388 = vmatmul.mubr.bf16.gmra.mrb[0].mxu0 %v890
    %v4389 = vpop.f32.mrb[0].mxu0
    %v4390 = vadd.f32 %v4197, %v4389
    %v4391 = vpop.f32.mrb[0].mxu0
    %v4392 = vadd.f32 %v4199, %v4391
    %v4393 = vpop.f32.mrb[0].mxu0
    %v4394 = vadd.f32 %v4201, %v4393
    %v4395 = vpop.f32.mrb[0].mxu0
    %v4396 = vadd.f32 %v4203, %v4395
    %4397 = vmatprep.mubr.bf16.mxu0 %v897
    %4398 = vmatmul.mubr.bf16.gmra.mrb[0].mxu0 %v896
    %v4399 = vpop.f32.mrb[0].mxu0
    %v4400 = vadd.f32 %v4207, %v4399
    %v4401 = vpop.f32.mrb[0].mxu0
    %v4402 = vadd.f32 %v4209, %v4401
    %v4403 = vpop.f32.mrb[0].mxu0
    %v4404 = vadd.f32 %v4211, %v4403
    %v4405 = vpop.f32.mrb[0].mxu0
    %v4406 = vadd.f32 %v4213, %v4405
    %4407 = vmatprep.mubr.bf16.mxu0 %v903
    %4408 = vmatmul.mubr.bf16.gmra.mrb[0].mxu0 %v902
    %v4409 = vpop.f32.mrb[0].mxu0
    %v4410 = vadd.f32 %v4217, %v4409
    %v4411 = vpop.f32.mrb[0].mxu0
    %v4412 = vadd.f32 %v4219, %v4411
    %v4413 = vpop.f32.mrb[0].mxu0
    %v4414 = vadd.f32 %v4221, %v4413
    %v4415 = vpop.f32.mrb[0].mxu0
    %v4416 = vadd.f32 %v4223, %v4415
    %4417 = vmatprep.mubr.bf16.mxu0 %v909
    %4418 = vmatmul.mubr.bf16.gmra.mrb[0].mxu0 %v908
    %v4419 = vpop.f32.mrb[0].mxu0
    %v4420 = vadd.f32 %v4227, %v4419
    %v4421 = vpop.f32.mrb[0].mxu0
    %v4422 = vadd.f32 %v4229, %v4421
    %v4423 = vpop.f32.mrb[0].mxu0
    %v4424 = vadd.f32 %v4231, %v4423
    %v4425 = vpop.f32.mrb[0].mxu0
    %v4426 = vadd.f32 %v4233, %v4425
    %4427 = vmatprep.mubr.bf16.mxu0 %v915
    %4428 = vmatmul.mubr.bf16.gmra.mrb[0].mxu0 %v914
    %v4429 = vpop.f32.mrb[0].mxu0
    %v4430 = vadd.f32 %v4237, %v4429
    %v4431 = vpop.f32.mrb[0].mxu0
    %v4432 = vadd.f32 %v4239, %v4431
    %v4433 = vpop.f32.mrb[0].mxu0
    %v4434 = vadd.f32 %v4241, %v4433
    %v4435 = vpop.f32.mrb[0].mxu0
    %v4436 = vadd.f32 %v4243, %v4435
    %4437 = vmatprep.mubr.bf16.mxu0 %v921
    %4438 = vmatmul.mubr.bf16.gmra.mrb[0].mxu0 %v920
    %v4439 = vpop.f32.mrb[0].mxu0
    %v4440 = vadd.f32 %v4247, %v4439
    %v4441 = vpop.f32.mrb[0].mxu0
    %v4442 = vadd.f32 %v4249, %v4441
    %v4443 = vpop.f32.mrb[0].mxu0
    %v4444 = vadd.f32 %v4251, %v4443
    %v4445 = vpop.f32.mrb[0].mxu0
    %v4446 = vadd.f32 %v4253, %v4445
    %4447 = vmatprep.mubr.bf16.mxu0 %v927
    %4448 = vmatmul.mubr.bf16.gmra.mrb[0].mxu0 %v926
    %v4449 = vpop.f32.mrb[0].mxu0
    %v4450 = vadd.f32 %v4257, %v4449
    %v4451 = vpop.f32.mrb[0].mxu0
    %v4452 = vadd.f32 %v4259, %v4451
    %v4453 = vpop.f32.mrb[0].mxu0
    %v4454 = vadd.f32 %v4261, %v4453
    %v4455 = vpop.f32.mrb[0].mxu0
    %v4456 = vadd.f32 %v4263, %v4455
    %4457 = vmatprep.mubr.bf16.mxu0 %v933
    %4458 = vmatmul.mubr.bf16.gmra.mrb[0].mxu0 %v932
    %v4459 = vpop.f32.mrb[0].mxu0
    %v4460 = vadd.f32 %v4267, %v4459
    %v4461 = vpop.f32.mrb[0].mxu0
    %v4462 = vadd.f32 %v4269, %v4461
    %v4463 = vpop.f32.mrb[0].mxu0
    %v4464 = vadd.f32 %v4271, %v4463
    %v4465 = vpop.f32.mrb[0].mxu0
    %v4466 = vadd.f32 %v4273, %v4465
    %4467 = vmatprep.mubr.bf16.mxu0 %v939
    %4468 = vmatmul.mubr.bf16.gmra.mrb[0].mxu0 %v938
    %v4469 = vpop.f32.mrb[0].mxu0
    %v4470 = vadd.f32 %v4277, %v4469
    %v4471 = vpop.f32.mrb[0].mxu0
    %v4472 = vadd.f32 %v4279, %v4471
    %v4473 = vpop.f32.mrb[0].mxu0
    %v4474 = vadd.f32 %v4281, %v4473
    %v4475 = vpop.f32.mrb[0].mxu0
    %v4476 = vadd.f32 %v4283, %v4475
    %4477 = vmatprep.mubr.bf16.mxu0 %v945
    %4478 = vmatmul.mubr.bf16.gmra.mrb[0].mxu0 %v944
    %v4479 = vpop.f32.mrb[0].mxu0
    %v4480 = vadd.f32 %v4287, %v4479
    %v4481 = vpop.f32.mrb[0].mxu0
    %v4482 = vadd.f32 %v4289, %v4481
    %v4483 = vpop.f32.mrb[0].mxu0
    %v4484 = vadd.f32 %v4291, %v4483
    %v4485 = vpop.f32.mrb[0].mxu0
    %v4486 = vadd.f32 %v4293, %v4485
    %4487 = vmatprep.mubr.bf16.mxu0 %v951
    %4488 = vmatmul.mubr.bf16.gmra.mrb[0].mxu0 %v950
    %v4489 = vpop.f32.mrb[0].mxu0
    %v4490 = vadd.f32 %v4297, %v4489
    %v4491 = vpop.f32.mrb[0].mxu0
    %v4492 = vadd.f32 %v4299, %v4491
    %v4493 = vpop.f32.mrb[0].mxu0
    %v4494 = vadd.f32 %v4301, %v4493
    %v4495 = vpop.f32.mrb[0].mxu0
    %v4496 = vadd.f32 %v4303, %v4495
    %4497 = vmatprep.mubr.bf16.mxu0 %v957
    %4498 = vmatmul.mubr.bf16.gmra.mrb[0].mxu0 %v956
    %v4499 = vpop.f32.mrb[0].mxu0
    %v4500 = vadd.f32 %v4307, %v4499
    %v4501 = vpop.f32.mrb[0].mxu0
    %v4502 = vadd.f32 %v4309, %v4501
    %v4503 = vpop.f32.mrb[0].mxu0
    %v4504 = vadd.f32 %v4311, %v4503
    %v4505 = vpop.f32.mrb[0].mxu0
    %v4506 = vadd.f32 %v4313, %v4505
    %4507 = vmatprep.mubr.bf16.mxu0 %v963
    %4508 = vmatmul.mubr.bf16.gmra.mrb[0].mxu0 %v962
    %v4509 = vpop.f32.mrb[0].mxu0
    %v4510 = vadd.f32 %v4317, %v4509
    %v4511 = vpop.f32.mrb[0].mxu0
    %v4512 = vadd.f32 %v4319, %v4511
    %v4513 = vpop.f32.mrb[0].mxu0
    %v4514 = vadd.f32 %v4321, %v4513
    %v4515 = vpop.f32.mrb[0].mxu0
    %v4516 = vadd.f32 %v4323, %v4515
    %4517 = vmatprep.mubr.bf16.mxu0 %v969
    %4518 = vmatmul.mubr.bf16.gmra.mrb[0].mxu0 %v968
    %v4519 = vpop.f32.mrb[0].mxu0
    %v4520 = vadd.f32 %v4327, %v4519
    %v4521 = vpop.f32.mrb[0].mxu0
    %v4522 = vadd.f32 %v4329, %v4521
    %v4523 = vpop.f32.mrb[0].mxu0
    %v4524 = vadd.f32 %v4331, %v4523
    %v4525 = vpop.f32.mrb[0].mxu0
    %v4526 = vadd.f32 %v4333, %v4525
    %4527 = vmatprep.mubr.bf16.mxu0 %v975
    %4528 = vmatmul.mubr.bf16.gmra.mrb[0].mxu0 %v974
    %v4529 = vpop.f32.mrb[0].mxu0
    %v4530 = vadd.f32 %v4337, %v4529
    %v4531 = vpop.f32.mrb[0].mxu0
    %v4532 = vadd.f32 %v4339, %v4531
    %v4533 = vpop.f32.mrb[0].mxu0
    %v4534 = vadd.f32 %v4341, %v4533
    %v4535 = vpop.f32.mrb[0].mxu0
    %v4536 = vadd.f32 %v4343, %v4535
    %4537 = vdwg.mxu0
    %4538 = vmatprep.subr.bf16.mxu0 %v2487
    %4539 = vmatpush1.bf16.msra.mxu0 %v2486
    %4540 = vmatprep.subr.bf16.mxu0 %v2495
    %4541 = vmatpush1.bf16.msra.mxu0 %v2494
    %4542 = vmatprep.subr.bf16.mxu0 %v2503
    %4543 = vmatpush1.bf16.msra.mxu0 %v2502
    %4544 = vmatprep.subr.bf16.mxu0 %v2511
    %4545 = vmatpush1.bf16.msra.mxu0 %v2510
    %4546 = vmatprep.subr.bf16.mxu0 %v2519
    %4547 = vmatpush1.bf16.msra.mxu0 %v2518
    %4548 = vmatprep.subr.bf16.mxu0 %v2527
    %4549 = vmatpush1.bf16.msra.mxu0 %v2526
    %4550 = vmatprep.subr.bf16.mxu0 %v2535
    %4551 = vmatpush1.bf16.msra.mxu0 %v2534
    %4552 = vmatprep.subr.bf16.mxu0 %v2543
    %4553 = vmatpush1.bf16.msra.mxu0 %v2542
    %4554 = vmatprep.subr.bf16.mxu0 %v2551
    %4555 = vmatpush1.bf16.msra.mxu0 %v2550
    %4556 = vmatprep.subr.bf16.mxu0 %v2559
    %4557 = vmatpush1.bf16.msra.mxu0 %v2558
    %4558 = vmatprep.subr.bf16.mxu0 %v2567
    %4559 = vmatpush1.bf16.msra.mxu0 %v2566
    %4560 = vmatprep.subr.bf16.mxu0 %v2575
    %4561 = vmatpush1.bf16.msra.mxu0 %v2574
    %4562 = vmatprep.subr.bf16.mxu0 %v2583
    %4563 = vmatpush1.bf16.msra.mxu0 %v2582
    %4564 = vmatprep.subr.bf16.mxu0 %v2591
    %4565 = vmatpush1.bf16.msra.mxu0 %v2590
    %4566 = vmatprep.subr.bf16.mxu0 %v2599
    %4567 = vmatpush1.bf16.msra.mxu0 %v2598
    %4568 = vmatprep.subr.bf16.mxu0 %v2607
    %4569 = vmatpush1.bf16.msra.mxu0 %v2606
    %4570 = vmatprep.mubr.bf16.mxu0 %v887
    %4571 = vmatmul.mubr.bf16.gmra.mrb[0].mxu0 %v886
    %v4572 = vpop.f32.mrb[0].mxu0
    %v4573 = vadd.f32 %v4380, %v4572
    %v4574 = vpop.f32.mrb[0].mxu0
    %v4575 = vadd.f32 %v4382, %v4574
    %v4576 = vpop.f32.mrb[0].mxu0
    %v4577 = vadd.f32 %v4384, %v4576
    %v4578 = vpop.f32.mrb[0].mxu0
    %v4579 = vadd.f32 %v4386, %v4578
    %4580 = vmatprep.mubr.bf16.mxu0 %v893
    %4581 = vmatmul.mubr.bf16.gmra.mrb[0].mxu0 %v892
    %v4582 = vpop.f32.mrb[0].mxu0
    %v4583 = vadd.f32 %v4390, %v4582
    %v4584 = vpop.f32.mrb[0].mxu0
    %v4585 = vadd.f32 %v4392, %v4584
    %v4586 = vpop.f32.mrb[0].mxu0
    %v4587 = vadd.f32 %v4394, %v4586
    %v4588 = vpop.f32.mrb[0].mxu0
    %v4589 = vadd.f32 %v4396, %v4588
    %4590 = vmatprep.mubr.bf16.mxu0 %v899
    %4591 = vmatmul.mubr.bf16.gmra.mrb[0].mxu0 %v898
    %v4592 = vpop.f32.mrb[0].mxu0
    %v4593 = vadd.f32 %v4400, %v4592
    %v4594 = vpop.f32.mrb[0].mxu0
    %v4595 = vadd.f32 %v4402, %v4594
    %v4596 = vpop.f32.mrb[0].mxu0
    %v4597 = vadd.f32 %v4404, %v4596
    %v4598 = vpop.f32.mrb[0].mxu0
    %v4599 = vadd.f32 %v4406, %v4598
    %4600 = vmatprep.mubr.bf16.mxu0 %v905
    %4601 = vmatmul.mubr.bf16.gmra.mrb[0].mxu0 %v904
    %v4602 = vpop.f32.mrb[0].mxu0
    %v4603 = vadd.f32 %v4410, %v4602
    %v4604 = vpop.f32.mrb[0].mxu0
    %v4605 = vadd.f32 %v4412, %v4604
    %v4606 = vpop.f32.mrb[0].mxu0
    %v4607 = vadd.f32 %v4414, %v4606
    %v4608 = vpop.f32.mrb[0].mxu0
    %v4609 = vadd.f32 %v4416, %v4608
    %4610 = vmatprep.mubr.bf16.mxu0 %v911
    %4611 = vmatmul.mubr.bf16.gmra.mrb[0].mxu0 %v910
    %v4612 = vpop.f32.mrb[0].mxu0
    %v4613 = vadd.f32 %v4420, %v4612
    %v4614 = vpop.f32.mrb[0].mxu0
    %v4615 = vadd.f32 %v4422, %v4614
    %v4616 = vpop.f32.mrb[0].mxu0
    %v4617 = vadd.f32 %v4424, %v4616
    %v4618 = vpop.f32.mrb[0].mxu0
    %v4619 = vadd.f32 %v4426, %v4618
    %4620 = vmatprep.mubr.bf16.mxu0 %v917
    %4621 = vmatmul.mubr.bf16.gmra.mrb[0].mxu0 %v916
    %v4622 = vpop.f32.mrb[0].mxu0
    %v4623 = vadd.f32 %v4430, %v4622
    %v4624 = vpop.f32.mrb[0].mxu0
    %v4625 = vadd.f32 %v4432, %v4624
    %v4626 = vpop.f32.mrb[0].mxu0
    %v4627 = vadd.f32 %v4434, %v4626
    %v4628 = vpop.f32.mrb[0].mxu0
    %v4629 = vadd.f32 %v4436, %v4628
    %4630 = vmatprep.mubr.bf16.mxu0 %v923
    %4631 = vmatmul.mubr.bf16.gmra.mrb[0].mxu0 %v922
    %v4632 = vpop.f32.mrb[0].mxu0
    %v4633 = vadd.f32 %v4440, %v4632
    %v4634 = vpop.f32.mrb[0].mxu0
    %v4635 = vadd.f32 %v4442, %v4634
    %v4636 = vpop.f32.mrb[0].mxu0
    %v4637 = vadd.f32 %v4444, %v4636
    %v4638 = vpop.f32.mrb[0].mxu0
    %v4639 = vadd.f32 %v4446, %v4638
    %4640 = vmatprep.mubr.bf16.mxu0 %v929
    %4641 = vmatmul.mubr.bf16.gmra.mrb[0].mxu0 %v928
    %v4642 = vpop.f32.mrb[0].mxu0
    %v4643 = vadd.f32 %v4450, %v4642
    %v4644 = vpop.f32.mrb[0].mxu0
    %v4645 = vadd.f32 %v4452, %v4644
    %v4646 = vpop.f32.mrb[0].mxu0
    %v4647 = vadd.f32 %v4454, %v4646
    %v4648 = vpop.f32.mrb[0].mxu0
    %v4649 = vadd.f32 %v4456, %v4648
    %4650 = vmatprep.mubr.bf16.mxu0 %v935
    %4651 = vmatmul.mubr.bf16.gmra.mrb[0].mxu0 %v934
    %v4652 = vpop.f32.mrb[0].mxu0
    %v4653 = vadd.f32 %v4460, %v4652
    %v4654 = vpop.f32.mrb[0].mxu0
    %v4655 = vadd.f32 %v4462, %v4654
    %v4656 = vpop.f32.mrb[0].mxu0
    %v4657 = vadd.f32 %v4464, %v4656
    %v4658 = vpop.f32.mrb[0].mxu0
    %v4659 = vadd.f32 %v4466, %v4658
    %4660 = vmatprep.mubr.bf16.mxu0 %v941
    %4661 = vmatmul.mubr.bf16.gmra.mrb[0].mxu0 %v940
    %v4662 = vpop.f32.mrb[0].mxu0
    %v4663 = vadd.f32 %v4470, %v4662
    %v4664 = vpop.f32.mrb[0].mxu0
    %v4665 = vadd.f32 %v4472, %v4664
    %v4666 = vpop.f32.mrb[0].mxu0
    %v4667 = vadd.f32 %v4474, %v4666
    %v4668 = vpop.f32.mrb[0].mxu0
    %v4669 = vadd.f32 %v4476, %v4668
    %4670 = vmatprep.mubr.bf16.mxu0 %v947
    %4671 = vmatmul.mubr.bf16.gmra.mrb[0].mxu0 %v946
    %v4672 = vpop.f32.mrb[0].mxu0
    %v4673 = vadd.f32 %v4480, %v4672
    %v4674 = vpop.f32.mrb[0].mxu0
    %v4675 = vadd.f32 %v4482, %v4674
    %v4676 = vpop.f32.mrb[0].mxu0
    %v4677 = vadd.f32 %v4484, %v4676
    %v4678 = vpop.f32.mrb[0].mxu0
    %v4679 = vadd.f32 %v4486, %v4678
    %4680 = vmatprep.mubr.bf16.mxu0 %v953
    %4681 = vmatmul.mubr.bf16.gmra.mrb[0].mxu0 %v952
    %v4682 = vpop.f32.mrb[0].mxu0
    %v4683 = vadd.f32 %v4490, %v4682
    %v4684 = vpop.f32.mrb[0].mxu0
    %v4685 = vadd.f32 %v4492, %v4684
    %v4686 = vpop.f32.mrb[0].mxu0
    %v4687 = vadd.f32 %v4494, %v4686
    %v4688 = vpop.f32.mrb[0].mxu0
    %v4689 = vadd.f32 %v4496, %v4688
    %4690 = vmatprep.mubr.bf16.mxu0 %v959
    %4691 = vmatmul.mubr.bf16.gmra.mrb[0].mxu0 %v958
    %v4692 = vpop.f32.mrb[0].mxu0
    %v4693 = vadd.f32 %v4500, %v4692
    %v4694 = vpop.f32.mrb[0].mxu0
    %v4695 = vadd.f32 %v4502, %v4694
    %v4696 = vpop.f32.mrb[0].mxu0
    %v4697 = vadd.f32 %v4504, %v4696
    %v4698 = vpop.f32.mrb[0].mxu0
    %v4699 = vadd.f32 %v4506, %v4698
    %4700 = vmatprep.mubr.bf16.mxu0 %v965
    %4701 = vmatmul.mubr.bf16.gmra.mrb[0].mxu0 %v964
    %v4702 = vpop.f32.mrb[0].mxu0
    %v4703 = vadd.f32 %v4510, %v4702
    %v4704 = vpop.f32.mrb[0].mxu0
    %v4705 = vadd.f32 %v4512, %v4704
    %v4706 = vpop.f32.mrb[0].mxu0
    %v4707 = vadd.f32 %v4514, %v4706
    %v4708 = vpop.f32.mrb[0].mxu0
    %v4709 = vadd.f32 %v4516, %v4708
    %4710 = vmatprep.mubr.bf16.mxu0 %v971
    %4711 = vmatmul.mubr.bf16.gmra.mrb[0].mxu0 %v970
    %v4712 = vpop.f32.mrb[0].mxu0
    %v4713 = vadd.f32 %v4520, %v4712
    %v4714 = vpop.f32.mrb[0].mxu0
    %v4715 = vadd.f32 %v4522, %v4714
    %v4716 = vpop.f32.mrb[0].mxu0
    %v4717 = vadd.f32 %v4524, %v4716
    %v4718 = vpop.f32.mrb[0].mxu0
    %v4719 = vadd.f32 %v4526, %v4718
    %4720 = vmatprep.mubr.bf16.mxu0 %v977
    %4721 = vmatmul.mubr.bf16.gmra.mrb[0].mxu0 %v976
    %v4722 = vpop.f32.mrb[0].mxu0
    %v4723 = vadd.f32 %v4530, %v4722
    %v4724 = vpop.f32.mrb[0].mxu0
    %v4725 = vadd.f32 %v4532, %v4724
    %v4726 = vpop.f32.mrb[0].mxu0
    %v4727 = vadd.f32 %v4534, %v4726
    %v4728 = vpop.f32.mrb[0].mxu0
    %v4729 = vadd.f32 %v4536, %v4728
    %4730 = vdwg.mxu0
    %4731 = vmatprep.subr.bf16.mxu0 %v2233
    %4732 = vmatpush1.bf16.msra.mxu0 %v2232
    %4733 = vmatprep.subr.bf16.mxu0 %v2241
    %4734 = vmatpush1.bf16.msra.mxu0 %v2240
    %4735 = vmatprep.subr.bf16.mxu0 %v2249
    %4736 = vmatpush1.bf16.msra.mxu0 %v2248
    %4737 = vmatprep.subr.bf16.mxu0 %v2257
    %4738 = vmatpush1.bf16.msra.mxu0 %v2256
    %4739 = vmatprep.subr.bf16.mxu0 %v2265
    %4740 = vmatpush1.bf16.msra.mxu0 %v2264
    %4741 = vmatprep.subr.bf16.mxu0 %v2273
    %4742 = vmatpush1.bf16.msra.mxu0 %v2272
    %4743 = vmatprep.subr.bf16.mxu0 %v2281
    %4744 = vmatpush1.bf16.msra.mxu0 %v2280
    %4745 = vmatprep.subr.bf16.mxu0 %v2289
    %4746 = vmatpush1.bf16.msra.mxu0 %v2288
    %4747 = vmatprep.subr.bf16.mxu0 %v2297
    %4748 = vmatpush1.bf16.msra.mxu0 %v2296
    %4749 = vmatprep.subr.bf16.mxu0 %v2305
    %4750 = vmatpush1.bf16.msra.mxu0 %v2304
    %4751 = vmatprep.subr.bf16.mxu0 %v2313
    %4752 = vmatpush1.bf16.msra.mxu0 %v2312
    %4753 = vmatprep.subr.bf16.mxu0 %v2321
    %4754 = vmatpush1.bf16.msra.mxu0 %v2320
    %4755 = vmatprep.subr.bf16.mxu0 %v2329
    %4756 = vmatpush1.bf16.msra.mxu0 %v2328
    %4757 = vmatprep.subr.bf16.mxu0 %v2337
    %4758 = vmatpush1.bf16.msra.mxu0 %v2336
    %4759 = vmatprep.subr.bf16.mxu0 %v2345
    %4760 = vmatpush1.bf16.msra.mxu0 %v2344
    %4761 = vmatprep.subr.bf16.mxu0 %v2353
    %4762 = vmatpush1.bf16.msra.mxu0 %v2352
    %4763 = vmatprep.mubr.bf16.mxu0 %v883
    %4764 = vmatmul.mubr.bf16.gmra.mrb[0].mxu0 %v882
    %v4765 = vpop.f32.mrb[0].mxu0
    %v4766 = vadd.f32 %v581, %v4765
    %v4767 = vpop.f32.mrb[0].mxu0
    %v4768 = vadd.f32 %v585, %v4767
    %v4769 = vpop.f32.mrb[0].mxu0
    %v4770 = vadd.f32 %v581, %v4769
    %v4771 = vpop.f32.mrb[0].mxu0
    %v4772 = vadd.f32 %v585, %v4771
    %4773 = vmatprep.mubr.bf16.mxu0 %v889
    %4774 = vmatmul.mubr.bf16.gmra.mrb[0].mxu0 %v888
    %v4775 = vpop.f32.mrb[0].mxu0
    %v4776 = vadd.f32 %v581, %v4775
    %v4777 = vpop.f32.mrb[0].mxu0
    %v4778 = vadd.f32 %v585, %v4777
    %v4779 = vpop.f32.mrb[0].mxu0
    %v4780 = vadd.f32 %v581, %v4779
    %v4781 = vpop.f32.mrb[0].mxu0
    %v4782 = vadd.f32 %v585, %v4781
    %4783 = vmatprep.mubr.bf16.mxu0 %v895
    %4784 = vmatmul.mubr.bf16.gmra.mrb[0].mxu0 %v894
    %v4785 = vpop.f32.mrb[0].mxu0
    %v4786 = vadd.f32 %v581, %v4785
    %v4787 = vpop.f32.mrb[0].mxu0
    %v4788 = vadd.f32 %v585, %v4787
    %v4789 = vpop.f32.mrb[0].mxu0
    %v4790 = vadd.f32 %v581, %v4789
    %v4791 = vpop.f32.mrb[0].mxu0
    %v4792 = vadd.f32 %v585, %v4791
    %4793 = vmatprep.mubr.bf16.mxu0 %v901
    %4794 = vmatmul.mubr.bf16.gmra.mrb[0].mxu0 %v900
    %v4795 = vpop.f32.mrb[0].mxu0
    %v4796 = vadd.f32 %v581, %v4795
    %v4797 = vpop.f32.mrb[0].mxu0
    %v4798 = vadd.f32 %v585, %v4797
    %v4799 = vpop.f32.mrb[0].mxu0
    %v4800 = vadd.f32 %v581, %v4799
    %v4801 = vpop.f32.mrb[0].mxu0
    %v4802 = vadd.f32 %v585, %v4801
    %4803 = vmatprep.mubr.bf16.mxu0 %v907
    %4804 = vmatmul.mubr.bf16.gmra.mrb[0].mxu0 %v906
    %v4805 = vpop.f32.mrb[0].mxu0
    %v4806 = vadd.f32 %v581, %v4805
    %v4807 = vpop.f32.mrb[0].mxu0
    %v4808 = vadd.f32 %v585, %v4807
    %v4809 = vpop.f32.mrb[0].mxu0
    %v4810 = vadd.f32 %v581, %v4809
    %v4811 = vpop.f32.mrb[0].mxu0
    %v4812 = vadd.f32 %v585, %v4811
    %4813 = vmatprep.mubr.bf16.mxu0 %v913
    %4814 = vmatmul.mubr.bf16.gmra.mrb[0].mxu0 %v912
    %v4815 = vpop.f32.mrb[0].mxu0
    %v4816 = vadd.f32 %v581, %v4815
    %v4817 = vpop.f32.mrb[0].mxu0
    %v4818 = vadd.f32 %v585, %v4817
    %v4819 = vpop.f32.mrb[0].mxu0
    %v4820 = vadd.f32 %v581, %v4819
    %v4821 = vpop.f32.mrb[0].mxu0
    %v4822 = vadd.f32 %v585, %v4821
    %4823 = vmatprep.mubr.bf16.mxu0 %v919
    %4824 = vmatmul.mubr.bf16.gmra.mrb[0].mxu0 %v918
    %v4825 = vpop.f32.mrb[0].mxu0
    %v4826 = vadd.f32 %v581, %v4825
    %v4827 = vpop.f32.mrb[0].mxu0
    %v4828 = vadd.f32 %v585, %v4827
    %v4829 = vpop.f32.mrb[0].mxu0
    %v4830 = vadd.f32 %v581, %v4829
    %v4831 = vpop.f32.mrb[0].mxu0
    %v4832 = vadd.f32 %v585, %v4831
    %4833 = vmatprep.mubr.bf16.mxu0 %v925
    %4834 = vmatmul.mubr.bf16.gmra.mrb[0].mxu0 %v924
    %v4835 = vpop.f32.mrb[0].mxu0
    %v4836 = vadd.f32 %v581, %v4835
    %v4837 = vpop.f32.mrb[0].mxu0
    %v4838 = vadd.f32 %v585, %v4837
    %v4839 = vpop.f32.mrb[0].mxu0
    %v4840 = vadd.f32 %v581, %v4839
    %v4841 = vpop.f32.mrb[0].mxu0
    %v4842 = vadd.f32 %v585, %v4841
    %4843 = vmatprep.mubr.bf16.mxu0 %v931
    %4844 = vmatmul.mubr.bf16.gmra.mrb[0].mxu0 %v930
    %v4845 = vpop.f32.mrb[0].mxu0
    %v4846 = vadd.f32 %v581, %v4845
    %v4847 = vpop.f32.mrb[0].mxu0
    %v4848 = vadd.f32 %v585, %v4847
    %v4849 = vpop.f32.mrb[0].mxu0
    %v4850 = vadd.f32 %v581, %v4849
    %v4851 = vpop.f32.mrb[0].mxu0
    %v4852 = vadd.f32 %v585, %v4851
    %4853 = vmatprep.mubr.bf16.mxu0 %v937
    %4854 = vmatmul.mubr.bf16.gmra.mrb[0].mxu0 %v936
    %v4855 = vpop.f32.mrb[0].mxu0
    %v4856 = vadd.f32 %v581, %v4855
    %v4857 = vpop.f32.mrb[0].mxu0
    %v4858 = vadd.f32 %v585, %v4857
    %v4859 = vpop.f32.mrb[0].mxu0
    %v4860 = vadd.f32 %v581, %v4859
    %v4861 = vpop.f32.mrb[0].mxu0
    %v4862 = vadd.f32 %v585, %v4861
    %4863 = vmatprep.mubr.bf16.mxu0 %v943
    %4864 = vmatmul.mubr.bf16.gmra.mrb[0].mxu0 %v942
    %v4865 = vpop.f32.mrb[0].mxu0
    %v4866 = vadd.f32 %v581, %v4865
    %v4867 = vpop.f32.mrb[0].mxu0
    %v4868 = vadd.f32 %v585, %v4867
    %v4869 = vpop.f32.mrb[0].mxu0
    %v4870 = vadd.f32 %v581, %v4869
    %v4871 = vpop.f32.mrb[0].mxu0
    %v4872 = vadd.f32 %v585, %v4871
    %4873 = vmatprep.mubr.bf16.mxu0 %v949
    %4874 = vmatmul.mubr.bf16.gmra.mrb[0].mxu0 %v948
    %v4875 = vpop.f32.mrb[0].mxu0
    %v4876 = vadd.f32 %v581, %v4875
    %v4877 = vpop.f32.mrb[0].mxu0
    %v4878 = vadd.f32 %v585, %v4877
    %v4879 = vpop.f32.mrb[0].mxu0
    %v4880 = vadd.f32 %v581, %v4879
    %v4881 = vpop.f32.mrb[0].mxu0
    %v4882 = vadd.f32 %v585, %v4881
    %4883 = vmatprep.mubr.bf16.mxu0 %v955
    %4884 = vmatmul.mubr.bf16.gmra.mrb[0].mxu0 %v954
    %v4885 = vpop.f32.mrb[0].mxu0
    %v4886 = vadd.f32 %v581, %v4885
    %v4887 = vpop.f32.mrb[0].mxu0
    %v4888 = vadd.f32 %v585, %v4887
    %v4889 = vpop.f32.mrb[0].mxu0
    %v4890 = vadd.f32 %v581, %v4889
    %v4891 = vpop.f32.mrb[0].mxu0
    %v4892 = vadd.f32 %v585, %v4891
    %4893 = vmatprep.mubr.bf16.mxu0 %v961
    %4894 = vmatmul.mubr.bf16.gmra.mrb[0].mxu0 %v960
    %v4895 = vpop.f32.mrb[0].mxu0
    %v4896 = vadd.f32 %v581, %v4895
    %v4897 = vpop.f32.mrb[0].mxu0
    %v4898 = vadd.f32 %v585, %v4897
    %v4899 = vpop.f32.mrb[0].mxu0
    %v4900 = vadd.f32 %v581, %v4899
    %v4901 = vpop.f32.mrb[0].mxu0
    %v4902 = vadd.f32 %v585, %v4901
    %4903 = vmatprep.mubr.bf16.mxu0 %v967
    %4904 = vmatmul.mubr.bf16.gmra.mrb[0].mxu0 %v966
    %v4905 = vpop.f32.mrb[0].mxu0
    %v4906 = vadd.f32 %v581, %v4905
    %v4907 = vpop.f32.mrb[0].mxu0
    %v4908 = vadd.f32 %v585, %v4907
    %v4909 = vpop.f32.mrb[0].mxu0
    %v4910 = vadd.f32 %v581, %v4909
    %v4911 = vpop.f32.mrb[0].mxu0
    %v4912 = vadd.f32 %v585, %v4911
    %4913 = vmatprep.mubr.bf16.mxu0 %v973
    %4914 = vmatmul.mubr.bf16.gmra.mrb[0].mxu0 %v972
    %v4915 = vpop.f32.mrb[0].mxu0
    %v4916 = vadd.f32 %v581, %v4915
    %v4917 = vpop.f32.mrb[0].mxu0
    %v4918 = vadd.f32 %v585, %v4917
    %v4919 = vpop.f32.mrb[0].mxu0
    %v4920 = vadd.f32 %v581, %v4919
    %v4921 = vpop.f32.mrb[0].mxu0
    %v4922 = vadd.f32 %v585, %v4921
    %4923 = vdwg.mxu0
    %4924 = vmatprep.subr.bf16.mxu0 %v2361
    %4925 = vmatpush1.bf16.msra.mxu0 %v2360
    %4926 = vmatprep.subr.bf16.mxu0 %v2369
    %4927 = vmatpush1.bf16.msra.mxu0 %v2368
    %4928 = vmatprep.subr.bf16.mxu0 %v2377
    %4929 = vmatpush1.bf16.msra.mxu0 %v2376
    %4930 = vmatprep.subr.bf16.mxu0 %v2385
    %4931 = vmatpush1.bf16.msra.mxu0 %v2384
    %4932 = vmatprep.subr.bf16.mxu0 %v2393
    %4933 = vmatpush1.bf16.msra.mxu0 %v2392
    %4934 = vmatprep.subr.bf16.mxu0 %v2401
    %4935 = vmatpush1.bf16.msra.mxu0 %v2400
    %4936 = vmatprep.subr.bf16.mxu0 %v2409
    %4937 = vmatpush1.bf16.msra.mxu0 %v2408
    %4938 = vmatprep.subr.bf16.mxu0 %v2417
    %4939 = vmatpush1.bf16.msra.mxu0 %v2416
    %4940 = vmatprep.subr.bf16.mxu0 %v2425
    %4941 = vmatpush1.bf16.msra.mxu0 %v2424
    %4942 = vmatprep.subr.bf16.mxu0 %v2433
    %4943 = vmatpush1.bf16.msra.mxu0 %v2432
    %4944 = vmatprep.subr.bf16.mxu0 %v2441
    %4945 = vmatpush1.bf16.msra.mxu0 %v2440
    %4946 = vmatprep.subr.bf16.mxu0 %v2449
    %4947 = vmatpush1.bf16.msra.mxu0 %v2448
    %4948 = vmatprep.subr.bf16.mxu0 %v2457
    %4949 = vmatpush1.bf16.msra.mxu0 %v2456
    %4950 = vmatprep.subr.bf16.mxu0 %v2465
    %4951 = vmatpush1.bf16.msra.mxu0 %v2464
    %4952 = vmatprep.subr.bf16.mxu0 %v2473
    %4953 = vmatpush1.bf16.msra.mxu0 %v2472
    %4954 = vmatprep.subr.bf16.mxu0 %v2481
    %4955 = vmatpush1.bf16.msra.mxu0 %v2480
    %4956 = vmatprep.mubr.bf16.mxu0 %v885
    %4957 = vmatmul.mubr.bf16.gmra.mrb[0].mxu0 %v884
    %v4958 = vpop.f32.mrb[0].mxu0
    %v4959 = vadd.f32 %v4766, %v4958
    %v4960 = vpop.f32.mrb[0].mxu0
    %v4961 = vadd.f32 %v4768, %v4960
    %v4962 = vpop.f32.mrb[0].mxu0
    %v4963 = vadd.f32 %v4770, %v4962
    %v4964 = vpop.f32.mrb[0].mxu0
    %v4965 = vadd.f32 %v4772, %v4964
    %4966 = vmatprep.mubr.bf16.mxu0 %v891
    %4967 = vmatmul.mubr.bf16.gmra.mrb[0].mxu0 %v890
    %v4968 = vpop.f32.mrb[0].mxu0
    %v4969 = vadd.f32 %v4776, %v4968
    %v4970 = vpop.f32.mrb[0].mxu0
    %v4971 = vadd.f32 %v4778, %v4970
    %v4972 = vpop.f32.mrb[0].mxu0
    %v4973 = vadd.f32 %v4780, %v4972
    %v4974 = vpop.f32.mrb[0].mxu0
    %v4975 = vadd.f32 %v4782, %v4974
    %4976 = vmatprep.mubr.bf16.mxu0 %v897
    %4977 = vmatmul.mubr.bf16.gmra.mrb[0].mxu0 %v896
    %v4978 = vpop.f32.mrb[0].mxu0
    %v4979 = vadd.f32 %v4786, %v4978
    %v4980 = vpop.f32.mrb[0].mxu0
    %v4981 = vadd.f32 %v4788, %v4980
    %v4982 = vpop.f32.mrb[0].mxu0
    %v4983 = vadd.f32 %v4790, %v4982
    %v4984 = vpop.f32.mrb[0].mxu0
    %v4985 = vadd.f32 %v4792, %v4984
    %4986 = vmatprep.mubr.bf16.mxu0 %v903
    %4987 = vmatmul.mubr.bf16.gmra.mrb[0].mxu0 %v902
    %v4988 = vpop.f32.mrb[0].mxu0
    %v4989 = vadd.f32 %v4796, %v4988
    %v4990 = vpop.f32.mrb[0].mxu0
    %v4991 = vadd.f32 %v4798, %v4990
    %v4992 = vpop.f32.mrb[0].mxu0
    %v4993 = vadd.f32 %v4800, %v4992
    %v4994 = vpop.f32.mrb[0].mxu0
    %v4995 = vadd.f32 %v4802, %v4994
    %4996 = vmatprep.mubr.bf16.mxu0 %v909
    %4997 = vmatmul.mubr.bf16.gmra.mrb[0].mxu0 %v908
    %v4998 = vpop.f32.mrb[0].mxu0
    %v4999 = vadd.f32 %v4806, %v4998
    %v5000 = vpop.f32.mrb[0].mxu0
    %v5001 = vadd.f32 %v4808, %v5000
    %v5002 = vpop.f32.mrb[0].mxu0
    %v5003 = vadd.f32 %v4810, %v5002
    %v5004 = vpop.f32.mrb[0].mxu0
    %v5005 = vadd.f32 %v4812, %v5004
    %5006 = vmatprep.mubr.bf16.mxu0 %v915
    %5007 = vmatmul.mubr.bf16.gmra.mrb[0].mxu0 %v914
    %v5008 = vpop.f32.mrb[0].mxu0
    %v5009 = vadd.f32 %v4816, %v5008
    %v5010 = vpop.f32.mrb[0].mxu0
    %v5011 = vadd.f32 %v4818, %v5010
    %v5012 = vpop.f32.mrb[0].mxu0
    %v5013 = vadd.f32 %v4820, %v5012
    %v5014 = vpop.f32.mrb[0].mxu0
    %v5015 = vadd.f32 %v4822, %v5014
    %5016 = vmatprep.mubr.bf16.mxu0 %v921
    %5017 = vmatmul.mubr.bf16.gmra.mrb[0].mxu0 %v920
    %v5018 = vpop.f32.mrb[0].mxu0
    %v5019 = vadd.f32 %v4826, %v5018
    %v5020 = vpop.f32.mrb[0].mxu0
    %v5021 = vadd.f32 %v4828, %v5020
    %v5022 = vpop.f32.mrb[0].mxu0
    %v5023 = vadd.f32 %v4830, %v5022
    %v5024 = vpop.f32.mrb[0].mxu0
    %v5025 = vadd.f32 %v4832, %v5024
    %5026 = vmatprep.mubr.bf16.mxu0 %v927
    %5027 = vmatmul.mubr.bf16.gmra.mrb[0].mxu0 %v926
    %v5028 = vpop.f32.mrb[0].mxu0
    %v5029 = vadd.f32 %v4836, %v5028
    %v5030 = vpop.f32.mrb[0].mxu0
    %v5031 = vadd.f32 %v4838, %v5030
    %v5032 = vpop.f32.mrb[0].mxu0
    %v5033 = vadd.f32 %v4840, %v5032
    %v5034 = vpop.f32.mrb[0].mxu0
    %v5035 = vadd.f32 %v4842, %v5034
    %5036 = vmatprep.mubr.bf16.mxu0 %v933
    %5037 = vmatmul.mubr.bf16.gmra.mrb[0].mxu0 %v932
    %v5038 = vpop.f32.mrb[0].mxu0
    %v5039 = vadd.f32 %v4846, %v5038
    %v5040 = vpop.f32.mrb[0].mxu0
    %v5041 = vadd.f32 %v4848, %v5040
    %v5042 = vpop.f32.mrb[0].mxu0
    %v5043 = vadd.f32 %v4850, %v5042
    %v5044 = vpop.f32.mrb[0].mxu0
    %v5045 = vadd.f32 %v4852, %v5044
    %5046 = vmatprep.mubr.bf16.mxu0 %v939
    %5047 = vmatmul.mubr.bf16.gmra.mrb[0].mxu0 %v938
    %v5048 = vpop.f32.mrb[0].mxu0
    %v5049 = vadd.f32 %v4856, %v5048
    %v5050 = vpop.f32.mrb[0].mxu0
    %v5051 = vadd.f32 %v4858, %v5050
    %v5052 = vpop.f32.mrb[0].mxu0
    %v5053 = vadd.f32 %v4860, %v5052
    %v5054 = vpop.f32.mrb[0].mxu0
    %v5055 = vadd.f32 %v4862, %v5054
    %5056 = vmatprep.mubr.bf16.mxu0 %v945
    %5057 = vmatmul.mubr.bf16.gmra.mrb[0].mxu0 %v944
    %v5058 = vpop.f32.mrb[0].mxu0
    %v5059 = vadd.f32 %v4866, %v5058
    %v5060 = vpop.f32.mrb[0].mxu0
    %v5061 = vadd.f32 %v4868, %v5060
    %v5062 = vpop.f32.mrb[0].mxu0
    %v5063 = vadd.f32 %v4870, %v5062
    %v5064 = vpop.f32.mrb[0].mxu0
    %v5065 = vadd.f32 %v4872, %v5064
    %5066 = vmatprep.mubr.bf16.mxu0 %v951
    %5067 = vmatmul.mubr.bf16.gmra.mrb[0].mxu0 %v950
    %v5068 = vpop.f32.mrb[0].mxu0
    %v5069 = vadd.f32 %v4876, %v5068
    %v5070 = vpop.f32.mrb[0].mxu0
    %v5071 = vadd.f32 %v4878, %v5070
    %v5072 = vpop.f32.mrb[0].mxu0
    %v5073 = vadd.f32 %v4880, %v5072
    %v5074 = vpop.f32.mrb[0].mxu0
    %v5075 = vadd.f32 %v4882, %v5074
    %5076 = vmatprep.mubr.bf16.mxu0 %v957
    %5077 = vmatmul.mubr.bf16.gmra.mrb[0].mxu0 %v956
    %v5078 = vpop.f32.mrb[0].mxu0
    %v5079 = vadd.f32 %v4886, %v5078
    %v5080 = vpop.f32.mrb[0].mxu0
    %v5081 = vadd.f32 %v4888, %v5080
    %v5082 = vpop.f32.mrb[0].mxu0
    %v5083 = vadd.f32 %v4890, %v5082
    %v5084 = vpop.f32.mrb[0].mxu0
    %v5085 = vadd.f32 %v4892, %v5084
    %5086 = vmatprep.mubr.bf16.mxu0 %v963
    %5087 = vmatmul.mubr.bf16.gmra.mrb[0].mxu0 %v962
    %v5088 = vpop.f32.mrb[0].mxu0
    %v5089 = vadd.f32 %v4896, %v5088
    %v5090 = vpop.f32.mrb[0].mxu0
    %v5091 = vadd.f32 %v4898, %v5090
    %v5092 = vpop.f32.mrb[0].mxu0
    %v5093 = vadd.f32 %v4900, %v5092
    %v5094 = vpop.f32.mrb[0].mxu0
    %v5095 = vadd.f32 %v4902, %v5094
    %5096 = vmatprep.mubr.bf16.mxu0 %v969
    %5097 = vmatmul.mubr.bf16.gmra.mrb[0].mxu0 %v968
    %v5098 = vpop.f32.mrb[0].mxu0
    %v5099 = vadd.f32 %v4906, %v5098
    %v5100 = vpop.f32.mrb[0].mxu0
    %v5101 = vadd.f32 %v4908, %v5100
    %v5102 = vpop.f32.mrb[0].mxu0
    %v5103 = vadd.f32 %v4910, %v5102
    %v5104 = vpop.f32.mrb[0].mxu0
    %v5105 = vadd.f32 %v4912, %v5104
    %5106 = vmatprep.mubr.bf16.mxu0 %v975
    %5107 = vmatmul.mubr.bf16.gmra.mrb[0].mxu0 %v974
    %v5108 = vpop.f32.mrb[0].mxu0
    %v5109 = vadd.f32 %v4916, %v5108
    %v5110 = vpop.f32.mrb[0].mxu0
    %v5111 = vadd.f32 %v4918, %v5110
    %v5112 = vpop.f32.mrb[0].mxu0
    %v5113 = vadd.f32 %v4920, %v5112
    %v5114 = vpop.f32.mrb[0].mxu0
    %v5115 = vadd.f32 %v4922, %v5114
    %5116 = vdwg.mxu0
    %5117 = vmatprep.subr.bf16.mxu0 %v2489
    %5118 = vmatpush1.bf16.msra.mxu0 %v2488
    %5119 = vmatprep.subr.bf16.mxu0 %v2497
    %5120 = vmatpush1.bf16.msra.mxu0 %v2496
    %5121 = vmatprep.subr.bf16.mxu0 %v2505
    %5122 = vmatpush1.bf16.msra.mxu0 %v2504
    %5123 = vmatprep.subr.bf16.mxu0 %v2513
    %5124 = vmatpush1.bf16.msra.mxu0 %v2512
    %5125 = vmatprep.subr.bf16.mxu0 %v2521
    %5126 = vmatpush1.bf16.msra.mxu0 %v2520
    %5127 = vmatprep.subr.bf16.mxu0 %v2529
    %5128 = vmatpush1.bf16.msra.mxu0 %v2528
    %5129 = vmatprep.subr.bf16.mxu0 %v2537
    %5130 = vmatpush1.bf16.msra.mxu0 %v2536
    %5131 = vmatprep.subr.bf16.mxu0 %v2545
    %5132 = vmatpush1.bf16.msra.mxu0 %v2544
    %5133 = vmatprep.subr.bf16.mxu0 %v2553
    %5134 = vmatpush1.bf16.msra.mxu0 %v2552
    %5135 = vmatprep.subr.bf16.mxu0 %v2561
    %5136 = vmatpush1.bf16.msra.mxu0 %v2560
    %5137 = vmatprep.subr.bf16.mxu0 %v2569
    %5138 = vmatpush1.bf16.msra.mxu0 %v2568
    %5139 = vmatprep.subr.bf16.mxu0 %v2577
    %5140 = vmatpush1.bf16.msra.mxu0 %v2576
    %5141 = vmatprep.subr.bf16.mxu0 %v2585
    %5142 = vmatpush1.bf16.msra.mxu0 %v2584
    %5143 = vmatprep.subr.bf16.mxu0 %v2593
    %5144 = vmatpush1.bf16.msra.mxu0 %v2592
    %5145 = vmatprep.subr.bf16.mxu0 %v2601
    %5146 = vmatpush1.bf16.msra.mxu0 %v2600
    %5147 = vmatprep.subr.bf16.mxu0 %v2609
    %5148 = vmatpush1.bf16.msra.mxu0 %v2608
    %5149 = vmatprep.mubr.bf16.mxu0 %v887
    %5150 = vmatmul.mubr.bf16.gmra.mrb[0].mxu0 %v886
    %v5151 = vpop.f32.mrb[0].mxu0
    %v5152 = vadd.f32 %v4959, %v5151
    %v5153 = vpop.f32.mrb[0].mxu0
    %v5154 = vadd.f32 %v4961, %v5153
    %v5155 = vpop.f32.mrb[0].mxu0
    %v5156 = vadd.f32 %v4963, %v5155
    %v5157 = vpop.f32.mrb[0].mxu0
    %v5158 = vadd.f32 %v4965, %v5157
    %5159 = vmatprep.mubr.bf16.mxu0 %v893
    %5160 = vmatmul.mubr.bf16.gmra.mrb[0].mxu0 %v892
    %v5161 = vpop.f32.mrb[0].mxu0
    %v5162 = vadd.f32 %v4969, %v5161
    %v5163 = vpop.f32.mrb[0].mxu0
    %v5164 = vadd.f32 %v4971, %v5163
    %v5165 = vpop.f32.mrb[0].mxu0
    %v5166 = vadd.f32 %v4973, %v5165
    %v5167 = vpop.f32.mrb[0].mxu0
    %v5168 = vadd.f32 %v4975, %v5167
    %5169 = vmatprep.mubr.bf16.mxu0 %v899
    %5170 = vmatmul.mubr.bf16.gmra.mrb[0].mxu0 %v898
    %v5171 = vpop.f32.mrb[0].mxu0
    %v5172 = vadd.f32 %v4979, %v5171
    %v5173 = vpop.f32.mrb[0].mxu0
    %v5174 = vadd.f32 %v4981, %v5173
    %v5175 = vpop.f32.mrb[0].mxu0
    %v5176 = vadd.f32 %v4983, %v5175
    %v5177 = vpop.f32.mrb[0].mxu0
    %v5178 = vadd.f32 %v4985, %v5177
    %5179 = vmatprep.mubr.bf16.mxu0 %v905
    %5180 = vmatmul.mubr.bf16.gmra.mrb[0].mxu0 %v904
    %v5181 = vpop.f32.mrb[0].mxu0
    %v5182 = vadd.f32 %v4989, %v5181
    %v5183 = vpop.f32.mrb[0].mxu0
    %v5184 = vadd.f32 %v4991, %v5183
    %v5185 = vpop.f32.mrb[0].mxu0
    %v5186 = vadd.f32 %v4993, %v5185
    %v5187 = vpop.f32.mrb[0].mxu0
    %v5188 = vadd.f32 %v4995, %v5187
    %5189 = vmatprep.mubr.bf16.mxu0 %v911
    %5190 = vmatmul.mubr.bf16.gmra.mrb[0].mxu0 %v910
    %v5191 = vpop.f32.mrb[0].mxu0
    %v5192 = vadd.f32 %v4999, %v5191
    %v5193 = vpop.f32.mrb[0].mxu0
    %v5194 = vadd.f32 %v5001, %v5193
    %v5195 = vpop.f32.mrb[0].mxu0
    %v5196 = vadd.f32 %v5003, %v5195
    %v5197 = vpop.f32.mrb[0].mxu0
    %v5198 = vadd.f32 %v5005, %v5197
    %5199 = vmatprep.mubr.bf16.mxu0 %v917
    %5200 = vmatmul.mubr.bf16.gmra.mrb[0].mxu0 %v916
    %v5201 = vpop.f32.mrb[0].mxu0
    %v5202 = vadd.f32 %v5009, %v5201
    %v5203 = vpop.f32.mrb[0].mxu0
    %v5204 = vadd.f32 %v5011, %v5203
    %v5205 = vpop.f32.mrb[0].mxu0
    %v5206 = vadd.f32 %v5013, %v5205
    %v5207 = vpop.f32.mrb[0].mxu0
    %v5208 = vadd.f32 %v5015, %v5207
    %5209 = vmatprep.mubr.bf16.mxu0 %v923
    %5210 = vmatmul.mubr.bf16.gmra.mrb[0].mxu0 %v922
    %v5211 = vpop.f32.mrb[0].mxu0
    %v5212 = vadd.f32 %v5019, %v5211
    %v5213 = vpop.f32.mrb[0].mxu0
    %v5214 = vadd.f32 %v5021, %v5213
    %v5215 = vpop.f32.mrb[0].mxu0
    %v5216 = vadd.f32 %v5023, %v5215
    %v5217 = vpop.f32.mrb[0].mxu0
    %v5218 = vadd.f32 %v5025, %v5217
    %5219 = vmatprep.mubr.bf16.mxu0 %v929
    %5220 = vmatmul.mubr.bf16.gmra.mrb[0].mxu0 %v928
    %v5221 = vpop.f32.mrb[0].mxu0
    %v5222 = vadd.f32 %v5029, %v5221
    %v5223 = vpop.f32.mrb[0].mxu0
    %v5224 = vadd.f32 %v5031, %v5223
    %v5225 = vpop.f32.mrb[0].mxu0
    %v5226 = vadd.f32 %v5033, %v5225
    %v5227 = vpop.f32.mrb[0].mxu0
    %v5228 = vadd.f32 %v5035, %v5227
    %5229 = vmatprep.mubr.bf16.mxu0 %v935
    %5230 = vmatmul.mubr.bf16.gmra.mrb[0].mxu0 %v934
    %v5231 = vpop.f32.mrb[0].mxu0
    %v5232 = vadd.f32 %v5039, %v5231
    %v5233 = vpop.f32.mrb[0].mxu0
    %v5234 = vadd.f32 %v5041, %v5233
    %v5235 = vpop.f32.mrb[0].mxu0
    %v5236 = vadd.f32 %v5043, %v5235
    %v5237 = vpop.f32.mrb[0].mxu0
    %v5238 = vadd.f32 %v5045, %v5237
    %5239 = vmatprep.mubr.bf16.mxu0 %v941
    %5240 = vmatmul.mubr.bf16.gmra.mrb[0].mxu0 %v940
    %v5241 = vpop.f32.mrb[0].mxu0
    %v5242 = vadd.f32 %v5049, %v5241
    %v5243 = vpop.f32.mrb[0].mxu0
    %v5244 = vadd.f32 %v5051, %v5243
    %v5245 = vpop.f32.mrb[0].mxu0
    %v5246 = vadd.f32 %v5053, %v5245
    %v5247 = vpop.f32.mrb[0].mxu0
    %v5248 = vadd.f32 %v5055, %v5247
    %5249 = vmatprep.mubr.bf16.mxu0 %v947
    %5250 = vmatmul.mubr.bf16.gmra.mrb[0].mxu0 %v946
    %v5251 = vpop.f32.mrb[0].mxu0
    %v5252 = vadd.f32 %v5059, %v5251
    %v5253 = vpop.f32.mrb[0].mxu0
    %v5254 = vadd.f32 %v5061, %v5253
    %v5255 = vpop.f32.mrb[0].mxu0
    %v5256 = vadd.f32 %v5063, %v5255
    %v5257 = vpop.f32.mrb[0].mxu0
    %v5258 = vadd.f32 %v5065, %v5257
    %5259 = vmatprep.mubr.bf16.mxu0 %v953
    %5260 = vmatmul.mubr.bf16.gmra.mrb[0].mxu0 %v952
    %v5261 = vpop.f32.mrb[0].mxu0
    %v5262 = vadd.f32 %v5069, %v5261
    %v5263 = vpop.f32.mrb[0].mxu0
    %v5264 = vadd.f32 %v5071, %v5263
    %v5265 = vpop.f32.mrb[0].mxu0
    %v5266 = vadd.f32 %v5073, %v5265
    %v5267 = vpop.f32.mrb[0].mxu0
    %v5268 = vadd.f32 %v5075, %v5267
    %5269 = vmatprep.mubr.bf16.mxu0 %v959
    %5270 = vmatmul.mubr.bf16.gmra.mrb[0].mxu0 %v958
    %v5271 = vpop.f32.mrb[0].mxu0
    %v5272 = vadd.f32 %v5079, %v5271
    %v5273 = vpop.f32.mrb[0].mxu0
    %v5274 = vadd.f32 %v5081, %v5273
    %v5275 = vpop.f32.mrb[0].mxu0
    %v5276 = vadd.f32 %v5083, %v5275
    %v5277 = vpop.f32.mrb[0].mxu0
    %v5278 = vadd.f32 %v5085, %v5277
    %5279 = vmatprep.mubr.bf16.mxu0 %v965
    %5280 = vmatmul.mubr.bf16.gmra.mrb[0].mxu0 %v964
    %v5281 = vpop.f32.mrb[0].mxu0
    %v5282 = vadd.f32 %v5089, %v5281
    %v5283 = vpop.f32.mrb[0].mxu0
    %v5284 = vadd.f32 %v5091, %v5283
    %v5285 = vpop.f32.mrb[0].mxu0
    %v5286 = vadd.f32 %v5093, %v5285
    %v5287 = vpop.f32.mrb[0].mxu0
    %v5288 = vadd.f32 %v5095, %v5287
    %5289 = vmatprep.mubr.bf16.mxu0 %v971
    %5290 = vmatmul.mubr.bf16.gmra.mrb[0].mxu0 %v970
    %v5291 = vpop.f32.mrb[0].mxu0
    %v5292 = vadd.f32 %v5099, %v5291
    %v5293 = vpop.f32.mrb[0].mxu0
    %v5294 = vadd.f32 %v5101, %v5293
    %v5295 = vpop.f32.mrb[0].mxu0
    %v5296 = vadd.f32 %v5103, %v5295
    %v5297 = vpop.f32.mrb[0].mxu0
    %v5298 = vadd.f32 %v5105, %v5297
    %5299 = vmatprep.mubr.bf16.mxu0 %v977
    %5300 = vmatmul.mubr.bf16.gmra.mrb[0].mxu0 %v976
    %v5301 = vpop.f32.mrb[0].mxu0
    %v5302 = vadd.f32 %v5109, %v5301
    %v5303 = vpop.f32.mrb[0].mxu0
    %v5304 = vadd.f32 %v5111, %v5303
    %v5305 = vpop.f32.mrb[0].mxu0
    %v5306 = vadd.f32 %v5113, %v5305
    %v5307 = vpop.f32.mrb[0].mxu0
    %v5308 = vadd.f32 %v5115, %v5307
    %5309 = vdwg.mxu0
    %v5310 = vmax.f32 %v3415, 0.0
    %v5311 = vmax.f32 %v3417, 0.0
    %v5312 = vmax.f32 %v3994, 0.0
    %v5313 = vmax.f32 %v3996, 0.0
    %v5314 = vmax.f32 %v4573, 0.0
    %v5315 = vmax.f32 %v4575, 0.0
    %v5316 = vmax.f32 %v5152, 0.0
    %v5317 = vmax.f32 %v5154, 0.0
    %v5318 = vmax.f32 %v3419, 0.0
    %v5319 = vmax.f32 %v3421, 0.0
    %v5320 = vmax.f32 %v3998, 0.0
    %v5321 = vmax.f32 %v4000, 0.0
    %v5322 = vmax.f32 %v4577, 0.0
    %v5323 = vmax.f32 %v4579, 0.0
    %v5324 = vmax.f32 %v5156, 0.0
    %v5325 = vmax.f32 %v5158, 0.0
    %v5326 = vmax.f32 %v3425, 0.0
    %v5327 = vmax.f32 %v3427, 0.0
    %v5328 = vmax.f32 %v4004, 0.0
    %v5329 = vmax.f32 %v4006, 0.0
    %v5330 = vmax.f32 %v4583, 0.0
    %v5331 = vmax.f32 %v4585, 0.0
    %v5332 = vmax.f32 %v5162, 0.0
    %v5333 = vmax.f32 %v5164, 0.0
    %v5334 = vmax.f32 %v3429, 0.0
    %v5335 = vmax.f32 %v3431, 0.0
    %v5336 = vmax.f32 %v4008, 0.0
    %v5337 = vmax.f32 %v4010, 0.0
    %v5338 = vmax.f32 %v4587, 0.0
    %v5339 = vmax.f32 %v4589, 0.0
    %v5340 = vmax.f32 %v5166, 0.0
    %v5341 = vmax.f32 %v5168, 0.0
    %v5342 = vmax.f32 %v3435, 0.0
    %v5343 = vmax.f32 %v3437, 0.0
    %v5344 = vmax.f32 %v4014, 0.0
    %v5345 = vmax.f32 %v4016, 0.0
    %v5346 = vmax.f32 %v4593, 0.0
    %v5347 = vmax.f32 %v4595, 0.0
    %v5348 = vmax.f32 %v5172, 0.0
    %v5349 = vmax.f32 %v5174, 0.0
    %v5350 = vmax.f32 %v3439, 0.0
    %v5351 = vmax.f32 %v3441, 0.0
    %v5352 = vmax.f32 %v4018, 0.0
    %v5353 = vmax.f32 %v4020, 0.0
    %v5354 = vmax.f32 %v4597, 0.0
    %v5355 = vmax.f32 %v4599, 0.0
    %v5356 = vmax.f32 %v5176, 0.0
    %v5357 = vmax.f32 %v5178, 0.0
    %v5358 = vmax.f32 %v3445, 0.0
    %v5359 = vmax.f32 %v3447, 0.0
    %v5360 = vmax.f32 %v4024, 0.0
    %v5361 = vmax.f32 %v4026, 0.0
    %v5362 = vmax.f32 %v4603, 0.0
    %v5363 = vmax.f32 %v4605, 0.0
    %v5364 = vmax.f32 %v5182, 0.0
    %v5365 = vmax.f32 %v5184, 0.0
    %v5366 = vmax.f32 %v3449, 0.0
    %v5367 = vmax.f32 %v3451, 0.0
    %v5368 = vmax.f32 %v4028, 0.0
    %v5369 = vmax.f32 %v4030, 0.0
    %v5370 = vmax.f32 %v4607, 0.0
    %v5371 = vmax.f32 %v4609, 0.0
    %v5372 = vmax.f32 %v5186, 0.0
    %v5373 = vmax.f32 %v5188, 0.0
    %v5374 = vmax.f32 %v3455, 0.0
    %v5375 = vmax.f32 %v3457, 0.0
    %v5376 = vmax.f32 %v4034, 0.0
    %v5377 = vmax.f32 %v4036, 0.0
    %v5378 = vmax.f32 %v4613, 0.0
    %v5379 = vmax.f32 %v4615, 0.0
    %v5380 = vmax.f32 %v5192, 0.0
    %v5381 = vmax.f32 %v5194, 0.0
    %v5382 = vmax.f32 %v3459, 0.0
    %v5383 = vmax.f32 %v3461, 0.0
    %v5384 = vmax.f32 %v4038, 0.0
    %v5385 = vmax.f32 %v4040, 0.0
    %v5386 = vmax.f32 %v4617, 0.0
    %v5387 = vmax.f32 %v4619, 0.0
    %v5388 = vmax.f32 %v5196, 0.0
    %v5389 = vmax.f32 %v5198, 0.0
    %v5390 = vmax.f32 %v3465, 0.0
    %v5391 = vmax.f32 %v3467, 0.0
    %v5392 = vmax.f32 %v4044, 0.0
    %v5393 = vmax.f32 %v4046, 0.0
    %v5394 = vmax.f32 %v4623, 0.0
    %v5395 = vmax.f32 %v4625, 0.0
    %v5396 = vmax.f32 %v5202, 0.0
    %v5397 = vmax.f32 %v5204, 0.0
    %v5398 = vmax.f32 %v3469, 0.0
    %v5399 = vmax.f32 %v3471, 0.0
    %v5400 = vmax.f32 %v4048, 0.0
    %v5401 = vmax.f32 %v4050, 0.0
    %v5402 = vmax.f32 %v4627, 0.0
    %v5403 = vmax.f32 %v4629, 0.0
    %v5404 = vmax.f32 %v5206, 0.0
    %v5405 = vmax.f32 %v5208, 0.0
    %v5406 = vmax.f32 %v3475, 0.0
    %v5407 = vmax.f32 %v3477, 0.0
    %v5408 = vmax.f32 %v4054, 0.0
    %v5409 = vmax.f32 %v4056, 0.0
    %v5410 = vmax.f32 %v4633, 0.0
    %v5411 = vmax.f32 %v4635, 0.0
    %v5412 = vmax.f32 %v5212, 0.0
    %v5413 = vmax.f32 %v5214, 0.0
    %v5414 = vmax.f32 %v3479, 0.0
    %v5415 = vmax.f32 %v3481, 0.0
    %v5416 = vmax.f32 %v4058, 0.0
    %v5417 = vmax.f32 %v4060, 0.0
    %v5418 = vmax.f32 %v4637, 0.0
    %v5419 = vmax.f32 %v4639, 0.0
    %v5420 = vmax.f32 %v5216, 0.0
    %v5421 = vmax.f32 %v5218, 0.0
    %v5422 = vmax.f32 %v3485, 0.0
    %v5423 = vmax.f32 %v3487, 0.0
    %v5424 = vmax.f32 %v4064, 0.0
    %v5425 = vmax.f32 %v4066, 0.0
    %v5426 = vmax.f32 %v4643, 0.0
    %v5427 = vmax.f32 %v4645, 0.0
    %v5428 = vmax.f32 %v5222, 0.0
    %v5429 = vmax.f32 %v5224, 0.0
    %v5430 = vmax.f32 %v3489, 0.0
    %v5431 = vmax.f32 %v3491, 0.0
    %v5432 = vmax.f32 %v4068, 0.0
    %v5433 = vmax.f32 %v4070, 0.0
    %v5434 = vmax.f32 %v4647, 0.0
    %v5435 = vmax.f32 %v4649, 0.0
    %v5436 = vmax.f32 %v5226, 0.0
    %v5437 = vmax.f32 %v5228, 0.0
    %v5438 = vmax.f32 %v3495, 0.0
    %v5439 = vmax.f32 %v3497, 0.0
    %v5440 = vmax.f32 %v4074, 0.0
    %v5441 = vmax.f32 %v4076, 0.0
    %v5442 = vmax.f32 %v4653, 0.0
    %v5443 = vmax.f32 %v4655, 0.0
    %v5444 = vmax.f32 %v5232, 0.0
    %v5445 = vmax.f32 %v5234, 0.0
    %v5446 = vmax.f32 %v3499, 0.0
    %v5447 = vmax.f32 %v3501, 0.0
    %v5448 = vmax.f32 %v4078, 0.0
    %v5449 = vmax.f32 %v4080, 0.0
    %v5450 = vmax.f32 %v4657, 0.0
    %v5451 = vmax.f32 %v4659, 0.0
    %v5452 = vmax.f32 %v5236, 0.0
    %v5453 = vmax.f32 %v5238, 0.0
    %v5454 = vmax.f32 %v3505, 0.0
    %v5455 = vmax.f32 %v3507, 0.0
    %v5456 = vmax.f32 %v4084, 0.0
    %v5457 = vmax.f32 %v4086, 0.0
    %v5458 = vmax.f32 %v4663, 0.0
    %v5459 = vmax.f32 %v4665, 0.0
    %v5460 = vmax.f32 %v5242, 0.0
    %v5461 = vmax.f32 %v5244, 0.0
    %v5462 = vmax.f32 %v3509, 0.0
    %v5463 = vmax.f32 %v3511, 0.0
    %v5464 = vmax.f32 %v4088, 0.0
    %v5465 = vmax.f32 %v4090, 0.0
    %v5466 = vmax.f32 %v4667, 0.0
    %v5467 = vmax.f32 %v4669, 0.0
    %v5468 = vmax.f32 %v5246, 0.0
    %v5469 = vmax.f32 %v5248, 0.0
    %v5470 = vmax.f32 %v3515, 0.0
    %v5471 = vmax.f32 %v3517, 0.0
    %v5472 = vmax.f32 %v4094, 0.0
    %v5473 = vmax.f32 %v4096, 0.0
    %v5474 = vmax.f32 %v4673, 0.0
    %v5475 = vmax.f32 %v4675, 0.0
    %v5476 = vmax.f32 %v5252, 0.0
    %v5477 = vmax.f32 %v5254, 0.0
    %v5478 = vmax.f32 %v3519, 0.0
    %v5479 = vmax.f32 %v3521, 0.0
    %v5480 = vmax.f32 %v4098, 0.0
    %v5481 = vmax.f32 %v4100, 0.0
    %v5482 = vmax.f32 %v4677, 0.0
    %v5483 = vmax.f32 %v4679, 0.0
    %v5484 = vmax.f32 %v5256, 0.0
    %v5485 = vmax.f32 %v5258, 0.0
    %v5486 = vmax.f32 %v3525, 0.0
    %v5487 = vmax.f32 %v3527, 0.0
    %v5488 = vmax.f32 %v4104, 0.0
    %v5489 = vmax.f32 %v4106, 0.0
    %v5490 = vmax.f32 %v4683, 0.0
    %v5491 = vmax.f32 %v4685, 0.0
    %v5492 = vmax.f32 %v5262, 0.0
    %v5493 = vmax.f32 %v5264, 0.0
    %v5494 = vmax.f32 %v3529, 0.0
    %v5495 = vmax.f32 %v3531, 0.0
    %v5496 = vmax.f32 %v4108, 0.0
    %v5497 = vmax.f32 %v4110, 0.0
    %v5498 = vmax.f32 %v4687, 0.0
    %v5499 = vmax.f32 %v4689, 0.0
    %v5500 = vmax.f32 %v5266, 0.0
    %v5501 = vmax.f32 %v5268, 0.0
    %v5502 = vmax.f32 %v3535, 0.0
    %v5503 = vmax.f32 %v3537, 0.0
    %v5504 = vmax.f32 %v4114, 0.0
    %v5505 = vmax.f32 %v4116, 0.0
    %v5506 = vmax.f32 %v4693, 0.0
    %v5507 = vmax.f32 %v4695, 0.0
    %v5508 = vmax.f32 %v5272, 0.0
    %v5509 = vmax.f32 %v5274, 0.0
    %v5510 = vmax.f32 %v3539, 0.0
    %v5511 = vmax.f32 %v3541, 0.0
    %v5512 = vmax.f32 %v4118, 0.0
    %v5513 = vmax.f32 %v4120, 0.0
    %v5514 = vmax.f32 %v4697, 0.0
    %v5515 = vmax.f32 %v4699, 0.0
    %v5516 = vmax.f32 %v5276, 0.0
    %v5517 = vmax.f32 %v5278, 0.0
    %v5518 = vmax.f32 %v3545, 0.0
    %v5519 = vmax.f32 %v3547, 0.0
    %v5520 = vmax.f32 %v4124, 0.0
    %v5521 = vmax.f32 %v4126, 0.0
    %v5522 = vmax.f32 %v4703, 0.0
    %v5523 = vmax.f32 %v4705, 0.0
    %v5524 = vmax.f32 %v5282, 0.0
    %v5525 = vmax.f32 %v5284, 0.0
    %v5526 = vmax.f32 %v3549, 0.0
    %v5527 = vmax.f32 %v3551, 0.0
    %v5528 = vmax.f32 %v4128, 0.0
    %v5529 = vmax.f32 %v4130, 0.0
    %v5530 = vmax.f32 %v4707, 0.0
    %v5531 = vmax.f32 %v4709, 0.0
    %v5532 = vmax.f32 %v5286, 0.0
    %v5533 = vmax.f32 %v5288, 0.0
    %v5534 = vmax.f32 %v3555, 0.0
    %v5535 = vmax.f32 %v3557, 0.0
    %v5536 = vmax.f32 %v4134, 0.0
    %v5537 = vmax.f32 %v4136, 0.0
    %v5538 = vmax.f32 %v4713, 0.0
    %v5539 = vmax.f32 %v4715, 0.0
    %v5540 = vmax.f32 %v5292, 0.0
    %v5541 = vmax.f32 %v5294, 0.0
    %v5542 = vmax.f32 %v3559, 0.0
    %v5543 = vmax.f32 %v3561, 0.0
    %v5544 = vmax.f32 %v4138, 0.0
    %v5545 = vmax.f32 %v4140, 0.0
    %v5546 = vmax.f32 %v4717, 0.0
    %v5547 = vmax.f32 %v4719, 0.0
    %v5548 = vmax.f32 %v5296, 0.0
    %v5549 = vmax.f32 %v5298, 0.0
    %v5550 = vmax.f32 %v3565, 0.0
    %v5551 = vmax.f32 %v3567, 0.0
    %v5552 = vmax.f32 %v4144, 0.0
    %v5553 = vmax.f32 %v4146, 0.0
    %v5554 = vmax.f32 %v4723, 0.0
    %v5555 = vmax.f32 %v4725, 0.0
    %v5556 = vmax.f32 %v5302, 0.0
    %v5557 = vmax.f32 %v5304, 0.0
    %v5558 = vmax.f32 %v3569, 0.0
    %v5559 = vmax.f32 %v3571, 0.0
    %v5560 = vmax.f32 %v4148, 0.0
    %v5561 = vmax.f32 %v4150, 0.0
    %v5562 = vmax.f32 %v4727, 0.0
    %v5563 = vmax.f32 %v4729, 0.0
    %v5564 = vmax.f32 %v5306, 0.0
    %v5565 = vmax.f32 %v5308, 0.0
    %v5566 = vpack.c.bf16 %v5318, %v5310
    %v5567 = vpack.c.bf16 %v5319, %v5311
    %v5568 = vpack.c.bf16 %v5320, %v5312
    %v5569 = vpack.c.bf16 %v5321, %v5313
    %v5570 = vpack.c.bf16 %v5322, %v5314
    %v5571 = vpack.c.bf16 %v5323, %v5315
    %v5572 = vpack.c.bf16 %v5324, %v5316
    %v5573 = vpack.c.bf16 %v5325, %v5317
    %v5574 = vpack.c.bf16 %v5334, %v5326
    %v5575 = vpack.c.bf16 %v5335, %v5327
    %v5576 = vpack.c.bf16 %v5336, %v5328
    %v5577 = vpack.c.bf16 %v5337, %v5329
    %v5578 = vpack.c.bf16 %v5338, %v5330
    %v5579 = vpack.c.bf16 %v5339, %v5331
    %v5580 = vpack.c.bf16 %v5340, %v5332
    %v5581 = vpack.c.bf16 %v5341, %v5333
    %v5582 = vpack.c.bf16 %v5350, %v5342
    %v5583 = vpack.c.bf16 %v5351, %v5343
    %v5584 = vpack.c.bf16 %v5352, %v5344
    %v5585 = vpack.c.bf16 %v5353, %v5345
    %v5586 = vpack.c.bf16 %v5354, %v5346
    %v5587 = vpack.c.bf16 %v5355, %v5347
    %v5588 = vpack.c.bf16 %v5356, %v5348
    %v5589 = vpack.c.bf16 %v5357, %v5349
    %v5590 = vpack.c.bf16 %v5366, %v5358
    %v5591 = vpack.c.bf16 %v5367, %v5359
    %v5592 = vpack.c.bf16 %v5368, %v5360
    %v5593 = vpack.c.bf16 %v5369, %v5361
    %v5594 = vpack.c.bf16 %v5370, %v5362
    %v5595 = vpack.c.bf16 %v5371, %v5363
    %v5596 = vpack.c.bf16 %v5372, %v5364
    %v5597 = vpack.c.bf16 %v5373, %v5365
    %v5598 = vpack.c.bf16 %v5382, %v5374
    %v5599 = vpack.c.bf16 %v5383, %v5375
    %v5600 = vpack.c.bf16 %v5384, %v5376
    %v5601 = vpack.c.bf16 %v5385, %v5377
    %v5602 = vpack.c.bf16 %v5386, %v5378
    %v5603 = vpack.c.bf16 %v5387, %v5379
    %v5604 = vpack.c.bf16 %v5388, %v5380
    %v5605 = vpack.c.bf16 %v5389, %v5381
    %v5606 = vpack.c.bf16 %v5398, %v5390
    %v5607 = vpack.c.bf16 %v5399, %v5391
    %v5608 = vpack.c.bf16 %v5400, %v5392
    %v5609 = vpack.c.bf16 %v5401, %v5393
    %v5610 = vpack.c.bf16 %v5402, %v5394
    %v5611 = vpack.c.bf16 %v5403, %v5395
    %v5612 = vpack.c.bf16 %v5404, %v5396
    %v5613 = vpack.c.bf16 %v5405, %v5397
    %v5614 = vpack.c.bf16 %v5414, %v5406
    %v5615 = vpack.c.bf16 %v5415, %v5407
    %v5616 = vpack.c.bf16 %v5416, %v5408
    %v5617 = vpack.c.bf16 %v5417, %v5409
    %v5618 = vpack.c.bf16 %v5418, %v5410
    %v5619 = vpack.c.bf16 %v5419, %v5411
    %v5620 = vpack.c.bf16 %v5420, %v5412
    %v5621 = vpack.c.bf16 %v5421, %v5413
    %v5622 = vpack.c.bf16 %v5430, %v5422
    %v5623 = vpack.c.bf16 %v5431, %v5423
    %v5624 = vpack.c.bf16 %v5432, %v5424
    %v5625 = vpack.c.bf16 %v5433, %v5425
    %v5626 = vpack.c.bf16 %v5434, %v5426
    %v5627 = vpack.c.bf16 %v5435, %v5427
    %v5628 = vpack.c.bf16 %v5436, %v5428
    %v5629 = vpack.c.bf16 %v5437, %v5429
    %v5630 = vpack.c.bf16 %v5446, %v5438
    %v5631 = vpack.c.bf16 %v5447, %v5439
    %v5632 = vpack.c.bf16 %v5448, %v5440
    %v5633 = vpack.c.bf16 %v5449, %v5441
    %v5634 = vpack.c.bf16 %v5450, %v5442
    %v5635 = vpack.c.bf16 %v5451, %v5443
    %v5636 = vpack.c.bf16 %v5452, %v5444
    %v5637 = vpack.c.bf16 %v5453, %v5445
    %v5638 = vpack.c.bf16 %v5462, %v5454
    %v5639 = vpack.c.bf16 %v5463, %v5455
    %v5640 = vpack.c.bf16 %v5464, %v5456
    %v5641 = vpack.c.bf16 %v5465, %v5457
    %v5642 = vpack.c.bf16 %v5466, %v5458
    %v5643 = vpack.c.bf16 %v5467, %v5459
    %v5644 = vpack.c.bf16 %v5468, %v5460
    %v5645 = vpack.c.bf16 %v5469, %v5461
    %v5646 = vpack.c.bf16 %v5478, %v5470
    %v5647 = vpack.c.bf16 %v5479, %v5471
    %v5648 = vpack.c.bf16 %v5480, %v5472
    %v5649 = vpack.c.bf16 %v5481, %v5473
    %v5650 = vpack.c.bf16 %v5482, %v5474
    %v5651 = vpack.c.bf16 %v5483, %v5475
    %v5652 = vpack.c.bf16 %v5484, %v5476
    %v5653 = vpack.c.bf16 %v5485, %v5477
    %v5654 = vpack.c.bf16 %v5494, %v5486
    %v5655 = vpack.c.bf16 %v5495, %v5487
    %v5656 = vpack.c.bf16 %v5496, %v5488
    %v5657 = vpack.c.bf16 %v5497, %v5489
    %v5658 = vpack.c.bf16 %v5498, %v5490
    %v5659 = vpack.c.bf16 %v5499, %v5491
    %v5660 = vpack.c.bf16 %v5500, %v5492
    %v5661 = vpack.c.bf16 %v5501, %v5493
    %v5662 = vpack.c.bf16 %v5510, %v5502
    %v5663 = vpack.c.bf16 %v5511, %v5503
    %v5664 = vpack.c.bf16 %v5512, %v5504
    %v5665 = vpack.c.bf16 %v5513, %v5505
    %v5666 = vpack.c.bf16 %v5514, %v5506
    %v5667 = vpack.c.bf16 %v5515, %v5507
    %v5668 = vpack.c.bf16 %v5516, %v5508
    %v5669 = vpack.c.bf16 %v5517, %v5509
    %v5670 = vpack.c.bf16 %v5526, %v5518
    %v5671 = vpack.c.bf16 %v5527, %v5519
    %v5672 = vpack.c.bf16 %v5528, %v5520
    %v5673 = vpack.c.bf16 %v5529, %v5521
    %v5674 = vpack.c.bf16 %v5530, %v5522
    %v5675 = vpack.c.bf16 %v5531, %v5523
    %v5676 = vpack.c.bf16 %v5532, %v5524
    %v5677 = vpack.c.bf16 %v5533, %v5525
    %v5678 = vpack.c.bf16 %v5542, %v5534
    %v5679 = vpack.c.bf16 %v5543, %v5535
    %v5680 = vpack.c.bf16 %v5544, %v5536
    %v5681 = vpack.c.bf16 %v5545, %v5537
    %v5682 = vpack.c.bf16 %v5546, %v5538
    %v5683 = vpack.c.bf16 %v5547, %v5539
    %v5684 = vpack.c.bf16 %v5548, %v5540
    %v5685 = vpack.c.bf16 %v5549, %v5541
    %v5686 = vpack.c.bf16 %v5558, %v5550
    %v5687 = vpack.c.bf16 %v5559, %v5551
    %v5688 = vpack.c.bf16 %v5560, %v5552
    %v5689 = vpack.c.bf16 %v5561, %v5553
    %v5690 = vpack.c.bf16 %v5562, %v5554
    %v5691 = vpack.c.bf16 %v5563, %v5555
    %v5692 = vpack.c.bf16 %v5564, %v5556
    %v5693 = vpack.c.bf16 %v5565, %v5557
    %v5694 = vld [vmem:[#allocation6] sm:$0xf]
    %v5695 = vld [vmem:[#allocation6 + $0x4] sm:$0xf]
    %v5696 = vld [vmem:[#allocation6 + $0x8] sm:$0xf]
    %v5697 = vld [vmem:[#allocation6 + $0xc] sm:$0xf]
    %v5698 = vld [vmem:[#allocation6 + $0x10] sm:$0xf]
    %v5699 = vld [vmem:[#allocation6 + $0x14] sm:$0xf]
    %v5700 = vld [vmem:[#allocation6 + $0x18] sm:$0xf]
    %v5701 = vld [vmem:[#allocation6 + $0x1c] sm:$0xf]
    %v5702 = vld [vmem:[#allocation6 + $0x20] sm:$0xf]
    %v5703 = vld [vmem:[#allocation6 + $0x24] sm:$0xf]
    %v5704 = vld [vmem:[#allocation6 + $0x28] sm:$0xf]
    %v5705 = vld [vmem:[#allocation6 + $0x2c] sm:$0xf]
    %v5706 = vld [vmem:[#allocation6 + $0x30] sm:$0xf]
    %v5707 = vld [vmem:[#allocation6 + $0x34] sm:$0xf]
    %v5708 = vld [vmem:[#allocation6 + $0x38] sm:$0xf]
    %v5709 = vld [vmem:[#allocation6 + $0x3c] sm:$0xf]
    %v5710 = vld [vmem:[#allocation6 + $0x40] sm:$0xf]
    %v5711 = vld [vmem:[#allocation6 + $0x44] sm:$0xf]
    %v5712 = vld [vmem:[#allocation6 + $0x48] sm:$0xf]
    %v5713 = vld [vmem:[#allocation6 + $0x4c] sm:$0xf]
    %v5714 = vld [vmem:[#allocation6 + $0x50] sm:$0xf]
    %v5715 = vld [vmem:[#allocation6 + $0x54] sm:$0xf]
    %v5716 = vld [vmem:[#allocation6 + $0x58] sm:$0xf]
    %v5717 = vld [vmem:[#allocation6 + $0x5c] sm:$0xf]
    %v5718 = vld [vmem:[#allocation6 + $0x60] sm:$0xf]
    %v5719 = vld [vmem:[#allocation6 + $0x64] sm:$0xf]
    %v5720 = vld [vmem:[#allocation6 + $0x68] sm:$0xf]
    %v5721 = vld [vmem:[#allocation6 + $0x6c] sm:$0xf]
    %v5722 = vld [vmem:[#allocation6 + $0x70] sm:$0xf]
    %v5723 = vld [vmem:[#allocation6 + $0x74] sm:$0xf]
    %v5724 = vld [vmem:[#allocation6 + $0x78] sm:$0xf]
    %v5725 = vld [vmem:[#allocation6 + $0x7c] sm:$0xf]
    %v5726 = vld [vmem:[#allocation6 + $0x80] sm:$0xf]
    %v5727 = vld [vmem:[#allocation6 + $0x84] sm:$0xf]
    %v5728 = vld [vmem:[#allocation6 + $0x88] sm:$0xf]
    %v5729 = vld [vmem:[#allocation6 + $0x8c] sm:$0xf]
    %v5730 = vld [vmem:[#allocation6 + $0x90] sm:$0xf]
    %v5731 = vld [vmem:[#allocation6 + $0x94] sm:$0xf]
    %v5732 = vld [vmem:[#allocation6 + $0x98] sm:$0xf]
    %v5733 = vld [vmem:[#allocation6 + $0x9c] sm:$0xf]
    %v5734 = vld [vmem:[#allocation6 + $0xa0] sm:$0xf]
    %v5735 = vld [vmem:[#allocation6 + $0xa4] sm:$0xf]
    %v5736 = vld [vmem:[#allocation6 + $0xa8] sm:$0xf]
    %v5737 = vld [vmem:[#allocation6 + $0xac] sm:$0xf]
    %v5738 = vld [vmem:[#allocation6 + $0xb0] sm:$0xf]
    %v5739 = vld [vmem:[#allocation6 + $0xb4] sm:$0xf]
    %v5740 = vld [vmem:[#allocation6 + $0xb8] sm:$0xf]
    %v5741 = vld [vmem:[#allocation6 + $0xbc] sm:$0xf]
    %v5742 = vld [vmem:[#allocation6 + $0xc0] sm:$0xf]
    %v5743 = vld [vmem:[#allocation6 + $0xc4] sm:$0xf]
    %v5744 = vld [vmem:[#allocation6 + $0xc8] sm:$0xf]
    %v5745 = vld [vmem:[#allocation6 + $0xcc] sm:$0xf]
    %v5746 = vld [vmem:[#allocation6 + $0xd0] sm:$0xf]
    %v5747 = vld [vmem:[#allocation6 + $0xd4] sm:$0xf]
    %v5748 = vld [vmem:[#allocation6 + $0xd8] sm:$0xf]
    %v5749 = vld [vmem:[#allocation6 + $0xdc] sm:$0xf]
    %v5750 = vld [vmem:[#allocation6 + $0xe0] sm:$0xf]
    %v5751 = vld [vmem:[#allocation6 + $0xe4] sm:$0xf]
    %v5752 = vld [vmem:[#allocation6 + $0xe8] sm:$0xf]
    %v5753 = vld [vmem:[#allocation6 + $0xec] sm:$0xf]
    %v5754 = vld [vmem:[#allocation6 + $0xf0] sm:$0xf]
    %v5755 = vld [vmem:[#allocation6 + $0xf4] sm:$0xf]
    %v5756 = vld [vmem:[#allocation6 + $0xf8] sm:$0xf]
    %v5757 = vld [vmem:[#allocation6 + $0xfc] sm:$0xf]
    %v5758 = vld [vmem:[#allocation6 + $0x100] sm:$0xf]
    %v5759 = vld [vmem:[#allocation6 + $0x104] sm:$0xf]
    %v5760 = vld [vmem:[#allocation6 + $0x108] sm:$0xf]
    %v5761 = vld [vmem:[#allocation6 + $0x10c] sm:$0xf]
    %v5762 = vld [vmem:[#allocation6 + $0x110] sm:$0xf]
    %v5763 = vld [vmem:[#allocation6 + $0x114] sm:$0xf]
    %v5764 = vld [vmem:[#allocation6 + $0x118] sm:$0xf]
    %v5765 = vld [vmem:[#allocation6 + $0x11c] sm:$0xf]
    %v5766 = vld [vmem:[#allocation6 + $0x120] sm:$0xf]
    %v5767 = vld [vmem:[#allocation6 + $0x124] sm:$0xf]
    %v5768 = vld [vmem:[#allocation6 + $0x128] sm:$0xf]
    %v5769 = vld [vmem:[#allocation6 + $0x12c] sm:$0xf]
    %v5770 = vld [vmem:[#allocation6 + $0x130] sm:$0xf]
    %v5771 = vld [vmem:[#allocation6 + $0x134] sm:$0xf]
    %v5772 = vld [vmem:[#allocation6 + $0x138] sm:$0xf]
    %v5773 = vld [vmem:[#allocation6 + $0x13c] sm:$0xf]
    %v5774 = vld [vmem:[#allocation6 + $0x140] sm:$0xf]
    %v5775 = vld [vmem:[#allocation6 + $0x144] sm:$0xf]
    %v5776 = vld [vmem:[#allocation6 + $0x148] sm:$0xf]
    %v5777 = vld [vmem:[#allocation6 + $0x14c] sm:$0xf]
    %v5778 = vld [vmem:[#allocation6 + $0x150] sm:$0xf]
    %v5779 = vld [vmem:[#allocation6 + $0x154] sm:$0xf]
    %v5780 = vld [vmem:[#allocation6 + $0x158] sm:$0xf]
    %v5781 = vld [vmem:[#allocation6 + $0x15c] sm:$0xf]
    %v5782 = vld [vmem:[#allocation6 + $0x160] sm:$0xf]
    %v5783 = vld [vmem:[#allocation6 + $0x164] sm:$0xf]
    %v5784 = vld [vmem:[#allocation6 + $0x168] sm:$0xf]
    %v5785 = vld [vmem:[#allocation6 + $0x16c] sm:$0xf]
    %v5786 = vld [vmem:[#allocation6 + $0x170] sm:$0xf]
    %v5787 = vld [vmem:[#allocation6 + $0x174] sm:$0xf]
    %v5788 = vld [vmem:[#allocation6 + $0x178] sm:$0xf]
    %v5789 = vld [vmem:[#allocation6 + $0x17c] sm:$0xf]
    %v5790 = vld [vmem:[#allocation6 + $0x180] sm:$0xf]
    %v5791 = vld [vmem:[#allocation6 + $0x184] sm:$0xf]
    %v5792 = vld [vmem:[#allocation6 + $0x188] sm:$0xf]
    %v5793 = vld [vmem:[#allocation6 + $0x18c] sm:$0xf]
    %v5794 = vld [vmem:[#allocation6 + $0x190] sm:$0xf]
    %v5795 = vld [vmem:[#allocation6 + $0x194] sm:$0xf]
    %v5796 = vld [vmem:[#allocation6 + $0x198] sm:$0xf]
    %v5797 = vld [vmem:[#allocation6 + $0x19c] sm:$0xf]
    %v5798 = vld [vmem:[#allocation6 + $0x1a0] sm:$0xf]
    %v5799 = vld [vmem:[#allocation6 + $0x1a4] sm:$0xf]
    %v5800 = vld [vmem:[#allocation6 + $0x1a8] sm:$0xf]
    %v5801 = vld [vmem:[#allocation6 + $0x1ac] sm:$0xf]
    %v5802 = vld [vmem:[#allocation6 + $0x1b0] sm:$0xf]
    %v5803 = vld [vmem:[#allocation6 + $0x1b4] sm:$0xf]
    %v5804 = vld [vmem:[#allocation6 + $0x1b8] sm:$0xf]
    %v5805 = vld [vmem:[#allocation6 + $0x1bc] sm:$0xf]
    %v5806 = vld [vmem:[#allocation6 + $0x1c0] sm:$0xf]
    %v5807 = vld [vmem:[#allocation6 + $0x1c4] sm:$0xf]
    %v5808 = vld [vmem:[#allocation6 + $0x1c8] sm:$0xf]
    %v5809 = vld [vmem:[#allocation6 + $0x1cc] sm:$0xf]
    %v5810 = vld [vmem:[#allocation6 + $0x1d0] sm:$0xf]
    %v5811 = vld [vmem:[#allocation6 + $0x1d4] sm:$0xf]
    %v5812 = vld [vmem:[#allocation6 + $0x1d8] sm:$0xf]
    %v5813 = vld [vmem:[#allocation6 + $0x1dc] sm:$0xf]
    %v5814 = vld [vmem:[#allocation6 + $0x1e0] sm:$0xf]
    %v5815 = vld [vmem:[#allocation6 + $0x1e4] sm:$0xf]
    %v5816 = vld [vmem:[#allocation6 + $0x1e8] sm:$0xf]
    %v5817 = vld [vmem:[#allocation6 + $0x1ec] sm:$0xf]
    %v5818 = vld [vmem:[#allocation6 + $0x1f0] sm:$0xf]
    %v5819 = vld [vmem:[#allocation6 + $0x1f4] sm:$0xf]
    %v5820 = vld [vmem:[#allocation6 + $0x1f8] sm:$0xf]
    %v5821 = vld [vmem:[#allocation6 + $0x1fc] sm:$0xf]
    %v5822 = vld [vmem:[#allocation7] sm:$0x1]
    %v5824 = vlaneseq
    %v5825 = vshrl.u32 %v5824, 7
    %v5826 = vsub.s32 0, %v5825
    %v5827 = vrot.slane %v5822, %v5826
    %v5957 = vunpack.c.l.b16 %v5694
    %v5958 = vunpack.c.l.b16 %v5695
    %v5959 = vunpack.c.l.b16 %v5696
    %v5960 = vunpack.c.l.b16 %v5697
    %v5961 = vunpack.c.l.b16 %v5698
    %v5962 = vunpack.c.l.b16 %v5699
    %v5963 = vunpack.c.l.b16 %v5700
    %v5964 = vunpack.c.l.b16 %v5701
    %v5965 = vunpack.c.l.b16 %v5702
    %v5966 = vunpack.c.l.b16 %v5703
    %v5967 = vunpack.c.l.b16 %v5704
    %v5968 = vunpack.c.l.b16 %v5705
    %v5969 = vunpack.c.l.b16 %v5706
    %v5970 = vunpack.c.l.b16 %v5707
    %v5971 = vunpack.c.l.b16 %v5708
    %v5972 = vunpack.c.l.b16 %v5709
    %v5973 = vunpack.c.l.b16 %v5710
    %v5974 = vunpack.c.l.b16 %v5711
    %v5975 = vunpack.c.l.b16 %v5712
    %v5976 = vunpack.c.l.b16 %v5713
    %v5977 = vunpack.c.l.b16 %v5714
    %v5978 = vunpack.c.l.b16 %v5715
    %v5979 = vunpack.c.l.b16 %v5716
    %v5980 = vunpack.c.l.b16 %v5717
    %v5981 = vunpack.c.l.b16 %v5718
    %v5982 = vunpack.c.l.b16 %v5719
    %v5983 = vunpack.c.l.b16 %v5720
    %v5984 = vunpack.c.l.b16 %v5721
    %v5985 = vunpack.c.l.b16 %v5722
    %v5986 = vunpack.c.l.b16 %v5723
    %v5987 = vunpack.c.l.b16 %v5724
    %v5988 = vunpack.c.l.b16 %v5725
    %v5989 = vunpack.c.l.b16 %v5726
    %v5990 = vunpack.c.l.b16 %v5727
    %v5991 = vunpack.c.l.b16 %v5728
    %v5992 = vunpack.c.l.b16 %v5729
    %v5993 = vunpack.c.l.b16 %v5730
    %v5994 = vunpack.c.l.b16 %v5731
    %v5995 = vunpack.c.l.b16 %v5732
    %v5996 = vunpack.c.l.b16 %v5733
    %v5997 = vunpack.c.l.b16 %v5734
    %v5998 = vunpack.c.l.b16 %v5735
    %v5999 = vunpack.c.l.b16 %v5736
    %v6000 = vunpack.c.l.b16 %v5737
    %v6001 = vunpack.c.l.b16 %v5738
    %v6002 = vunpack.c.l.b16 %v5739
    %v6003 = vunpack.c.l.b16 %v5740
    %v6004 = vunpack.c.l.b16 %v5741
    %v6005 = vunpack.c.l.b16 %v5742
    %v6006 = vunpack.c.l.b16 %v5743
    %v6007 = vunpack.c.l.b16 %v5744
    %v6008 = vunpack.c.l.b16 %v5745
    %v6009 = vunpack.c.l.b16 %v5746
    %v6010 = vunpack.c.l.b16 %v5747
    %v6011 = vunpack.c.l.b16 %v5748
    %v6012 = vunpack.c.l.b16 %v5749
    %v6013 = vunpack.c.l.b16 %v5750
    %v6014 = vunpack.c.l.b16 %v5751
    %v6015 = vunpack.c.l.b16 %v5752
    %v6016 = vunpack.c.l.b16 %v5753
    %v6017 = vunpack.c.l.b16 %v5754
    %v6018 = vunpack.c.l.b16 %v5755
    %v6019 = vunpack.c.l.b16 %v5756
    %v6020 = vunpack.c.l.b16 %v5757
    %v6021 = vunpack.c.l.b16 %v5758
    %v6022 = vunpack.c.l.b16 %v5759
    %v6023 = vunpack.c.l.b16 %v5760
    %v6024 = vunpack.c.l.b16 %v5761
    %v6025 = vunpack.c.l.b16 %v5762
    %v6026 = vunpack.c.l.b16 %v5763
    %v6027 = vunpack.c.l.b16 %v5764
    %v6028 = vunpack.c.l.b16 %v5765
    %v6029 = vunpack.c.l.b16 %v5766
    %v6030 = vunpack.c.l.b16 %v5767
    %v6031 = vunpack.c.l.b16 %v5768
    %v6032 = vunpack.c.l.b16 %v5769
    %v6033 = vunpack.c.l.b16 %v5770
    %v6034 = vunpack.c.l.b16 %v5771
    %v6035 = vunpack.c.l.b16 %v5772
    %v6036 = vunpack.c.l.b16 %v5773
    %v6037 = vunpack.c.l.b16 %v5774
    %v6038 = vunpack.c.l.b16 %v5775
    %v6039 = vunpack.c.l.b16 %v5776
    %v6040 = vunpack.c.l.b16 %v5777
    %v6041 = vunpack.c.l.b16 %v5778
    %v6042 = vunpack.c.l.b16 %v5779
    %v6043 = vunpack.c.l.b16 %v5780
    %v6044 = vunpack.c.l.b16 %v5781
    %v6045 = vunpack.c.l.b16 %v5782
    %v6046 = vunpack.c.l.b16 %v5783
    %v6047 = vunpack.c.l.b16 %v5784
    %v6048 = vunpack.c.l.b16 %v5785
    %v6049 = vunpack.c.l.b16 %v5786
    %v6050 = vunpack.c.l.b16 %v5787
    %v6051 = vunpack.c.l.b16 %v5788
    %v6052 = vunpack.c.l.b16 %v5789
    %v6053 = vunpack.c.l.b16 %v5790
    %v6054 = vunpack.c.l.b16 %v5791
    %v6055 = vunpack.c.l.b16 %v5792
    %v6056 = vunpack.c.l.b16 %v5793
    %v6057 = vunpack.c.l.b16 %v5794
    %v6058 = vunpack.c.l.b16 %v5795
    %v6059 = vunpack.c.l.b16 %v5796
    %v6060 = vunpack.c.l.b16 %v5797
    %v6061 = vunpack.c.l.b16 %v5798
    %v6062 = vunpack.c.l.b16 %v5799
    %v6063 = vunpack.c.l.b16 %v5800
    %v6064 = vunpack.c.l.b16 %v5801
    %v6065 = vunpack.c.l.b16 %v5802
    %v6066 = vunpack.c.l.b16 %v5803
    %v6067 = vunpack.c.l.b16 %v5804
    %v6068 = vunpack.c.l.b16 %v5805
    %v6069 = vunpack.c.l.b16 %v5806
    %v6070 = vunpack.c.l.b16 %v5807
    %v6071 = vunpack.c.l.b16 %v5808
    %v6072 = vunpack.c.l.b16 %v5809
    %v6073 = vunpack.c.l.b16 %v5810
    %v6074 = vunpack.c.l.b16 %v5811
    %v6075 = vunpack.c.l.b16 %v5812
    %v6076 = vunpack.c.l.b16 %v5813
    %v6077 = vunpack.c.l.b16 %v5814
    %v6078 = vunpack.c.l.b16 %v5815
    %v6079 = vunpack.c.l.b16 %v5816
    %v6080 = vunpack.c.l.b16 %v5817
    %v6081 = vunpack.c.l.b16 %v5818
    %v6082 = vunpack.c.l.b16 %v5819
    %v6083 = vunpack.c.l.b16 %v5820
    %v6084 = vunpack.c.l.b16 %v5821
    %v6085 = vpack.c.b16 %v5958, %v5957
    %v6086 = vpack.c.b16 %v5960, %v5959
    %v6087 = vpack.c.b16 %v5962, %v5961
    %v6088 = vpack.c.b16 %v5964, %v5963
    %v6089 = vpack.c.b16 %v5966, %v5965
    %v6090 = vpack.c.b16 %v5968, %v5967
    %v6091 = vpack.c.b16 %v5970, %v5969
    %v6092 = vpack.c.b16 %v5972, %v5971
    %v6093 = vpack.c.b16 %v5974, %v5973
    %v6094 = vpack.c.b16 %v5976, %v5975
    %v6095 = vpack.c.b16 %v5978, %v5977
    %v6096 = vpack.c.b16 %v5980, %v5979
    %v6097 = vpack.c.b16 %v5982, %v5981
    %v6098 = vpack.c.b16 %v5984, %v5983
    %v6099 = vpack.c.b16 %v5986, %v5985
    %v6100 = vpack.c.b16 %v5988, %v5987
    %v6101 = vpack.c.b16 %v5990, %v5989
    %v6102 = vpack.c.b16 %v5992, %v5991
    %v6103 = vpack.c.b16 %v5994, %v5993
    %v6104 = vpack.c.b16 %v5996, %v5995
    %v6105 = vpack.c.b16 %v5998, %v5997
    %v6106 = vpack.c.b16 %v6000, %v5999
    %v6107 = vpack.c.b16 %v6002, %v6001
    %v6108 = vpack.c.b16 %v6004, %v6003
    %v6109 = vpack.c.b16 %v6006, %v6005
    %v6110 = vpack.c.b16 %v6008, %v6007
    %v6111 = vpack.c.b16 %v6010, %v6009
    %v6112 = vpack.c.b16 %v6012, %v6011
    %v6113 = vpack.c.b16 %v6014, %v6013
    %v6114 = vpack.c.b16 %v6016, %v6015
    %v6115 = vpack.c.b16 %v6018, %v6017
    %v6116 = vpack.c.b16 %v6020, %v6019
    %v6117 = vpack.c.b16 %v6022, %v6021
    %v6118 = vpack.c.b16 %v6024, %v6023
    %v6119 = vpack.c.b16 %v6026, %v6025
    %v6120 = vpack.c.b16 %v6028, %v6027
    %v6121 = vpack.c.b16 %v6030, %v6029
    %v6122 = vpack.c.b16 %v6032, %v6031
    %v6123 = vpack.c.b16 %v6034, %v6033
    %v6124 = vpack.c.b16 %v6036, %v6035
    %v6125 = vpack.c.b16 %v6038, %v6037
    %v6126 = vpack.c.b16 %v6040, %v6039
    %v6127 = vpack.c.b16 %v6042, %v6041
    %v6128 = vpack.c.b16 %v6044, %v6043
    %v6129 = vpack.c.b16 %v6046, %v6045
    %v6130 = vpack.c.b16 %v6048, %v6047
    %v6131 = vpack.c.b16 %v6050, %v6049
    %v6132 = vpack.c.b16 %v6052, %v6051
    %v6133 = vpack.c.b16 %v6054, %v6053
    %v6134 = vpack.c.b16 %v6056, %v6055
    %v6135 = vpack.c.b16 %v6058, %v6057
    %v6136 = vpack.c.b16 %v6060, %v6059
    %v6137 = vpack.c.b16 %v6062, %v6061
    %v6138 = vpack.c.b16 %v6064, %v6063
    %v6139 = vpack.c.b16 %v6066, %v6065
    %v6140 = vpack.c.b16 %v6068, %v6067
    %v6141 = vpack.c.b16 %v6070, %v6069
    %v6142 = vpack.c.b16 %v6072, %v6071
    %v6143 = vpack.c.b16 %v6074, %v6073
    %v6144 = vpack.c.b16 %v6076, %v6075
    %v6145 = vpack.c.b16 %v6078, %v6077
    %v6146 = vpack.c.b16 %v6080, %v6079
    %v6147 = vpack.c.b16 %v6082, %v6081
    %v6148 = vpack.c.b16 %v6084, %v6083
    %6213 = vmatprep.subr.bf16.mxu0 0
    %6214 = vmatpush1.bf16.msra.mxu0 %v6085
    %6215 = vmatprep.subr.bf16.mxu0 0
    %6216 = vmatpush1.bf16.msra.mxu0 %v6086
    %6217 = vmatprep.subr.bf16.mxu0 0
    %6218 = vmatpush1.bf16.msra.mxu0 %v6087
    %6219 = vmatprep.subr.bf16.mxu0 0
    %6220 = vmatpush1.bf16.msra.mxu0 %v6088
    %6221 = vmatprep.subr.bf16.mxu0 0
    %6222 = vmatpush1.bf16.msra.mxu0 %v6089
    %6223 = vmatprep.subr.bf16.mxu0 0
    %6224 = vmatpush1.bf16.msra.mxu0 %v6090
    %6225 = vmatprep.subr.bf16.mxu0 0
    %6226 = vmatpush1.bf16.msra.mxu0 %v6091
    %6227 = vmatprep.subr.bf16.mxu0 0
    %6228 = vmatpush1.bf16.msra.mxu0 %v6092
    %6229 = vmatprep.subr.bf16.mxu0 0
    %6230 = vmatpush1.bf16.msra.mxu0 %v6093
    %6231 = vmatprep.subr.bf16.mxu0 0
    %6232 = vmatpush1.bf16.msra.mxu0 %v6094
    %6233 = vmatprep.subr.bf16.mxu0 0
    %6234 = vmatpush1.bf16.msra.mxu0 %v6095
    %6235 = vmatprep.subr.bf16.mxu0 0
    %6236 = vmatpush1.bf16.msra.mxu0 %v6096
    %6237 = vmatprep.subr.bf16.mxu0 0
    %6238 = vmatpush1.bf16.msra.mxu0 %v6097
    %6239 = vmatprep.subr.bf16.mxu0 0
    %6240 = vmatpush1.bf16.msra.mxu0 %v6098
    %6241 = vmatprep.subr.bf16.mxu0 0
    %6242 = vmatpush1.bf16.msra.mxu0 %v6099
    %6243 = vmatprep.subr.bf16.mxu0 0
    %6244 = vmatpush1.bf16.msra.mxu0 %v6100
    %6245 = vmatprep.mubr.bf16.mxu0 %v5567
    %6246 = vmatmul.mubr.bf16.gmra.mrb[0].mxu0 %v5566
    %v6247 = vpop.f32.mrb[0].mxu0
    %v6248 = vadd.f32 %v5827, %v6247
    %v6249 = vpop.f32.mrb[0].mxu0
    %v6250 = vpop.f32.mrb[0].mxu0
    %v6251 = vadd.f32 %v5827, %v6250
    %v6252 = vpop.f32.mrb[0].mxu0
    %6253 = vmatprep.mubr.bf16.mxu0 %v5575
    %6254 = vmatmul.mubr.bf16.gmra.mrb[0].mxu0 %v5574
    %v6255 = vpop.f32.mrb[0].mxu0
    %v6256 = vadd.f32 %v5827, %v6255
    %v6257 = vpop.f32.mrb[0].mxu0
    %v6258 = vpop.f32.mrb[0].mxu0
    %v6259 = vadd.f32 %v5827, %v6258
    %v6260 = vpop.f32.mrb[0].mxu0
    %6261 = vmatprep.mubr.bf16.mxu0 %v5583
    %6262 = vmatmul.mubr.bf16.gmra.mrb[0].mxu0 %v5582
    %v6263 = vpop.f32.mrb[0].mxu0
    %v6264 = vadd.f32 %v5827, %v6263
    %v6265 = vpop.f32.mrb[0].mxu0
    %v6266 = vpop.f32.mrb[0].mxu0
    %v6267 = vadd.f32 %v5827, %v6266
    %v6268 = vpop.f32.mrb[0].mxu0
    %6269 = vmatprep.mubr.bf16.mxu0 %v5591
    %6270 = vmatmul.mubr.bf16.gmra.mrb[0].mxu0 %v5590
    %v6271 = vpop.f32.mrb[0].mxu0
    %v6272 = vadd.f32 %v5827, %v6271
    %v6273 = vpop.f32.mrb[0].mxu0
    %v6274 = vpop.f32.mrb[0].mxu0
    %v6275 = vadd.f32 %v5827, %v6274
    %v6276 = vpop.f32.mrb[0].mxu0
    %6277 = vmatprep.mubr.bf16.mxu0 %v5599
    %6278 = vmatmul.mubr.bf16.gmra.mrb[0].mxu0 %v5598
    %v6279 = vpop.f32.mrb[0].mxu0
    %v6280 = vadd.f32 %v5827, %v6279
    %v6281 = vpop.f32.mrb[0].mxu0
    %v6282 = vpop.f32.mrb[0].mxu0
    %v6283 = vadd.f32 %v5827, %v6282
    %v6284 = vpop.f32.mrb[0].mxu0
    %6285 = vmatprep.mubr.bf16.mxu0 %v5607
    %6286 = vmatmul.mubr.bf16.gmra.mrb[0].mxu0 %v5606
    %v6287 = vpop.f32.mrb[0].mxu0
    %v6288 = vadd.f32 %v5827, %v6287
    %v6289 = vpop.f32.mrb[0].mxu0
    %v6290 = vpop.f32.mrb[0].mxu0
    %v6291 = vadd.f32 %v5827, %v6290
    %v6292 = vpop.f32.mrb[0].mxu0
    %6293 = vmatprep.mubr.bf16.mxu0 %v5615
    %6294 = vmatmul.mubr.bf16.gmra.mrb[0].mxu0 %v5614
    %v6295 = vpop.f32.mrb[0].mxu0
    %v6296 = vadd.f32 %v5827, %v6295
    %v6297 = vpop.f32.mrb[0].mxu0
    %v6298 = vpop.f32.mrb[0].mxu0
    %v6299 = vadd.f32 %v5827, %v6298
    %v6300 = vpop.f32.mrb[0].mxu0
    %6301 = vmatprep.mubr.bf16.mxu0 %v5623
    %6302 = vmatmul.mubr.bf16.gmra.mrb[0].mxu0 %v5622
    %v6303 = vpop.f32.mrb[0].mxu0
    %v6304 = vadd.f32 %v5827, %v6303
    %v6305 = vpop.f32.mrb[0].mxu0
    %v6306 = vpop.f32.mrb[0].mxu0
    %v6307 = vadd.f32 %v5827, %v6306
    %v6308 = vpop.f32.mrb[0].mxu0
    %6309 = vmatprep.mubr.bf16.mxu0 %v5631
    %6310 = vmatmul.mubr.bf16.gmra.mrb[0].mxu0 %v5630
    %v6311 = vpop.f32.mrb[0].mxu0
    %v6312 = vadd.f32 %v5827, %v6311
    %v6313 = vpop.f32.mrb[0].mxu0
    %v6314 = vpop.f32.mrb[0].mxu0
    %v6315 = vadd.f32 %v5827, %v6314
    %v6316 = vpop.f32.mrb[0].mxu0
    %6317 = vmatprep.mubr.bf16.mxu0 %v5639
    %6318 = vmatmul.mubr.bf16.gmra.mrb[0].mxu0 %v5638
    %v6319 = vpop.f32.mrb[0].mxu0
    %v6320 = vadd.f32 %v5827, %v6319
    %v6321 = vpop.f32.mrb[0].mxu0
    %v6322 = vpop.f32.mrb[0].mxu0
    %v6323 = vadd.f32 %v5827, %v6322
    %v6324 = vpop.f32.mrb[0].mxu0
    %6325 = vmatprep.mubr.bf16.mxu0 %v5647
    %6326 = vmatmul.mubr.bf16.gmra.mrb[0].mxu0 %v5646
    %v6327 = vpop.f32.mrb[0].mxu0
    %v6328 = vadd.f32 %v5827, %v6327
    %v6329 = vpop.f32.mrb[0].mxu0
    %v6330 = vpop.f32.mrb[0].mxu0
    %v6331 = vadd.f32 %v5827, %v6330
    %v6332 = vpop.f32.mrb[0].mxu0
    %6333 = vmatprep.mubr.bf16.mxu0 %v5655
    %6334 = vmatmul.mubr.bf16.gmra.mrb[0].mxu0 %v5654
    %v6335 = vpop.f32.mrb[0].mxu0
    %v6336 = vadd.f32 %v5827, %v6335
    %v6337 = vpop.f32.mrb[0].mxu0
    %v6338 = vpop.f32.mrb[0].mxu0
    %v6339 = vadd.f32 %v5827, %v6338
    %v6340 = vpop.f32.mrb[0].mxu0
    %6341 = vmatprep.mubr.bf16.mxu0 %v5663
    %6342 = vmatmul.mubr.bf16.gmra.mrb[0].mxu0 %v5662
    %v6343 = vpop.f32.mrb[0].mxu0
    %v6344 = vadd.f32 %v5827, %v6343
    %v6345 = vpop.f32.mrb[0].mxu0
    %v6346 = vpop.f32.mrb[0].mxu0
    %v6347 = vadd.f32 %v5827, %v6346
    %v6348 = vpop.f32.mrb[0].mxu0
    %6349 = vmatprep.mubr.bf16.mxu0 %v5671
    %6350 = vmatmul.mubr.bf16.gmra.mrb[0].mxu0 %v5670
    %v6351 = vpop.f32.mrb[0].mxu0
    %v6352 = vadd.f32 %v5827, %v6351
    %v6353 = vpop.f32.mrb[0].mxu0
    %v6354 = vpop.f32.mrb[0].mxu0
    %v6355 = vadd.f32 %v5827, %v6354
    %v6356 = vpop.f32.mrb[0].mxu0
    %6357 = vmatprep.mubr.bf16.mxu0 %v5679
    %6358 = vmatmul.mubr.bf16.gmra.mrb[0].mxu0 %v5678
    %v6359 = vpop.f32.mrb[0].mxu0
    %v6360 = vadd.f32 %v5827, %v6359
    %v6361 = vpop.f32.mrb[0].mxu0
    %v6362 = vpop.f32.mrb[0].mxu0
    %v6363 = vadd.f32 %v5827, %v6362
    %v6364 = vpop.f32.mrb[0].mxu0
    %6365 = vmatprep.mubr.bf16.mxu0 %v5687
    %6366 = vmatmul.mubr.bf16.gmra.mrb[0].mxu0 %v5686
    %v6367 = vpop.f32.mrb[0].mxu0
    %v6368 = vadd.f32 %v5827, %v6367
    %v6369 = vpop.f32.mrb[0].mxu0
    %v6370 = vpop.f32.mrb[0].mxu0
    %v6371 = vadd.f32 %v5827, %v6370
    %v6372 = vpop.f32.mrb[0].mxu0
    %6373 = vdwg.mxu0
    %6374 = vmatprep.subr.bf16.mxu0 0
    %6375 = vmatpush1.bf16.msra.mxu0 %v6101
    %6376 = vmatprep.subr.bf16.mxu0 0
    %6377 = vmatpush1.bf16.msra.mxu0 %v6102
    %6378 = vmatprep.subr.bf16.mxu0 0
    %6379 = vmatpush1.bf16.msra.mxu0 %v6103
    %6380 = vmatprep.subr.bf16.mxu0 0
    %6381 = vmatpush1.bf16.msra.mxu0 %v6104
    %6382 = vmatprep.subr.bf16.mxu0 0
    %6383 = vmatpush1.bf16.msra.mxu0 %v6105
    %6384 = vmatprep.subr.bf16.mxu0 0
    %6385 = vmatpush1.bf16.msra.mxu0 %v6106
    %6386 = vmatprep.subr.bf16.mxu0 0
    %6387 = vmatpush1.bf16.msra.mxu0 %v6107
    %6388 = vmatprep.subr.bf16.mxu0 0
    %6389 = vmatpush1.bf16.msra.mxu0 %v6108
    %6390 = vmatprep.subr.bf16.mxu0 0
    %6391 = vmatpush1.bf16.msra.mxu0 %v6109
    %6392 = vmatprep.subr.bf16.mxu0 0
    %6393 = vmatpush1.bf16.msra.mxu0 %v6110
    %6394 = vmatprep.subr.bf16.mxu0 0
    %6395 = vmatpush1.bf16.msra.mxu0 %v6111
    %6396 = vmatprep.subr.bf16.mxu0 0
    %6397 = vmatpush1.bf16.msra.mxu0 %v6112
    %6398 = vmatprep.subr.bf16.mxu0 0
    %6399 = vmatpush1.bf16.msra.mxu0 %v6113
    %6400 = vmatprep.subr.bf16.mxu0 0
    %6401 = vmatpush1.bf16.msra.mxu0 %v6114
    %6402 = vmatprep.subr.bf16.mxu0 0
    %6403 = vmatpush1.bf16.msra.mxu0 %v6115
    %6404 = vmatprep.subr.bf16.mxu0 0
    %6405 = vmatpush1.bf16.msra.mxu0 %v6116
    %6406 = vmatprep.mubr.bf16.mxu0 %v5569
    %6407 = vmatmul.mubr.bf16.gmra.mrb[0].mxu0 %v5568
    %v6408 = vpop.f32.mrb[0].mxu0
    %v6409 = vadd.f32 %v6248, %v6408
    %v6410 = vpop.f32.mrb[0].mxu0
    %v6411 = vpop.f32.mrb[0].mxu0
    %v6412 = vadd.f32 %v6251, %v6411
    %v6413 = vpop.f32.mrb[0].mxu0
    %6414 = vmatprep.mubr.bf16.mxu0 %v5577
    %6415 = vmatmul.mubr.bf16.gmra.mrb[0].mxu0 %v5576
    %v6416 = vpop.f32.mrb[0].mxu0
    %v6417 = vadd.f32 %v6256, %v6416
    %v6418 = vpop.f32.mrb[0].mxu0
    %v6419 = vpop.f32.mrb[0].mxu0
    %v6420 = vadd.f32 %v6259, %v6419
    %v6421 = vpop.f32.mrb[0].mxu0
    %6422 = vmatprep.mubr.bf16.mxu0 %v5585
    %6423 = vmatmul.mubr.bf16.gmra.mrb[0].mxu0 %v5584
    %v6424 = vpop.f32.mrb[0].mxu0
    %v6425 = vadd.f32 %v6264, %v6424
    %v6426 = vpop.f32.mrb[0].mxu0
    %v6427 = vpop.f32.mrb[0].mxu0
    %v6428 = vadd.f32 %v6267, %v6427
    %v6429 = vpop.f32.mrb[0].mxu0
    %6430 = vmatprep.mubr.bf16.mxu0 %v5593
    %6431 = vmatmul.mubr.bf16.gmra.mrb[0].mxu0 %v5592
    %v6432 = vpop.f32.mrb[0].mxu0
    %v6433 = vadd.f32 %v6272, %v6432
    %v6434 = vpop.f32.mrb[0].mxu0
    %v6435 = vpop.f32.mrb[0].mxu0
    %v6436 = vadd.f32 %v6275, %v6435
    %v6437 = vpop.f32.mrb[0].mxu0
    %6438 = vmatprep.mubr.bf16.mxu0 %v5601
    %6439 = vmatmul.mubr.bf16.gmra.mrb[0].mxu0 %v5600
    %v6440 = vpop.f32.mrb[0].mxu0
    %v6441 = vadd.f32 %v6280, %v6440
    %v6442 = vpop.f32.mrb[0].mxu0
    %v6443 = vpop.f32.mrb[0].mxu0
    %v6444 = vadd.f32 %v6283, %v6443
    %v6445 = vpop.f32.mrb[0].mxu0
    %6446 = vmatprep.mubr.bf16.mxu0 %v5609
    %6447 = vmatmul.mubr.bf16.gmra.mrb[0].mxu0 %v5608
    %v6448 = vpop.f32.mrb[0].mxu0
    %v6449 = vadd.f32 %v6288, %v6448
    %v6450 = vpop.f32.mrb[0].mxu0
    %v6451 = vpop.f32.mrb[0].mxu0
    %v6452 = vadd.f32 %v6291, %v6451
    %v6453 = vpop.f32.mrb[0].mxu0
    %6454 = vmatprep.mubr.bf16.mxu0 %v5617
    %6455 = vmatmul.mubr.bf16.gmra.mrb[0].mxu0 %v5616
    %v6456 = vpop.f32.mrb[0].mxu0
    %v6457 = vadd.f32 %v6296, %v6456
    %v6458 = vpop.f32.mrb[0].mxu0
    %v6459 = vpop.f32.mrb[0].mxu0
    %v6460 = vadd.f32 %v6299, %v6459
    %v6461 = vpop.f32.mrb[0].mxu0
    %6462 = vmatprep.mubr.bf16.mxu0 %v5625
    %6463 = vmatmul.mubr.bf16.gmra.mrb[0].mxu0 %v5624
    %v6464 = vpop.f32.mrb[0].mxu0
    %v6465 = vadd.f32 %v6304, %v6464
    %v6466 = vpop.f32.mrb[0].mxu0
    %v6467 = vpop.f32.mrb[0].mxu0
    %v6468 = vadd.f32 %v6307, %v6467
    %v6469 = vpop.f32.mrb[0].mxu0
    %6470 = vmatprep.mubr.bf16.mxu0 %v5633
    %6471 = vmatmul.mubr.bf16.gmra.mrb[0].mxu0 %v5632
    %v6472 = vpop.f32.mrb[0].mxu0
    %v6473 = vadd.f32 %v6312, %v6472
    %v6474 = vpop.f32.mrb[0].mxu0
    %v6475 = vpop.f32.mrb[0].mxu0
    %v6476 = vadd.f32 %v6315, %v6475
    %v6477 = vpop.f32.mrb[0].mxu0
    %6478 = vmatprep.mubr.bf16.mxu0 %v5641
    %6479 = vmatmul.mubr.bf16.gmra.mrb[0].mxu0 %v5640
    %v6480 = vpop.f32.mrb[0].mxu0
    %v6481 = vadd.f32 %v6320, %v6480
    %v6482 = vpop.f32.mrb[0].mxu0
    %v6483 = vpop.f32.mrb[0].mxu0
    %v6484 = vadd.f32 %v6323, %v6483
    %v6485 = vpop.f32.mrb[0].mxu0
    %6486 = vmatprep.mubr.bf16.mxu0 %v5649
    %6487 = vmatmul.mubr.bf16.gmra.mrb[0].mxu0 %v5648
    %v6488 = vpop.f32.mrb[0].mxu0
    %v6489 = vadd.f32 %v6328, %v6488
    %v6490 = vpop.f32.mrb[0].mxu0
    %v6491 = vpop.f32.mrb[0].mxu0
    %v6492 = vadd.f32 %v6331, %v6491
    %v6493 = vpop.f32.mrb[0].mxu0
    %6494 = vmatprep.mubr.bf16.mxu0 %v5657
    %6495 = vmatmul.mubr.bf16.gmra.mrb[0].mxu0 %v5656
    %v6496 = vpop.f32.mrb[0].mxu0
    %v6497 = vadd.f32 %v6336, %v6496
    %v6498 = vpop.f32.mrb[0].mxu0
    %v6499 = vpop.f32.mrb[0].mxu0
    %v6500 = vadd.f32 %v6339, %v6499
    %v6501 = vpop.f32.mrb[0].mxu0
    %6502 = vmatprep.mubr.bf16.mxu0 %v5665
    %6503 = vmatmul.mubr.bf16.gmra.mrb[0].mxu0 %v5664
    %v6504 = vpop.f32.mrb[0].mxu0
    %v6505 = vadd.f32 %v6344, %v6504
    %v6506 = vpop.f32.mrb[0].mxu0
    %v6507 = vpop.f32.mrb[0].mxu0
    %v6508 = vadd.f32 %v6347, %v6507
    %v6509 = vpop.f32.mrb[0].mxu0
    %6510 = vmatprep.mubr.bf16.mxu0 %v5673
    %6511 = vmatmul.mubr.bf16.gmra.mrb[0].mxu0 %v5672
    %v6512 = vpop.f32.mrb[0].mxu0
    %v6513 = vadd.f32 %v6352, %v6512
    %v6514 = vpop.f32.mrb[0].mxu0
    %v6515 = vpop.f32.mrb[0].mxu0
    %v6516 = vadd.f32 %v6355, %v6515
    %v6517 = vpop.f32.mrb[0].mxu0
    %6518 = vmatprep.mubr.bf16.mxu0 %v5681
    %6519 = vmatmul.mubr.bf16.gmra.mrb[0].mxu0 %v5680
    %v6520 = vpop.f32.mrb[0].mxu0
    %v6521 = vadd.f32 %v6360, %v6520
    %v6522 = vpop.f32.mrb[0].mxu0
    %v6523 = vpop.f32.mrb[0].mxu0
    %v6524 = vadd.f32 %v6363, %v6523
    %v6525 = vpop.f32.mrb[0].mxu0
    %6526 = vmatprep.mubr.bf16.mxu0 %v5689
    %6527 = vmatmul.mubr.bf16.gmra.mrb[0].mxu0 %v5688
    %v6528 = vpop.f32.mrb[0].mxu0
    %v6529 = vadd.f32 %v6368, %v6528
    %v6530 = vpop.f32.mrb[0].mxu0
    %v6531 = vpop.f32.mrb[0].mxu0
    %v6532 = vadd.f32 %v6371, %v6531
    %v6533 = vpop.f32.mrb[0].mxu0
    %6534 = vdwg.mxu0
    %6535 = vmatprep.subr.bf16.mxu0 0
    %6536 = vmatpush1.bf16.msra.mxu0 %v6117
    %6537 = vmatprep.subr.bf16.mxu0 0
    %6538 = vmatpush1.bf16.msra.mxu0 %v6118
    %6539 = vmatprep.subr.bf16.mxu0 0
    %6540 = vmatpush1.bf16.msra.mxu0 %v6119
    %6541 = vmatprep.subr.bf16.mxu0 0
    %6542 = vmatpush1.bf16.msra.mxu0 %v6120
    %6543 = vmatprep.subr.bf16.mxu0 0
    %6544 = vmatpush1.bf16.msra.mxu0 %v6121
    %6545 = vmatprep.subr.bf16.mxu0 0
    %6546 = vmatpush1.bf16.msra.mxu0 %v6122
    %6547 = vmatprep.subr.bf16.mxu0 0
    %6548 = vmatpush1.bf16.msra.mxu0 %v6123
    %6549 = vmatprep.subr.bf16.mxu0 0
    %6550 = vmatpush1.bf16.msra.mxu0 %v6124
    %6551 = vmatprep.subr.bf16.mxu0 0
    %6552 = vmatpush1.bf16.msra.mxu0 %v6125
    %6553 = vmatprep.subr.bf16.mxu0 0
    %6554 = vmatpush1.bf16.msra.mxu0 %v6126
    %6555 = vmatprep.subr.bf16.mxu0 0
    %6556 = vmatpush1.bf16.msra.mxu0 %v6127
    %6557 = vmatprep.subr.bf16.mxu0 0
    %6558 = vmatpush1.bf16.msra.mxu0 %v6128
    %6559 = vmatprep.subr.bf16.mxu0 0
    %6560 = vmatpush1.bf16.msra.mxu0 %v6129
    %6561 = vmatprep.subr.bf16.mxu0 0
    %6562 = vmatpush1.bf16.msra.mxu0 %v6130
    %6563 = vmatprep.subr.bf16.mxu0 0
    %6564 = vmatpush1.bf16.msra.mxu0 %v6131
    %6565 = vmatprep.subr.bf16.mxu0 0
    %6566 = vmatpush1.bf16.msra.mxu0 %v6132
    %6567 = vmatprep.mubr.bf16.mxu0 %v5571
    %6568 = vmatmul.mubr.bf16.gmra.mrb[0].mxu0 %v5570
    %v6569 = vpop.f32.mrb[0].mxu0
    %v6570 = vadd.f32 %v6409, %v6569
    %v6571 = vpop.f32.mrb[0].mxu0
    %v6572 = vpop.f32.mrb[0].mxu0
    %v6573 = vadd.f32 %v6412, %v6572
    %v6574 = vpop.f32.mrb[0].mxu0
    %6575 = vmatprep.mubr.bf16.mxu0 %v5579
    %6576 = vmatmul.mubr.bf16.gmra.mrb[0].mxu0 %v5578
    %v6577 = vpop.f32.mrb[0].mxu0
    %v6578 = vadd.f32 %v6417, %v6577
    %v6579 = vpop.f32.mrb[0].mxu0
    %v6580 = vpop.f32.mrb[0].mxu0
    %v6581 = vadd.f32 %v6420, %v6580
    %v6582 = vpop.f32.mrb[0].mxu0
    %6583 = vmatprep.mubr.bf16.mxu0 %v5587
    %6584 = vmatmul.mubr.bf16.gmra.mrb[0].mxu0 %v5586
    %v6585 = vpop.f32.mrb[0].mxu0
    %v6586 = vadd.f32 %v6425, %v6585
    %v6587 = vpop.f32.mrb[0].mxu0
    %v6588 = vpop.f32.mrb[0].mxu0
    %v6589 = vadd.f32 %v6428, %v6588
    %v6590 = vpop.f32.mrb[0].mxu0
    %6591 = vmatprep.mubr.bf16.mxu0 %v5595
    %6592 = vmatmul.mubr.bf16.gmra.mrb[0].mxu0 %v5594
    %v6593 = vpop.f32.mrb[0].mxu0
    %v6594 = vadd.f32 %v6433, %v6593
    %v6595 = vpop.f32.mrb[0].mxu0
    %v6596 = vpop.f32.mrb[0].mxu0
    %v6597 = vadd.f32 %v6436, %v6596
    %v6598 = vpop.f32.mrb[0].mxu0
    %6599 = vmatprep.mubr.bf16.mxu0 %v5603
    %6600 = vmatmul.mubr.bf16.gmra.mrb[0].mxu0 %v5602
    %v6601 = vpop.f32.mrb[0].mxu0
    %v6602 = vadd.f32 %v6441, %v6601
    %v6603 = vpop.f32.mrb[0].mxu0
    %v6604 = vpop.f32.mrb[0].mxu0
    %v6605 = vadd.f32 %v6444, %v6604
    %v6606 = vpop.f32.mrb[0].mxu0
    %6607 = vmatprep.mubr.bf16.mxu0 %v5611
    %6608 = vmatmul.mubr.bf16.gmra.mrb[0].mxu0 %v5610
    %v6609 = vpop.f32.mrb[0].mxu0
    %v6610 = vadd.f32 %v6449, %v6609
    %v6611 = vpop.f32.mrb[0].mxu0
    %v6612 = vpop.f32.mrb[0].mxu0
    %v6613 = vadd.f32 %v6452, %v6612
    %v6614 = vpop.f32.mrb[0].mxu0
    %6615 = vmatprep.mubr.bf16.mxu0 %v5619
    %6616 = vmatmul.mubr.bf16.gmra.mrb[0].mxu0 %v5618
    %v6617 = vpop.f32.mrb[0].mxu0
    %v6618 = vadd.f32 %v6457, %v6617
    %v6619 = vpop.f32.mrb[0].mxu0
    %v6620 = vpop.f32.mrb[0].mxu0
    %v6621 = vadd.f32 %v6460, %v6620
    %v6622 = vpop.f32.mrb[0].mxu0
    %6623 = vmatprep.mubr.bf16.mxu0 %v5627
    %6624 = vmatmul.mubr.bf16.gmra.mrb[0].mxu0 %v5626
    %v6625 = vpop.f32.mrb[0].mxu0
    %v6626 = vadd.f32 %v6465, %v6625
    %v6627 = vpop.f32.mrb[0].mxu0
    %v6628 = vpop.f32.mrb[0].mxu0
    %v6629 = vadd.f32 %v6468, %v6628
    %v6630 = vpop.f32.mrb[0].mxu0
    %6631 = vmatprep.mubr.bf16.mxu0 %v5635
    %6632 = vmatmul.mubr.bf16.gmra.mrb[0].mxu0 %v5634
    %v6633 = vpop.f32.mrb[0].mxu0
    %v6634 = vadd.f32 %v6473, %v6633
    %v6635 = vpop.f32.mrb[0].mxu0
    %v6636 = vpop.f32.mrb[0].mxu0
    %v6637 = vadd.f32 %v6476, %v6636
    %v6638 = vpop.f32.mrb[0].mxu0
    %6639 = vmatprep.mubr.bf16.mxu0 %v5643
    %6640 = vmatmul.mubr.bf16.gmra.mrb[0].mxu0 %v5642
    %v6641 = vpop.f32.mrb[0].mxu0
    %v6642 = vadd.f32 %v6481, %v6641
    %v6643 = vpop.f32.mrb[0].mxu0
    %v6644 = vpop.f32.mrb[0].mxu0
    %v6645 = vadd.f32 %v6484, %v6644
    %v6646 = vpop.f32.mrb[0].mxu0
    %6647 = vmatprep.mubr.bf16.mxu0 %v5651
    %6648 = vmatmul.mubr.bf16.gmra.mrb[0].mxu0 %v5650
    %v6649 = vpop.f32.mrb[0].mxu0
    %v6650 = vadd.f32 %v6489, %v6649
    %v6651 = vpop.f32.mrb[0].mxu0
    %v6652 = vpop.f32.mrb[0].mxu0
    %v6653 = vadd.f32 %v6492, %v6652
    %v6654 = vpop.f32.mrb[0].mxu0
    %6655 = vmatprep.mubr.bf16.mxu0 %v5659
    %6656 = vmatmul.mubr.bf16.gmra.mrb[0].mxu0 %v5658
    %v6657 = vpop.f32.mrb[0].mxu0
    %v6658 = vadd.f32 %v6497, %v6657
    %v6659 = vpop.f32.mrb[0].mxu0
    %v6660 = vpop.f32.mrb[0].mxu0
    %v6661 = vadd.f32 %v6500, %v6660
    %v6662 = vpop.f32.mrb[0].mxu0
    %6663 = vmatprep.mubr.bf16.mxu0 %v5667
    %6664 = vmatmul.mubr.bf16.gmra.mrb[0].mxu0 %v5666
    %v6665 = vpop.f32.mrb[0].mxu0
    %v6666 = vadd.f32 %v6505, %v6665
    %v6667 = vpop.f32.mrb[0].mxu0
    %v6668 = vpop.f32.mrb[0].mxu0
    %v6669 = vadd.f32 %v6508, %v6668
    %v6670 = vpop.f32.mrb[0].mxu0
    %6671 = vmatprep.mubr.bf16.mxu0 %v5675
    %6672 = vmatmul.mubr.bf16.gmra.mrb[0].mxu0 %v5674
    %v6673 = vpop.f32.mrb[0].mxu0
    %v6674 = vadd.f32 %v6513, %v6673
    %v6675 = vpop.f32.mrb[0].mxu0
    %v6676 = vpop.f32.mrb[0].mxu0
    %v6677 = vadd.f32 %v6516, %v6676
    %v6678 = vpop.f32.mrb[0].mxu0
    %6679 = vmatprep.mubr.bf16.mxu0 %v5683
    %6680 = vmatmul.mubr.bf16.gmra.mrb[0].mxu0 %v5682
    %v6681 = vpop.f32.mrb[0].mxu0
    %v6682 = vadd.f32 %v6521, %v6681
    %v6683 = vpop.f32.mrb[0].mxu0
    %v6684 = vpop.f32.mrb[0].mxu0
    %v6685 = vadd.f32 %v6524, %v6684
    %v6686 = vpop.f32.mrb[0].mxu0
    %6687 = vmatprep.mubr.bf16.mxu0 %v5691
    %6688 = vmatmul.mubr.bf16.gmra.mrb[0].mxu0 %v5690
    %v6689 = vpop.f32.mrb[0].mxu0
    %v6690 = vadd.f32 %v6529, %v6689
    %v6691 = vpop.f32.mrb[0].mxu0
    %v6692 = vpop.f32.mrb[0].mxu0
    %v6693 = vadd.f32 %v6532, %v6692
    %v6694 = vpop.f32.mrb[0].mxu0
    %6695 = vdwg.mxu0
    %6696 = vmatprep.subr.bf16.mxu0 0
    %6697 = vmatpush1.bf16.msra.mxu0 %v6133
    %6698 = vmatprep.subr.bf16.mxu0 0
    %6699 = vmatpush1.bf16.msra.mxu0 %v6134
    %6700 = vmatprep.subr.bf16.mxu0 0
    %6701 = vmatpush1.bf16.msra.mxu0 %v6135
    %6702 = vmatprep.subr.bf16.mxu0 0
    %6703 = vmatpush1.bf16.msra.mxu0 %v6136
    %6704 = vmatprep.subr.bf16.mxu0 0
    %6705 = vmatpush1.bf16.msra.mxu0 %v6137
    %6706 = vmatprep.subr.bf16.mxu0 0
    %6707 = vmatpush1.bf16.msra.mxu0 %v6138
    %6708 = vmatprep.subr.bf16.mxu0 0
    %6709 = vmatpush1.bf16.msra.mxu0 %v6139
    %6710 = vmatprep.subr.bf16.mxu0 0
    %6711 = vmatpush1.bf16.msra.mxu0 %v6140
    %6712 = vmatprep.subr.bf16.mxu0 0
    %6713 = vmatpush1.bf16.msra.mxu0 %v6141
    %6714 = vmatprep.subr.bf16.mxu0 0
    %6715 = vmatpush1.bf16.msra.mxu0 %v6142
    %6716 = vmatprep.subr.bf16.mxu0 0
    %6717 = vmatpush1.bf16.msra.mxu0 %v6143
    %6718 = vmatprep.subr.bf16.mxu0 0
    %6719 = vmatpush1.bf16.msra.mxu0 %v6144
    %6720 = vmatprep.subr.bf16.mxu0 0
    %6721 = vmatpush1.bf16.msra.mxu0 %v6145
    %6722 = vmatprep.subr.bf16.mxu0 0
    %6723 = vmatpush1.bf16.msra.mxu0 %v6146
    %6724 = vmatprep.subr.bf16.mxu0 0
    %6725 = vmatpush1.bf16.msra.mxu0 %v6147
    %6726 = vmatprep.subr.bf16.mxu0 0
    %6727 = vmatpush1.bf16.msra.mxu0 %v6148
    %6728 = vmatprep.mubr.bf16.mxu0 %v5573
    %6729 = vmatmul.mubr.bf16.gmra.mrb[0].mxu0 %v5572
    %v6730 = vpop.f32.mrb[0].mxu0
    %v6731 = vadd.f32 %v6570, %v6730
    %v6732 = vpop.f32.mrb[0].mxu0
    %v6733 = vpop.f32.mrb[0].mxu0
    %v6734 = vadd.f32 %v6573, %v6733
    %v6735 = vpop.f32.mrb[0].mxu0
    %6736 = vmatprep.mubr.bf16.mxu0 %v5581
    %6737 = vmatmul.mubr.bf16.gmra.mrb[0].mxu0 %v5580
    %v6738 = vpop.f32.mrb[0].mxu0
    %v6739 = vadd.f32 %v6578, %v6738
    %v6740 = vpop.f32.mrb[0].mxu0
    %v6741 = vpop.f32.mrb[0].mxu0
    %v6742 = vadd.f32 %v6581, %v6741
    %v6743 = vpop.f32.mrb[0].mxu0
    %6744 = vmatprep.mubr.bf16.mxu0 %v5589
    %6745 = vmatmul.mubr.bf16.gmra.mrb[0].mxu0 %v5588
    %v6746 = vpop.f32.mrb[0].mxu0
    %v6747 = vadd.f32 %v6586, %v6746
    %v6748 = vpop.f32.mrb[0].mxu0
    %v6749 = vpop.f32.mrb[0].mxu0
    %v6750 = vadd.f32 %v6589, %v6749
    %v6751 = vpop.f32.mrb[0].mxu0
    %6752 = vmatprep.mubr.bf16.mxu0 %v5597
    %6753 = vmatmul.mubr.bf16.gmra.mrb[0].mxu0 %v5596
    %v6754 = vpop.f32.mrb[0].mxu0
    %v6755 = vadd.f32 %v6594, %v6754
    %v6756 = vpop.f32.mrb[0].mxu0
    %v6757 = vpop.f32.mrb[0].mxu0
    %v6758 = vadd.f32 %v6597, %v6757
    %v6759 = vpop.f32.mrb[0].mxu0
    %6760 = vmatprep.mubr.bf16.mxu0 %v5605
    %6761 = vmatmul.mubr.bf16.gmra.mrb[0].mxu0 %v5604
    %v6762 = vpop.f32.mrb[0].mxu0
    %v6763 = vadd.f32 %v6602, %v6762
    %v6764 = vpop.f32.mrb[0].mxu0
    %v6765 = vpop.f32.mrb[0].mxu0
    %v6766 = vadd.f32 %v6605, %v6765
    %v6767 = vpop.f32.mrb[0].mxu0
    %6768 = vmatprep.mubr.bf16.mxu0 %v5613
    %6769 = vmatmul.mubr.bf16.gmra.mrb[0].mxu0 %v5612
    %v6770 = vpop.f32.mrb[0].mxu0
    %v6771 = vadd.f32 %v6610, %v6770
    %v6772 = vpop.f32.mrb[0].mxu0
    %v6773 = vpop.f32.mrb[0].mxu0
    %v6774 = vadd.f32 %v6613, %v6773
    %v6775 = vpop.f32.mrb[0].mxu0
    %6776 = vmatprep.mubr.bf16.mxu0 %v5621
    %6777 = vmatmul.mubr.bf16.gmra.mrb[0].mxu0 %v5620
    %v6778 = vpop.f32.mrb[0].mxu0
    %v6779 = vadd.f32 %v6618, %v6778
    %v6780 = vpop.f32.mrb[0].mxu0
    %v6781 = vpop.f32.mrb[0].mxu0
    %v6782 = vadd.f32 %v6621, %v6781
    %v6783 = vpop.f32.mrb[0].mxu0
    %6784 = vmatprep.mubr.bf16.mxu0 %v5629
    %6785 = vmatmul.mubr.bf16.gmra.mrb[0].mxu0 %v5628
    %v6786 = vpop.f32.mrb[0].mxu0
    %v6787 = vadd.f32 %v6626, %v6786
    %v6788 = vpop.f32.mrb[0].mxu0
    %v6789 = vpop.f32.mrb[0].mxu0
    %v6790 = vadd.f32 %v6629, %v6789
    %v6791 = vpop.f32.mrb[0].mxu0
    %6792 = vmatprep.mubr.bf16.mxu0 %v5637
    %6793 = vmatmul.mubr.bf16.gmra.mrb[0].mxu0 %v5636
    %v6794 = vpop.f32.mrb[0].mxu0
    %v6795 = vadd.f32 %v6634, %v6794
    %v6796 = vpop.f32.mrb[0].mxu0
    %v6797 = vpop.f32.mrb[0].mxu0
    %v6798 = vadd.f32 %v6637, %v6797
    %v6799 = vpop.f32.mrb[0].mxu0
    %6800 = vmatprep.mubr.bf16.mxu0 %v5645
    %6801 = vmatmul.mubr.bf16.gmra.mrb[0].mxu0 %v5644
    %v6802 = vpop.f32.mrb[0].mxu0
    %v6803 = vadd.f32 %v6642, %v6802
    %v6804 = vpop.f32.mrb[0].mxu0
    %v6805 = vpop.f32.mrb[0].mxu0
    %v6806 = vadd.f32 %v6645, %v6805
    %v6807 = vpop.f32.mrb[0].mxu0
    %6808 = vmatprep.mubr.bf16.mxu0 %v5653
    %6809 = vmatmul.mubr.bf16.gmra.mrb[0].mxu0 %v5652
    %v6810 = vpop.f32.mrb[0].mxu0
    %v6811 = vadd.f32 %v6650, %v6810
    %v6812 = vpop.f32.mrb[0].mxu0
    %v6813 = vpop.f32.mrb[0].mxu0
    %v6814 = vadd.f32 %v6653, %v6813
    %v6815 = vpop.f32.mrb[0].mxu0
    %6816 = vmatprep.mubr.bf16.mxu0 %v5661
    %6817 = vmatmul.mubr.bf16.gmra.mrb[0].mxu0 %v5660
    %v6818 = vpop.f32.mrb[0].mxu0
    %v6819 = vadd.f32 %v6658, %v6818
    %v6820 = vpop.f32.mrb[0].mxu0
    %v6821 = vpop.f32.mrb[0].mxu0
    %v6822 = vadd.f32 %v6661, %v6821
    %v6823 = vpop.f32.mrb[0].mxu0
    %6824 = vmatprep.mubr.bf16.mxu0 %v5669
    %6825 = vmatmul.mubr.bf16.gmra.mrb[0].mxu0 %v5668
    %v6826 = vpop.f32.mrb[0].mxu0
    %v6827 = vadd.f32 %v6666, %v6826
    %v6828 = vpop.f32.mrb[0].mxu0
    %v6829 = vpop.f32.mrb[0].mxu0
    %v6830 = vadd.f32 %v6669, %v6829
    %v6831 = vpop.f32.mrb[0].mxu0
    %6832 = vmatprep.mubr.bf16.mxu0 %v5677
    %6833 = vmatmul.mubr.bf16.gmra.mrb[0].mxu0 %v5676
    %v6834 = vpop.f32.mrb[0].mxu0
    %v6835 = vadd.f32 %v6674, %v6834
    %v6836 = vpop.f32.mrb[0].mxu0
    %v6837 = vpop.f32.mrb[0].mxu0
    %v6838 = vadd.f32 %v6677, %v6837
    %v6839 = vpop.f32.mrb[0].mxu0
    %6840 = vmatprep.mubr.bf16.mxu0 %v5685
    %6841 = vmatmul.mubr.bf16.gmra.mrb[0].mxu0 %v5684
    %v6842 = vpop.f32.mrb[0].mxu0
    %v6843 = vadd.f32 %v6682, %v6842
    %v6844 = vpop.f32.mrb[0].mxu0
    %v6845 = vpop.f32.mrb[0].mxu0
    %v6846 = vadd.f32 %v6685, %v6845
    %v6847 = vpop.f32.mrb[0].mxu0
    %6848 = vmatprep.mubr.bf16.mxu0 %v5693
    %6849 = vmatmul.mubr.bf16.gmra.mrb[0].mxu0 %v5692
    %v6850 = vpop.f32.mrb[0].mxu0
    %v6851 = vadd.f32 %v6690, %v6850
    %v6852 = vpop.f32.mrb[0].mxu0
    %v6853 = vpop.f32.mrb[0].mxu0
    %v6854 = vadd.f32 %v6693, %v6853
    %v6855 = vpop.f32.mrb[0].mxu0
    %6856 = vdwg.mxu0
    %6857 = vst [vmem:[%s5] sm:$0xff] %v6731
    %6858 = vst [vmem:[%s5 + $0x8] sm:$0xff] %v6734
    %6859 = vst [vmem:[%s5 + $0x10] sm:$0xff] %v6739
    %6860 = vst [vmem:[%s5 + $0x18] sm:$0xff] %v6742
    %6861 = vst [vmem:[%s5 + $0x20] sm:$0xff] %v6747
    %6862 = vst [vmem:[%s5 + $0x28] sm:$0xff] %v6750
    %6863 = vst [vmem:[%s5 + $0x30] sm:$0xff] %v6755
    %6864 = vst [vmem:[%s5 + $0x38] sm:$0xff] %v6758
    %6865 = vst [vmem:[%s5 + $0x40] sm:$0xff] %v6763
    %6866 = vst [vmem:[%s5 + $0x48] sm:$0xff] %v6766
    %6867 = vst [vmem:[%s5 + $0x50] sm:$0xff] %v6771
    %6868 = vst [vmem:[%s5 + $0x58] sm:$0xff] %v6774
    %6869 = vst [vmem:[%s5 + $0x60] sm:$0xff] %v6779
    %6870 = vst [vmem:[%s5 + $0x68] sm:$0xff] %v6782
    %6871 = vst [vmem:[%s5 + $0x70] sm:$0xff] %v6787
    %6872 = vst [vmem:[%s5 + $0x78] sm:$0xff] %v6790
    %6873 = vst [vmem:[%s5 + $0x80] sm:$0xff] %v6795
    %6874 = vst [vmem:[%s5 + $0x88] sm:$0xff] %v6798
    %6875 = vst [vmem:[%s5 + $0x90] sm:$0xff] %v6803
    %6876 = vst [vmem:[%s5 + $0x98] sm:$0xff] %v6806
    %6877 = vst [vmem:[%s5 + $0xa0] sm:$0xff] %v6811
    %6878 = vst [vmem:[%s5 + $0xa8] sm:$0xff] %v6814
    %6879 = vst [vmem:[%s5 + $0xb0] sm:$0xff] %v6819
    %6880 = vst [vmem:[%s5 + $0xb8] sm:$0xff] %v6822
    %6881 = vst [vmem:[%s5 + $0xc0] sm:$0xff] %v6827
    %6882 = vst [vmem:[%s5 + $0xc8] sm:$0xff] %v6830
    %6883 = vst [vmem:[%s5 + $0xd0] sm:$0xff] %v6835
    %6884 = vst [vmem:[%s5 + $0xd8] sm:$0xff] %v6838
    %6885 = vst [vmem:[%s5 + $0xe0] sm:$0xff] %v6843
    %6886 = vst [vmem:[%s5 + $0xe8] sm:$0xff] %v6846
    %6887 = vst [vmem:[%s5 + $0xf0] sm:$0xff] %v6851
    %6888 = vst [vmem:[%s5 + $0xf8] sm:$0xff] %v6854
    // Predicated region
    $region38: #{simple_mlp_forward.1} parent=1 // pred_check
      _
    $region39: #{simple_mlp_forward.1} parent=1 // pred_check_branch
      %6890 = sbr.rel (0) target = $region41
    $region40: #{simple_mlp_forward.1} parent=1 // pred_region
      _
    $region41: #{simple_mlp_forward.1} parent=1 // pred_fallthru
      _
    // Predicated region
    $region42: #{simple_mlp_forward.1} parent=1 // pred_check
      _
    $region43: #{simple_mlp_forward.1} parent=1 // pred_check_branch
      %6892 = sbr.rel (0) target = $region45
    $region44: #{simple_mlp_forward.1} parent=1 // pred_region
      _
    $region45: #{simple_mlp_forward.1} parent=1 // pred_fallthru
      _
    %6893 = vsyncpa [#allocation3], 1
    %6894 = vsyncpa [#allocation5], 1
    %6895 = vsyncpa [#allocation8], 1

</llo_original>
